<compile_context>
chip_gen: v7x
topology: tpu7x:2x2x1
jax: 0.10.0
libtpu: 0.0.40
codegen_flags: <defaults>
</compile_context>

<pallas_src>
import numpy as np
import jax
import jax.numpy as jnp
from jax import lax
from jax.experimental import pallas as pl
from jax.experimental.pallas import tpu as pltpu

BBOX = 7                       # bbox_attrib
NPRED = 20                     # num_predictors
NANCH = 1                      # num_anchors
C = NANCH * NPRED * BBOX       # 140 channels

LAMBDA_XY = 10.0
LAMBDA_WL = 10.0
LAMBDA_ROT = 10.0
LAMBDA_OBJ = 10.0
LAMBDA_NOOBJ = 1.0

# Row layout of the one-hot selection matrix S.  Every group start is a multiple of 8
# so all in-kernel row slices are vreg-aligned (no sublane relayout).
XY0, WL0, ROT0, OBJ0, CONF0 = 0, 40, 80, 120, 160
SROWS = 180


def _build_select_matrix():
    """One-hot gather matrix: channels (7*pred + attr) -> dense 8-aligned row groups:
    xy (40 rows), wl (40), rot (40), obj-mask duplicated per attr pair (40), conf (20)."""
    S = np.zeros((SROWS, C), np.float32)
    for g in range(NPRED):
        S[XY0 + 2 * g + 0, BBOX * g + 0] = 1.0    # x
        S[XY0 + 2 * g + 1, BBOX * g + 1] = 1.0    # y
        S[WL0 + 2 * g + 0, BBOX * g + 2] = 1.0    # w
        S[WL0 + 2 * g + 1, BBOX * g + 3] = 1.0    # l
        S[ROT0 + 2 * g + 0, BBOX * g + 4] = 1.0   # rot_a
        S[ROT0 + 2 * g + 1, BBOX * g + 5] = 1.0   # rot_b
        S[OBJ0 + 2 * g + 0, BBOX * g + 6] = 1.0   # obj mask (target conf), dup x2
        S[OBJ0 + 2 * g + 1, BBOX * g + 6] = 1.0
        S[CONF0 + g, BBOX * g + 6] = 1.0          # conf (logits / target)
    return S


def _make_kernel(anchor_w, anchor_l):
    """Kernel closed over the anchor constants.  Blocks:
       s_ref    : (180, 140)  one-hot selection matrix (constant block)
       pred_ref : (140, tR)   raw network outputs, native channel-major layout
       tgt_ref  : (140, tR)   scatter-built target (conf channel == obj mask)
       out_ref  : (8, 128)    per-batch partial losses (lanes 0..4 of row 0)
       acc_ref  : (8, 128)    f32 accumulator scratch over the R grid axis
    """

    def kernel(s_ref, pred_ref, tgt_ref, out_ref, acc_ref):
        r_step = pl.program_id(1)

        @pl.when(r_step == 0)
        def _init():
            acc_ref[...] = jnp.zeros_like(acc_ref)

        p = pred_ref[...]                      # (140, tR) f32
        t = tgt_ref[...]                       # (140, tR) f32
        s = s_ref[...]                         # (180, 140) one-hot

        # MXU gather: compact per-attribute planes.  HIGHEST precision keeps the
        # one-hot selection exact in f32 (multi-pass bf16 accumulation).
        hi = jax.lax.Precision.HIGHEST
        A = jnp.dot(s, p, precision=hi, preferred_element_type=jnp.float32)  # (180, tR)
        T = jnp.dot(s, t, precision=hi, preferred_element_type=jnp.float32)

        obj2 = T[OBJ0:OBJ0 + 40]               # obj mask, duplicated per attr pair
        t_c = T[CONF0:CONF0 + 20]              # target conf == obj mask (20, tR)

        # xy: sigmoid activation, masked MSE.
        d = jax.nn.sigmoid(A[XY0:XY0 + 40]) - T[XY0:XY0 + 40]
        l_xy = jnp.sum(obj2 * d * d)

        # w/l: identity activation vs. log-anchor-transformed target (single log).
        even = lax.broadcasted_iota(jnp.int32, (40, A.shape[1]), 0) % 2 == 0
        anchor = jnp.where(even, anchor_w, anchor_l)
        d = A[WL0:WL0 + 40] - jnp.log(T[WL0:WL0 + 40] / anchor + 1e-16)
        l_wl = jnp.sum(obj2 * d * d)

        # rot: tanh activation, masked MSE.
        d = jnp.tanh(A[ROT0:ROT0 + 40]) - T[ROT0:ROT0 + 40]
        l_rot = jnp.sum(obj2 * d * d)

        # conf: BCE with exact PyTorch BCELoss semantics (log terms clamped at -100).
        p_c = jax.nn.sigmoid(A[CONF0:CONF0 + 20])
        log_p = jnp.maximum(jnp.log(p_c), -100.0)
        log_1mp = jnp.maximum(jnp.log(1.0 - p_c), -100.0)
        bce = -(t_c * log_p + (1.0 - t_c) * log_1mp)
        l_obj = jnp.sum(t_c * bce)
        l_noobj = jnp.sum((1.0 - t_c) * bce)

        # Accumulate the 5 partial losses into lanes 0..4 of row 0 (lane-dense output).
        lane = lax.broadcasted_iota(jnp.int32, (8, 128), 1)
        row = lax.broadcasted_iota(jnp.int32, (8, 128), 0)
        vals = (jnp.where(lane == 0, l_xy, 0.0)
                + jnp.where(lane == 1, l_wl, 0.0)
                + jnp.where(lane == 2, l_rot, 0.0)
                + jnp.where(lane == 3, l_obj, 0.0)
                + jnp.where(lane == 4, l_noobj, 0.0))
        acc_ref[...] += jnp.where(row == 0, vals, 0.0)
        out_ref[...] = acc_ref[...]

    return kernel


def _build_target(labels, row_size, cell_angle, cell_depth):
    """On-device replacement for the reference's per-label Python scatter.
    Output layout matches the kernel input: (B, 140, R) with channel = 7*pred + attr,
    conf channel == 1.0 at labelled cells (doubles as the obj mask)."""
    # TODO(synk): the per-label last-wins scatter is inherently sequential; it runs as
    # plain jitted JAX (fori_loop + dynamic_update_slice), not inside the Pallas kernel.
    labels = jnp.asarray(labels, jnp.float32)

    def per_sample(lab):
        n_lab = lab.shape[0]
        ang = lab[:, 0] + row_size * cell_angle * 0.5
        dep = lab[:, 1]
        i = jnp.floor(ang / cell_angle).astype(jnp.int32)       # angle cell (row index)
        j = jnp.floor(dep / cell_depth).astype(jnp.int32)       # depth cell (predictor)
        frac_a = ang / cell_angle - i.astype(jnp.float32)
        frac_d = dep / cell_depth - j.astype(jnp.float32)
        rows = jnp.concatenate(
            [frac_a[:, None], frac_d[:, None], lab[:, 2:6],
             jnp.ones((n_lab, 1), jnp.float32)], axis=1)         # (L, 7)
        has = lab[0, BBOX - 1] >= 0.0
        tgt0 = jnp.zeros((NPRED, BBOX, row_size), jnp.float32)

        def body(k, tgt):
            upd = lax.dynamic_slice(rows, (k, 0), (1, BBOX)).reshape(1, BBOX, 1)
            return lax.dynamic_update_slice(tgt, upd, (j[k], 0, i[k]))

        tgt = lax.fori_loop(0, n_lab, body, tgt0)
        tgt = jnp.where(has, tgt, tgt0)
        return tgt.reshape(NPRED * BBOX, row_size)               # (140, R)

    return jax.vmap(per_sample)(labels)                          # (B, 140, R)


def _pick_tile_r(row_size, max_lanes=2048):
    """Largest lane tile (multiple of 128, <= max_lanes) dividing row_size.
    Cap keeps 2 inputs x 2 pipeline buffers + temporaries well inside v7x's 64 MiB."""
    if row_size % 128 != 0:
        return row_size
    t = min(row_size, max_lanes)
    while row_size % t != 0:
        t -= 128
    return t


def make_yolo_loss(*, row_size, cell_angle, cell_depth, anchors, tile_r=None):
    """Returns a jitted fn(preds, labels) -> (loss, xy, wl, rot, obj, noobj).
    preds: (B, 140, R) f32 (native layer output layout); labels: (B, L, 7) f32."""
    anchor_w, anchor_l = float(anchors[0]), float(anchors[1])
    t_r = _pick_tile_r(row_size) if tile_r is None else tile_r
    assert row_size % t_r == 0
    n_r = row_size // t_r
    s_const = jnp.asarray(_build_select_matrix())
    kernel = _make_kernel(anchor_w, anchor_l)

    def fn(preds, labels):
        # NOTE: on v5e/v6e (HBM-bound) preds may be fed in bf16 here; math stays f32.
        preds = jnp.asarray(preds, jnp.float32)
        batch = preds.shape[0]
        assert preds.shape[1] == C and preds.shape[2] == row_size
        tgt = _build_target(labels, row_size, cell_angle, cell_depth)

        out = pl.pallas_call(
            kernel,
            out_shape=jax.ShapeDtypeStruct((batch, 8, 128), jnp.float32),
            grid_spec=pltpu.PrefetchScalarGridSpec(
                num_scalar_prefetch=0,
                grid=(batch, n_r),
                in_specs=[
                    pl.BlockSpec((SROWS, C), lambda b, r: (0, 0)),     # selection matrix
                    pl.BlockSpec((None, C, t_r), lambda b, r: (b, 0, r)),  # preds
                    pl.BlockSpec((None, C, t_r), lambda b, r: (b, 0, r)),  # target
                ],
                out_specs=pl.BlockSpec((None, 8, 128), lambda b, r: (b, 0, 0)),
                scratch_shapes=[pltpu.VMEM((8, 128), jnp.float32)],
            ),
            compiler_params=pltpu.CompilerParams(
                dimension_semantics=("parallel", "arbitrary"),
                vmem_limit_bytes=32 * 1024 * 1024,
            ),
        )(s_const, preds, tgt)

        partial = jnp.sum(out[:, 0, :8], axis=0)         # sum per-batch partials
        l_xy, l_wl, l_rot, l_obj, l_noobj = (partial[0], partial[1], partial[2],
                                             partial[3], partial[4])
        loss = (LAMBDA_XY * l_xy + LAMBDA_WL * l_wl + LAMBDA_ROT * l_rot
                + LAMBDA_OBJ * l_obj + LAMBDA_NOOBJ * l_noobj)
        return loss, l_xy, l_wl, l_rot, l_obj, l_noobj

    return jax.jit(fn)


def reference_numpy(preds, labels, *, cell_angle, cell_depth, anchors):
    """Pure-numpy re-implementation of the PyTorch forward for verification."""
    preds = np.asarray(preds, np.float64)
    labels = np.asarray(labels, np.float32)
    R = preds.shape[-1]
    lxy = lwl = lrot = lobj = lnoobj = 0.0
    for b in range(preds.shape[0]):
        p = preds[b].reshape(C, R).T.reshape(R, NPRED, BBOX).copy()
        p[..., :2] = 1.0 / (1.0 + np.exp(-p[..., :2]))
        p[..., 4:6] = np.tanh(p[..., 4:6])
        p[..., 6:7] = 1.0 / (1.0 + np.exp(-p[..., 6:7]))
        lab = np.array(labels[b], dtype=np.float32, copy=True)
        lab[:, 0] += np.float32(R * cell_angle / 2.0)
        has = lab[0, -1] >= 0.0
        obj = np.zeros((R, NPRED), dtype=bool)
        tgt = np.zeros((R, NPRED, BBOX))
        if has:
            for l in lab:
                i, j = int(l[0] // cell_angle), int(l[1] // cell_depth)
                obj[i, j] = True
            for l in lab:
                i, j = int(l[0] // cell_angle), int(l[1] // cell_depth)
                row = l.astype(np.float64).copy()
                row[0] = l[0] / cell_angle - i
                row[1] = l[1] / cell_depth - j
                row[6] = 1.0
                tgt[i, j] = row
        lxy += np.sum((p[obj][:, :2] - tgt[obj][:, :2]) ** 2)
        tgt[..., 2] = np.log(tgt[..., 2] / anchors[0] + 1e-16)
        tgt[..., 3] = np.log(tgt[..., 3] / anchors[1] + 1e-16)
        lwl += np.sum((p[obj][:, 2:4] - tgt[obj][:, 2:4]) ** 2)
        lrot += np.sum((p[obj][:, 4:6] - tgt[obj][:, 4:6]) ** 2)

        def bce(pp, tt):
            lp = np.maximum(np.log(pp), -100.0)
            l1 = np.maximum(np.log(1.0 - pp), -100.0)
            return np.sum(-(tt * lp + (1.0 - tt) * l1))

        lobj += bce(p[obj][:, 6], tgt[obj][:, 6])
        lnoobj += bce(p[~obj][:, 6], tgt[~obj][:, 6])
    total = (LAMBDA_XY * lxy + LAMBDA_WL * lwl + LAMBDA_ROT * lrot
             + LAMBDA_OBJ * lobj + LAMBDA_NOOBJ * lnoobj)
    return total, lxy, lwl, lrot, lobj, lnoobj


if __name__ == "__main__":
    B, R, L = 2, 16, 3                 # batch, row_size, labels per sample
    cell_angle, cell_depth = 0.5, 1.0  # deterministic cfg values
    anchors = (1.5, 2.5)               # cfg.anchors -> single anchor pair

    key = jax.random.PRNGKey(0)
    k1, k2, k3, k4, k5 = jax.random.split(key, 5)
    preds = jax.random.normal(k1, (B, C, R), dtype=jnp.float32)

    # labels: [angle, depth, w, l, rot_a, rot_b, conf]
    ang = jax.random.uniform(k2, (B, L, 1), minval=-3.9, maxval=3.9)
    dep = jax.random.uniform(k3, (B, L, 1), minval=0.1, maxval=19.9)
    wl = jax.random.uniform(k4, (B, L, 2), minval=0.5, maxval=3.0)
    rot = jnp.tanh(jax.random.normal(k5, (B, L, 2)))
    conf = jnp.ones((B, L, 1), dtype=jnp.float32)
    labels = jnp.concatenate([ang, dep, wl, rot, conf], axis=-1).astype(jnp.float32)
    labels = labels.at[1, 0, 6].set(-1.0)   # second sample exercises has_labels == False

    loss_fn = make_yolo_loss(row_size=R, cell_angle=cell_angle,
                             cell_depth=cell_depth, anchors=anchors)
    result = loss_fn(preds, labels)
    result = jax.block_until_ready(result)

    ref = reference_numpy(preds, labels, cell_angle=cell_angle,
                          cell_depth=cell_depth, anchors=anchors)
    np.testing.assert_allclose(np.array([float(x) for x in result]),
                               np.array(ref), rtol=2e-3, atol=2e-3)
    print("KERNEL_OK")
</pallas_src>

<mosaic_0001>
module attributes {stable_mosaic.version = 11 : i64} {
  func.func @kernel(%arg0: i32, %arg1: i32, %arg2: memref<180x140xf32, #tpu.memory_space<vmem>>, %arg3: memref<1x140x16xf32, #tpu.memory_space<vmem>>, %arg4: memref<1x140x16xf32, #tpu.memory_space<vmem>>, %arg5: memref<1x8x128xf32, #tpu.memory_space<vmem>>, %arg6: memref<8x128xf32, #tpu.memory_space<vmem>>) attributes {dimension_semantics = [#tpu.dimension_semantics<parallel>, #tpu.dimension_semantics<arbitrary>], iteration_bounds = array<i64: 2, 1>, scalar_prefetch = 0 : i64, scratch_operands = 1 : i64, tpu.core_type = #tpu.core_type<tc>, window_params = [{pipeline_mode = #tpu.pipeline_mode<synchronous>, transform_indices = @transform_0, window_bounds = array<i64: 180, 140>}, {transform_indices = @transform_1, window_bounds = array<i64: 1, 140, 16>}, {transform_indices = @transform_2, window_bounds = array<i64: 1, 140, 16>}, {transform_indices = @transform_3, window_bounds = array<i64: 1, 8, 128>}]} {
    %c0_i32 = arith.constant 0 : i32
    %0 = arith.cmpi eq, %arg1, %c0_i32 : i32
    %1 = arith.extui %0 : i1 to i32
    %c0_i32_0 = arith.constant 0 : i32
    %2 = arith.cmpi ne, %1, %c0_i32_0 : i32
    scf.if %2 {
      %cst_49 = arith.constant 0.000000e+00 : f32
      %146 = vector.broadcast %cst_49 : f32 to vector<8x128xf32>
      %c0_50 = arith.constant 0 : index
      %c0_51 = arith.constant 0 : index
      %147 = vector.load %arg6[%c0_50, %c0_51] : memref<8x128xf32, #tpu.memory_space<vmem>>, vector<8x128xf32>
      tpu.vector_store %arg6[%c0_50, %c0_51], %146 {strides = array<i32>} : memref<8x128xf32, #tpu.memory_space<vmem>>, vector<8x128xf32>,
    } else {
    }
    %c0 = arith.constant 0 : index
    %c0_1 = arith.constant 0 : index
    %c0_2 = arith.constant 0 : index
    %3 = vector.load %arg3[%c0, %c0_1, %c0_2] : memref<1x140x16xf32, #tpu.memory_space<vmem>>, vector<1x140x16xf32>
    %4 = vector.shape_cast %3 : vector<1x140x16xf32> to vector<140x16xf32>
    %c0_3 = arith.constant 0 : index
    %c0_4 = arith.constant 0 : index
    %c0_5 = arith.constant 0 : index
    %5 = vector.load %arg4[%c0_3, %c0_4, %c0_5] : memref<1x140x16xf32, #tpu.memory_space<vmem>>, vector<1x140x16xf32>
    %6 = vector.shape_cast %5 : vector<1x140x16xf32> to vector<140x16xf32>
    %c0_6 = arith.constant 0 : index
    %c0_7 = arith.constant 0 : index
    %7 = vector.load %arg2[%c0_6, %c0_7] : memref<180x140xf32, #tpu.memory_space<vmem>>, vector<180x140xf32>
    %cst = arith.constant dense<0.000000e+00> : vector<180x16xf32>
    %8 = tpu.matmul %7, %4, %cst {dimension_numbers = #tpu.dot_dimension_numbers<[1], [0], [0], [1], [0, 0, 1, 1], [], []>, precision = #tpu.contract_precision<fp32>} : vector<180x140xf32>, vector<140x16xf32>, vector<180x16xf32> -> vector<180x16xf32>
    %cst_8 = arith.constant dense<0.000000e+00> : vector<180x16xf32>
    %9 = tpu.matmul %7, %6, %cst_8 {dimension_numbers = #tpu.dot_dimension_numbers<[1], [0], [0], [1], [0, 0, 1, 1], [], []>, precision = #tpu.contract_precision<fp32>} : vector<180x140xf32>, vector<140x16xf32>, vector<180x16xf32> -> vector<180x16xf32>
    %10 = vector.extract_strided_slice %9 {offsets = [120, 0], sizes = [40, 16], strides = [1, 1]} : vector<180x16xf32> to vector<40x16xf32>
    %11 = vector.extract_strided_slice %9 {offsets = [160, 0], sizes = [20, 16], strides = [1, 1]} : vector<180x16xf32> to vector<20x16xf32>
    %12 = vector.extract_strided_slice %8 {offsets = [0, 0], sizes = [40, 16], strides = [1, 1]} : vector<180x16xf32> to vector<40x16xf32>
    %13 = arith.negf %12 : vector<40x16xf32>
    %14 = math.exp %13 : vector<40x16xf32>
    %cst_9 = arith.constant 1.000000e+00 : f32
    %15 = vector.broadcast %cst_9 : f32 to vector<40x16xf32>
    %16 = arith.addf %15, %14 : vector<40x16xf32>
    %17 = arith.divf %15, %16 : vector<40x16xf32>
    %18 = vector.extract_strided_slice %9 {offsets = [0, 0], sizes = [40, 16], strides = [1, 1]} : vector<180x16xf32> to vector<40x16xf32>
    %19 = arith.subf %17, %18 : vector<40x16xf32>
    %20 = arith.mulf %10, %19 : vector<40x16xf32>
    %21 = arith.mulf %20, %19 : vector<40x16xf32>
    %22 = vector.shape_cast %21 : vector<40x16xf32> to vector<1x40x16xf32>
    %cst_10 = arith.constant dense<0.000000e+00> : vector<1xf32>
    %23 = vector.multi_reduction <add>, %22, %cst_10 [1, 2] : vector<1x40x16xf32> to vector<1xf32>
    %24 = vector.shape_cast %23 : vector<1xf32> to vector<1x1x1xf32>
    %25 = vector.extract %24[0, 0, 0] : f32 from vector<1x1x1xf32>
    %26 = tpu.iota {dimensions = array<i32: 0>} : vector<40x16xi32>
    %c2_i32 = arith.constant 2 : i32
    %c0_i32_11 = arith.constant 0 : i32
    %27 = arith.cmpi eq, %c2_i32, %c0_i32_11 : i32
    %c1_i32 = arith.constant 1 : i32
    %28 = arith.select %27, %c1_i32, %c2_i32 : i32
    %29 = vector.broadcast %28 : i32 to vector<40x16xi32>
    %30 = arith.remsi %26, %29 : vector<40x16xi32>
    %c0_i32_12 = arith.constant 0 : i32
    %31 = vector.broadcast %c0_i32_12 : i32 to vector<40x16xi32>
    %32 = arith.cmpi ne, %30, %31 : vector<40x16xi32>
    %c0_i32_13 = arith.constant 0 : i32
    %33 = vector.broadcast %c0_i32_13 : i32 to vector<40x16xi32>
    %34 = arith.cmpi slt, %30, %33 : vector<40x16xi32>
    %c0_i32_14 = arith.constant 0 : i32
    %35 = arith.cmpi slt, %28, %c0_i32_14 : i32
    %36 = vector.broadcast %35 : i1 to vector<40x16xi1>
    %37 = vector.broadcast %36 : vector<40x16xi1> to vector<40x16xi1>
    %38 = arith.xori %34, %37 : vector<40x16xi1>
    %39 = arith.andi %38, %32 : vector<40x16xi1>
    %40 = vector.broadcast %28 : i32 to vector<40x16xi32>
    %41 = arith.addi %30, %40 : vector<40x16xi32>
    %42 = arith.select %39, %41, %30 : vector<40x16xi1>, vector<40x16xi32>
    %c0_i32_15 = arith.constant 0 : i32
    %43 = vector.broadcast %c0_i32_15 : i32 to vector<40x16xi32>
    %44 = arith.cmpi eq, %42, %43 : vector<40x16xi32>
    %cst_16 = arith.constant 1.500000e+00 : f32
    %cst_17 = arith.constant 2.500000e+00 : f32
    %45 = vector.broadcast %cst_16 : f32 to vector<40x16xf32>
    %46 = vector.broadcast %cst_17 : f32 to vector<40x16xf32>
    %47 = arith.select %44, %45, %46 : vector<40x16xi1>, vector<40x16xf32>
    %48 = vector.extract_strided_slice %8 {offsets = [40, 0], sizes = [40, 16], strides = [1, 1]} : vector<180x16xf32> to vector<40x16xf32>
    %49 = vector.extract_strided_slice %9 {offsets = [40, 0], sizes = [40, 16], strides = [1, 1]} : vector<180x16xf32> to vector<40x16xf32>
    %50 = arith.divf %49, %47 : vector<40x16xf32>
    %cst_18 = arith.constant 1.000000e-16 : f32
    %51 = vector.broadcast %cst_18 : f32 to vector<40x16xf32>
    %52 = arith.addf %50, %51 : vector<40x16xf32>
    %53 = math.log %52 : vector<40x16xf32>
    %54 = arith.subf %48, %53 : vector<40x16xf32>
    %55 = arith.mulf %10, %54 : vector<40x16xf32>
    %56 = arith.mulf %55, %54 : vector<40x16xf32>
    %57 = vector.shape_cast %56 : vector<40x16xf32> to vector<1x40x16xf32>
    %cst_19 = arith.constant dense<0.000000e+00> : vector<1xf32>
    %58 = vector.multi_reduction <add>, %57, %cst_19 [1, 2] : vector<1x40x16xf32> to vector<1xf32>
    %59 = vector.shape_cast %58 : vector<1xf32> to vector<1x1x1xf32>
    %60 = vector.extract %59[0, 0, 0] : f32 from vector<1x1x1xf32>
    %61 = vector.extract_strided_slice %8 {offsets = [80, 0], sizes = [40, 16], strides = [1, 1]} : vector<180x16xf32> to vector<40x16xf32>
    %62 = math.tanh %61 : vector<40x16xf32>
    %63 = vector.extract_strided_slice %9 {offsets = [80, 0], sizes = [40, 16], strides = [1, 1]} : vector<180x16xf32> to vector<40x16xf32>
    %64 = arith.subf %62, %63 : vector<40x16xf32>
    %65 = arith.mulf %10, %64 : vector<40x16xf32>
    %66 = arith.mulf %65, %64 : vector<40x16xf32>
    %67 = vector.shape_cast %66 : vector<40x16xf32> to vector<1x40x16xf32>
    %cst_20 = arith.constant dense<0.000000e+00> : vector<1xf32>
    %68 = vector.multi_reduction <add>, %67, %cst_20 [1, 2] : vector<1x40x16xf32> to vector<1xf32>
    %69 = vector.shape_cast %68 : vector<1xf32> to vector<1x1x1xf32>
    %70 = vector.extract %69[0, 0, 0] : f32 from vector<1x1x1xf32>
    %71 = vector.extract_strided_slice %8 {offsets = [160, 0], sizes = [20, 16], strides = [1, 1]} : vector<180x16xf32> to vector<20x16xf32>
    %72 = arith.negf %71 : vector<20x16xf32>
    %73 = math.exp %72 : vector<20x16xf32>
    %cst_21 = arith.constant 1.000000e+00 : f32
    %74 = vector.broadcast %cst_21 : f32 to vector<20x16xf32>
    %75 = arith.addf %74, %73 : vector<20x16xf32>
    %76 = arith.divf %74, %75 : vector<20x16xf32>
    %77 = math.log %76 : vector<20x16xf32>
    %cst_22 = arith.constant -1.000000e+02 : f32
    %78 = vector.broadcast %cst_22 : f32 to vector<20x16xf32>
    %79 = arith.maximumf %77, %78 : vector<20x16xf32>
    %cst_23 = arith.constant 1.000000e+00 : f32
    %80 = vector.broadcast %cst_23 : f32 to vector<20x16xf32>
    %81 = arith.subf %80, %76 : vector<20x16xf32>
    %82 = math.log %81 : vector<20x16xf32>
    %cst_24 = arith.constant -1.000000e+02 : f32
    %83 = vector.broadcast %cst_24 : f32 to vector<20x16xf32>
    %84 = arith.maximumf %82, %83 : vector<20x16xf32>
    %85 = arith.mulf %11, %79 : vector<20x16xf32>
    %cst_25 = arith.constant 1.000000e+00 : f32
    %86 = vector.broadcast %cst_25 : f32 to vector<20x16xf32>
    %87 = arith.subf %86, %11 : vector<20x16xf32>
    %88 = arith.mulf %87, %84 : vector<20x16xf32>
    %89 = arith.addf %85, %88 : vector<20x16xf32>
    %cst_26 = arith.constant 0.000000e+00 : f32
    %90 = vector.broadcast %cst_26 : f32 to vector<20x16xf32>
    %91 = arith.subf %90, %89 : vector<20x16xf32>
    %92 = arith.mulf %11, %91 : vector<20x16xf32>
    %93 = vector.shape_cast %92 : vector<20x16xf32> to vector<1x20x16xf32>
    %cst_27 = arith.constant dense<0.000000e+00> : vector<1xf32>
    %94 = vector.multi_reduction <add>, %93, %cst_27 [1, 2] : vector<1x20x16xf32> to vector<1xf32>
    %95 = vector.shape_cast %94 : vector<1xf32> to vector<1x1x1xf32>
    %96 = vector.extract %95[0, 0, 0] : f32 from vector<1x1x1xf32>
    %cst_28 = arith.constant 1.000000e+00 : f32
    %97 = vector.broadcast %cst_28 : f32 to vector<20x16xf32>
    %98 = arith.subf %97, %11 : vector<20x16xf32>
    %99 = arith.mulf %98, %91 : vector<20x16xf32>
    %100 = vector.shape_cast %99 : vector<20x16xf32> to vector<1x20x16xf32>
    %cst_29 = arith.constant dense<0.000000e+00> : vector<1xf32>
    %101 = vector.multi_reduction <add>, %100, %cst_29 [1, 2] : vector<1x20x16xf32> to vector<1xf32>
    %102 = vector.shape_cast %101 : vector<1xf32> to vector<1x1x1xf32>
    %103 = vector.extract %102[0, 0, 0] : f32 from vector<1x1x1xf32>
    %104 = tpu.iota {dimensions = array<i32: 1>} : vector<8x128xi32>
    %105 = tpu.iota {dimensions = array<i32: 0>} : vector<8x128xi32>
    %c0_i32_30 = arith.constant 0 : i32
    %106 = vector.broadcast %c0_i32_30 : i32 to vector<8x128xi32>
    %107 = arith.cmpi eq, %104, %106 : vector<8x128xi32>
    %cst_31 = arith.constant 0.000000e+00 : f32
    %108 = vector.broadcast %25 : f32 to vector<8x128xf32>
    %109 = vector.broadcast %cst_31 : f32 to vector<8x128xf32>
    %110 = arith.select %107, %108, %109 : vector<8x128xi1>, vector<8x128xf32>
    %c1_i32_32 = arith.constant 1 : i32
    %111 = vector.broadcast %c1_i32_32 : i32 to vector<8x128xi32>
    %112 = arith.cmpi eq, %104, %111 : vector<8x128xi32>
    %cst_33 = arith.constant 0.000000e+00 : f32
    %113 = vector.broadcast %60 : f32 to vector<8x128xf32>
    %114 = vector.broadcast %cst_33 : f32 to vector<8x128xf32>
    %115 = arith.select %112, %113, %114 : vector<8x128xi1>, vector<8x128xf32>
    %116 = arith.addf %110, %115 : vector<8x128xf32>
    %c2_i32_34 = arith.constant 2 : i32
    %117 = vector.broadcast %c2_i32_34 : i32 to vector<8x128xi32>
    %118 = arith.cmpi eq, %104, %117 : vector<8x128xi32>
    %cst_35 = arith.constant 0.000000e+00 : f32
    %119 = vector.broadcast %70 : f32 to vector<8x128xf32>
    %120 = vector.broadcast %cst_35 : f32 to vector<8x128xf32>
    %121 = arith.select %118, %119, %120 : vector<8x128xi1>, vector<8x128xf32>
    %122 = arith.addf %116, %121 : vector<8x128xf32>
    %c3_i32 = arith.constant 3 : i32
    %123 = vector.broadcast %c3_i32 : i32 to vector<8x128xi32>
    %124 = arith.cmpi eq, %104, %123 : vector<8x128xi32>
    %cst_36 = arith.constant 0.000000e+00 : f32
    %125 = vector.broadcast %96 : f32 to vector<8x128xf32>
    %126 = vector.broadcast %cst_36 : f32 to vector<8x128xf32>
    %127 = arith.select %124, %125, %126 : vector<8x128xi1>, vector<8x128xf32>
    %128 = arith.addf %122, %127 : vector<8x128xf32>
    %c4_i32 = arith.constant 4 : i32
    %129 = vector.broadcast %c4_i32 : i32 to vector<8x128xi32>
    %130 = arith.cmpi eq, %104, %129 : vector<8x128xi32>
    %cst_37 = arith.constant 0.000000e+00 : f32
    %131 = vector.broadcast %103 : f32 to vector<8x128xf32>
    %132 = vector.broadcast %cst_37 : f32 to vector<8x128xf32>
    %133 = arith.select %130, %131, %132 : vector<8x128xi1>, vector<8x128xf32>
    %134 = arith.addf %128, %133 : vector<8x128xf32>
    %c0_38 = arith.constant 0 : index
    %c0_39 = arith.constant 0 : index
    %135 = vector.load %arg6[%c0_38, %c0_39] : memref<8x128xf32, #tpu.memory_space<vmem>>, vector<8x128xf32>
    %c0_i32_40 = arith.constant 0 : i32
    %136 = vector.broadcast %c0_i32_40 : i32 to vector<8x128xi32>
    %137 = arith.cmpi eq, %105, %136 : vector<8x128xi32>
    %cst_41 = arith.constant 0.000000e+00 : f32
    %138 = vector.broadcast %cst_41 : f32 to vector<8x128xf32>
    %139 = arith.select %137, %134, %138 : vector<8x128xi1>, vector<8x128xf32>
    %140 = arith.addf %135, %139 : vector<8x128xf32>
    %c0_42 = arith.constant 0 : index
    %c0_43 = arith.constant 0 : index
    %141 = vector.load %arg6[%c0_42, %c0_43] : memref<8x128xf32, #tpu.memory_space<vmem>>, vector<8x128xf32>
    tpu.vector_store %arg6[%c0_42, %c0_43], %140 {strides = array<i32>} : memref<8x128xf32, #tpu.memory_space<vmem>>, vector<8x128xf32>,
    %c0_44 = arith.constant 0 : index
    %c0_45 = arith.constant 0 : index
    %142 = vector.load %arg6[%c0_44, %c0_45] : memref<8x128xf32, #tpu.memory_space<vmem>>, vector<8x128xf32>
    %c0_46 = arith.constant 0 : index
    %c0_47 = arith.constant 0 : index
    %c0_48 = arith.constant 0 : index
    %143 = vector.load %arg5[%c0_46, %c0_47, %c0_48] : memref<1x8x128xf32, #tpu.memory_space<vmem>>, vector<1x8x128xf32>
    %144 = vector.shape_cast %143 : vector<1x8x128xf32> to vector<8x128xf32>
    %145 = vector.shape_cast %142 : vector<8x128xf32> to vector<1x8x128xf32>
    tpu.vector_store %arg5[%c0_46, %c0_47, %c0_48], %145 {strides = array<i32>} : memref<1x8x128xf32, #tpu.memory_space<vmem>>, vector<1x8x128xf32>,
    return
  }
  func.func @transform_0(%arg0: i32, %arg1: i32) -> (i32, i32) {
    %c0_i32 = arith.constant 0 : i32
    %c0_i32_0 = arith.constant 0 : i32
    %c0_i32_1 = arith.constant 0 : i32
    return %c0_i32, %c0_i32_0 : i32, i32
  }
  func.func @transform_1(%arg0: i32, %arg1: i32) -> (i32, i32, i32) {
    %c0_i32 = arith.constant 0 : i32
    %c0_i32_0 = arith.constant 0 : i32
    return %arg0, %c0_i32, %arg1 : i32, i32, i32
  }
  func.func @transform_2(%arg0: i32, %arg1: i32) -> (i32, i32, i32) {
    %c0_i32 = arith.constant 0 : i32
    %c0_i32_0 = arith.constant 0 : i32
    return %arg0, %c0_i32, %arg1 : i32, i32, i32
  }
  func.func @transform_3(%arg0: i32, %arg1: i32) -> (i32, i32, i32) {
    %c0_i32 = arith.constant 0 : i32
    %c0_i32_0 = arith.constant 0 : i32
    %c0_i32_1 = arith.constant 0 : i32
    return %arg0, %c0_i32, %c0_i32_0 : i32, i32, i32
  }
}

</mosaic_0001>

<llo_original>
// kernel: fn.1
$region0: #{fn.1}
  #allocation0 [shape = 'u32[]', space=smem, size = 0x4, offset = 0x4, fixed_abs, tag = 'smem constant byte address 0x4 - core index']
  #allocation1 [shape = 'u32[144,128]{1,0:T(1,128)}', space=vmem, size = 0x12000, scoped, tag = 'internal scratch']
  #allocation2 [shape = 'f32[8,128]{1,0:T(8,128)}', space=vmem, size = 0x1000, scoped, tag = 'scratch operand']
  %s0 = inlined_call_operand.vmem [shape: f32[180,140], index: 0, kind: input, shape index: {}]
  %s1 = inlined_call_operand.vmem [shape: f32[2,140,16], index: 1, kind: input, shape index: {}]
  %s2 = inlined_call_operand.vmem [shape: f32[2,140,16], index: 2, kind: input, shape index: {}]
  %s3 = inlined_call_operand.vmem [shape: f32[2,8,128], index: 3, kind: output, shape index: {}]
  %s4 = sld [smem:[#allocation0]]
  $region49: #{fn.1} parent=0
    _
  %s6 = ssub.s32 1, %s4
  %s7 = scalar_select 0, %s6, %s4
  loop: start=0, step=1, limit=4
  $region2: #{fn.1} parent=0 // loop_pre_header
    _
  $region3: #{fn.1} parent=0 // loop_header
    %s9 = sphi 0, %s13
    %p10 = scmp.ge.s32.totalorder %s9, 4
    %s16 = sphi 0, %s28
    %s17 = sphi 0, %s24
    %s18 = sphi 0, %s16
    %s19 = sphi 0, %s17
    %s20 = sphi 0, %s18
    %s21 = sphi 0, %s19
    %s29 = sphi 0, %s29
    %s31 = sphi 0, %s29
    %s32 = sphi 0, %s31
    %s46 = sphi 0, %s32
    %s54 = sphi 0, %s56
    %s57 = sphi 0, %s54
    %s58 = sphi 0, %s57
    %s74 = sphi 0, %s58
    %s82 = sphi 0, %s84
    %s85 = sphi 0, %s82
    %s86 = sphi 0, %s85
    %s102 = sphi 0, %s86
    %s108 = sphi 0, %s110
    %s111 = sphi 0, %s108
    %s112 = sphi 0, %s111
    %s128 = sphi 0, %s112
  $region4: #{fn.1} parent=0 // loop_header_branch
    %12 = sbr.rel (%p10) target = $region8
  $region5: #{fn.1} parent=0 // loop_body
    %s14 = ssub.s32 %s9, 1
    %s15 = ssub.s32 %s9, 2
    %s22 = sadd.s32 1, %s17
    %p23 = scmp.ge.s32.totalorder %s22, 1
    %s24 = scalar_select %p23, 0, %s22
    %s25 = sadd.s32 1, %s16
    %s26 = scalar_select %p23, %s25, %s16
    %p27 = scmp.ge.s32.totalorder %s26, 2
    %s28 = scalar_select %p27, 0, %s26
    %s30 = sadd.s32 %s29, 1
    %p33 = scmp.eq.s32.totalorder %s9, 1
    %p34 = scmp.ne.s32.totalorder %s29, %s31
    %p35 = scmp.eq.s32.totalorder %s9, 0
    %p36 = por %p34, %p35
    %p37 = scmp.ne.s32.totalorder %s29, %s31
    %p38 = scmp.eq.s32.totalorder %s14, 1
    %p39 = por %p37, %p38
    %p40 = scmp.ne.s32.totalorder %s31, %s32
    %p41 = scmp.eq.s32.totalorder %s14, 0
    %p42 = por %p40, %p41
    %p43 = scmp.ne.s32.totalorder %s31, %s32
    %p44 = scmp.eq.s32.totalorder %s15, 1
    %p45 = por %p43, %p44
    %p47 = scmp.ne.s32.totalorder %s32, %s46
    %p48 = scmp.eq.s32.totalorder %s15, 0
    %p49 = por %p47, %p48
    %s50 = ssub.s32 %s16, %s28
    %s51 = ssub.s32 %s17, %s24
    %s52 = sor.u32 %s50, %s51
    %p53 = scmp.eq.s32.totalorder %s52, 0
    %s55 = sadd.s32 %s54, 1
    %s56 = scalar_select %p53, %s54, %s55
    %p59 = pneg %p53
    %p60 = scmp.eq.s32.totalorder %s9, 1
    %p61 = por %p59, %p60
    %p62 = scmp.ne.s32.totalorder %s54, %s57
    %p63 = scmp.eq.s32.totalorder %s9, 0
    %p64 = por %p62, %p63
    %p65 = scmp.ne.s32.totalorder %s54, %s57
    %p66 = scmp.eq.s32.totalorder %s14, 1
    %p67 = por %p65, %p66
    %p68 = scmp.ne.s32.totalorder %s57, %s58
    %p69 = scmp.eq.s32.totalorder %s14, 0
    %p70 = por %p68, %p69
    %p71 = scmp.ne.s32.totalorder %s57, %s58
    %p72 = scmp.eq.s32.totalorder %s15, 1
    %p73 = por %p71, %p72
    %p75 = scmp.ne.s32.totalorder %s58, %s74
    %p76 = scmp.eq.s32.totalorder %s15, 0
    %p77 = por %p75, %p76
    %s78 = ssub.s32 %s16, %s28
    %s79 = ssub.s32 %s17, %s24
    %s80 = sor.u32 %s78, %s79
    %p81 = scmp.eq.s32.totalorder %s80, 0
    %s83 = sadd.s32 %s82, 1
    %s84 = scalar_select %p81, %s82, %s83
    %p87 = pneg %p81
    %p88 = scmp.eq.s32.totalorder %s9, 1
    %p89 = por %p87, %p88
    %p90 = scmp.ne.s32.totalorder %s82, %s85
    %p91 = scmp.eq.s32.totalorder %s9, 0
    %p92 = por %p90, %p91
    %p93 = scmp.ne.s32.totalorder %s82, %s85
    %p94 = scmp.eq.s32.totalorder %s14, 1
    %p95 = por %p93, %p94
    %p96 = scmp.ne.s32.totalorder %s85, %s86
    %p97 = scmp.eq.s32.totalorder %s14, 0
    %p98 = por %p96, %p97
    %p99 = scmp.ne.s32.totalorder %s85, %s86
    %p100 = scmp.eq.s32.totalorder %s15, 1
    %p101 = por %p99, %p100
    %p103 = scmp.ne.s32.totalorder %s86, %s102
    %p104 = scmp.eq.s32.totalorder %s15, 0
    %p105 = por %p103, %p104
    %s106 = ssub.s32 %s16, %s28
    %p107 = scmp.eq.s32.totalorder %s106, 0
    %s109 = sadd.s32 %s108, 1
    %s110 = scalar_select %p107, %s108, %s109
    %p113 = pneg %p107
    %p114 = scmp.eq.s32.totalorder %s9, 1
    %p115 = por %p113, %p114
    %p116 = scmp.ne.s32.totalorder %s108, %s111
    %p117 = scmp.eq.s32.totalorder %s9, 0
    %p118 = por %p116, %p117
    %p119 = scmp.ne.s32.totalorder %s108, %s111
    %p120 = scmp.eq.s32.totalorder %s14, 1
    %p121 = por %p119, %p120
    %p122 = scmp.ne.s32.totalorder %s111, %s112
    %p123 = scmp.eq.s32.totalorder %s14, 0
    %p124 = por %p122, %p123
    %p125 = scmp.ne.s32.totalorder %s111, %s112
    %p126 = scmp.eq.s32.totalorder %s15, 1
    %p127 = por %p125, %p126
    %p129 = scmp.ne.s32.totalorder %s112, %s128
    %p130 = scmp.eq.s32.totalorder %s15, 0
    %p131 = por %p129, %p130
    %p132 = scmp.le.s32.totalorder 1, %s9
    %p133 = scmp.lt.s32.totalorder %s9, 3
    %p134 = pnand %p132, %p133
    %p135 = pneg %p134
    // Predicated region
    $region9: #{fn.1} parent=5 // pred_check
      _
    $region10: #{fn.1} parent=5 // pred_check_branch
      %137 = sbr.rel (%p134) target = $region12
    $region11: #{fn.1} parent=5 // pred_region
      %s138 = ssub.s32 %s9, 1
      // Predicated region
      $region13: #{fn.1} parent=11 // pred_check
        %p139 = pneg %p42
      $region14: #{fn.1} parent=11 // pred_check_branch
        %141 = sbr.rel (%p139) target = $region16
      $region15: #{fn.1} parent=11 // pred_region
        _
      $region16: #{fn.1} parent=11 // pred_fallthru
        _
    $region12: #{fn.1} parent=5 // pred_fallthru
      _
    %p142 = scmp.lt.s32.totalorder %s9, 2
    // Predicated region
    $region17: #{fn.1} parent=5 // pred_check
      %p143 = pneg %p142
    $region18: #{fn.1} parent=5 // pred_check_branch
      %145 = sbr.rel (%p143) target = $region20
    $region19: #{fn.1} parent=5 // pred_region
      // Predicated region
      $region21: #{fn.1} parent=19 // pred_check
        %p146 = pneg %p64
      $region22: #{fn.1} parent=19 // pred_check_branch
        %148 = sbr.rel (%p146) target = $region24
      $region23: #{fn.1} parent=19 // pred_region
        %p149 = scmp.lt.s32.totalorder %s16, 1
        %s150 = scalar_select %p149, %s16, 1
        %p151 = scmp.lt.s32.totalorder %s17, 0
        %s152 = scalar_select %p151, %s17, 0
        %s153 = smul.addr %s150, 18
        %s154 = sadd.s32 %s152, %s153
        %s155 = smul.addr %s154, 8
        %s156 = scalar_lea.vmem %s1, %s155
      $region24: #{fn.1} parent=19 // pred_fallthru
        _
      // Predicated region
      $region25: #{fn.1} parent=19 // pred_check
        %p157 = pneg %p92
      $region26: #{fn.1} parent=19 // pred_check_branch
        %159 = sbr.rel (%p157) target = $region28
      $region27: #{fn.1} parent=19 // pred_region
        %p160 = scmp.lt.s32.totalorder %s16, 1
        %s161 = scalar_select %p160, %s16, 1
        %p162 = scmp.lt.s32.totalorder %s17, 0
        %s163 = scalar_select %p162, %s17, 0
        %s164 = smul.addr %s161, 18
        %s165 = sadd.s32 %s163, %s164
        %s166 = smul.addr %s165, 8
        %s167 = scalar_lea.vmem %s2, %s166
      $region28: #{fn.1} parent=19 // pred_fallthru
        _
    $region20: #{fn.1} parent=5 // pred_fallthru
      _
    %p168 = scmp.le.s32.totalorder 1, %s9
    %p169 = scmp.lt.s32.totalorder %s9, 3
    %p170 = pnand %p168, %p169
    %p171 = pneg %p170
    // Predicated region
    $region29: #{fn.1} parent=5 // pred_check
      _
    $region30: #{fn.1} parent=5 // pred_check_branch
      %173 = sbr.rel (%p170) target = $region32
    $region31: #{fn.1} parent=5 // pred_region
      %s174 = ssub.s32 %s9, 1
      %p175 = pneg %p42
      %p176 = pneg %p39
      %p177 = scmp.lt.s32.totalorder %s18, 1
      %s178 = scalar_select %p177, %s18, 1
      %p179 = scmp.lt.s32.totalorder %s19, 0
      %s180 = scalar_select %p179, %s19, 0
      %s181 = smul.addr %s178, 18
      %s182 = sadd.s32 %s180, %s181
      %s183 = smul.addr %s182, 8
      %s184 = scalar_lea.vmem %s1, %s183
      %p185 = pneg %p70
      %p186 = pneg %p67
      %p187 = scmp.lt.s32.totalorder %s18, 1
      %s188 = scalar_select %p187, %s18, 1
      %p189 = scmp.lt.s32.totalorder %s19, 0
      %s190 = scalar_select %p189, %s19, 0
      %s191 = smul.addr %s188, 18
      %s192 = sadd.s32 %s190, %s191
      %s193 = smul.addr %s192, 8
      %s194 = scalar_lea.vmem %s2, %s193
      %p195 = pneg %p98
      %p196 = pneg %p95
      %p197 = pneg %p124
      %p198 = pneg %p121
      %p199 = scmp.lt.s32.totalorder %s18, 1
      %s200 = scalar_select %p199, %s18, 1
      %s201 = smul.addr %s200, 8
      %s202 = scalar_lea.vmem %s3, %s201
      %p203 = scmp.lt.s32.totalorder %s18, 1
      %s204 = scalar_select %p203, %s18, 1
      %p205 = scmp.lt.s32.totalorder %s19, 0
      %s206 = scalar_select %p205, %s19, 0
      %s207 = smul.addr %s204, 18
      %s208 = sadd.s32 %s206, %s207
      %s209 = smul.addr %s208, 8
      %s210 = scalar_lea.vmem %s1, %s209
      %p211 = scmp.lt.s32.totalorder %s18, 1
      %s212 = scalar_select %p211, %s18, 1
      %p213 = scmp.lt.s32.totalorder %s19, 0
      %s214 = scalar_select %p213, %s19, 0
      %s215 = smul.addr %s212, 18
      %s216 = sadd.s32 %s214, %s215
      %s217 = smul.addr %s216, 8
      %s218 = scalar_lea.vmem %s2, %s217
      %p219 = scmp.lt.s32.totalorder %s18, 1
      %s220 = scalar_select %p219, %s18, 1
      %s221 = smul.addr %s220, 8
      %s222 = scalar_lea.vmem %s3, %s221
      %p223 = scmp.eq.s32.totalorder %s19, 0
      // Predicated region
      $region33: #{fn.1} parent=31 // pred_check
        %p224 = pneg %p223
      $region34: #{fn.1} parent=31 // pred_check_branch
        %226 = sbr.rel (%p224) target = $region36
      $region35: #{fn.1} parent=31 // pred_region
        %227 = vst [vmem:[#allocation2] sm:$0xff] 0.0
      $region36: #{fn.1} parent=31 // pred_fallthru
        _
      %v228 = vld [vmem:[%s210] sm:$0xff]
      %v229 = vld [vmem:[%s210 + $0x8] sm:$0xff]
      %v230 = vld [vmem:[%s210 + $0x10] sm:$0xff]
      %v231 = vld [vmem:[%s210 + $0x18] sm:$0xff]
      %v232 = vld [vmem:[%s210 + $0x20] sm:$0xff]
      %v233 = vld [vmem:[%s210 + $0x28] sm:$0xff]
      %v234 = vld [vmem:[%s210 + $0x30] sm:$0xff]
      %v235 = vld [vmem:[%s210 + $0x38] sm:$0xff]
      %v236 = vld [vmem:[%s210 + $0x40] sm:$0xff]
      %v237 = vld [vmem:[%s210 + $0x48] sm:$0xff]
      %v238 = vld [vmem:[%s210 + $0x50] sm:$0xff]
      %v239 = vld [vmem:[%s210 + $0x58] sm:$0xff]
      %v240 = vld [vmem:[%s210 + $0x60] sm:$0xff]
      %v241 = vld [vmem:[%s210 + $0x68] sm:$0xff]
      %v242 = vld [vmem:[%s210 + $0x70] sm:$0xff]
      %v243 = vld [vmem:[%s210 + $0x78] sm:$0xff]
      %v244 = vld [vmem:[%s210 + $0x80] sm:$0xff]
      %v245 = vld [vmem:[%s210 + $0x88] sm:$0xf]
      %v246 = vld [vmem:[%s218] sm:$0xff]
      %v247 = vld [vmem:[%s218 + $0x8] sm:$0xff]
      %v248 = vld [vmem:[%s218 + $0x10] sm:$0xff]
      %v249 = vld [vmem:[%s218 + $0x18] sm:$0xff]
      %v250 = vld [vmem:[%s218 + $0x20] sm:$0xff]
      %v251 = vld [vmem:[%s218 + $0x28] sm:$0xff]
      %v252 = vld [vmem:[%s218 + $0x30] sm:$0xff]
      %v253 = vld [vmem:[%s218 + $0x38] sm:$0xff]
      %v254 = vld [vmem:[%s218 + $0x40] sm:$0xff]
      %v255 = vld [vmem:[%s218 + $0x48] sm:$0xff]
      %v256 = vld [vmem:[%s218 + $0x50] sm:$0xff]
      %v257 = vld [vmem:[%s218 + $0x58] sm:$0xff]
      %v258 = vld [vmem:[%s218 + $0x60] sm:$0xff]
      %v259 = vld [vmem:[%s218 + $0x68] sm:$0xff]
      %v260 = vld [vmem:[%s218 + $0x70] sm:$0xff]
      %v261 = vld [vmem:[%s218 + $0x78] sm:$0xff]
      %v262 = vld [vmem:[%s218 + $0x80] sm:$0xff]
      %v263 = vld [vmem:[%s218 + $0x88] sm:$0xf]
      %v264 = vld [vmem:[%s0] sm:$0xff]
      %v265 = vld [vmem:[%s0 + $0x8] sm:$0xff]
      %v266 = vld [vmem:[%s0 + $0x10] sm:$0xff]
      %v267 = vld [vmem:[%s0 + $0x18] sm:$0xff]
      %v268 = vld [vmem:[%s0 + $0x20] sm:$0xff]
      %v269 = vld [vmem:[%s0 + $0x28] sm:$0xff]
      %v270 = vld [vmem:[%s0 + $0x30] sm:$0xff]
      %v271 = vld [vmem:[%s0 + $0x38] sm:$0xff]
      %v272 = vld [vmem:[%s0 + $0x40] sm:$0xff]
      %v273 = vld [vmem:[%s0 + $0x48] sm:$0xff]
      %v274 = vld [vmem:[%s0 + $0x50] sm:$0xff]
      %v275 = vld [vmem:[%s0 + $0x58] sm:$0xff]
      %v276 = vld [vmem:[%s0 + $0x60] sm:$0xff]
      %v277 = vld [vmem:[%s0 + $0x68] sm:$0xff]
      %v278 = vld [vmem:[%s0 + $0x70] sm:$0xff]
      %v279 = vld [vmem:[%s0 + $0x78] sm:$0xff]
      %v280 = vld [vmem:[%s0 + $0x80] sm:$0xff]
      %v281 = vld [vmem:[%s0 + $0x88] sm:$0xff]
      %v282 = vld [vmem:[%s0 + $0x90] sm:$0xff]
      %v283 = vld [vmem:[%s0 + $0x98] sm:$0xff]
      %v284 = vld [vmem:[%s0 + $0xa0] sm:$0xff]
      %v285 = vld [vmem:[%s0 + $0xa8] sm:$0xff]
      %v286 = vld [vmem:[%s0 + $0xb0] sm:$0xff]
      %v287 = vld [vmem:[%s0 + $0xb8] sm:$0xff]
      %v288 = vld [vmem:[%s0 + $0xc0] sm:$0xff]
      %v289 = vld [vmem:[%s0 + $0xc8] sm:$0xff]
      %v290 = vld [vmem:[%s0 + $0xd0] sm:$0xff]
      %v291 = vld [vmem:[%s0 + $0xd8] sm:$0xff]
      %v292 = vld [vmem:[%s0 + $0xe0] sm:$0xff]
      %v293 = vld [vmem:[%s0 + $0xe8] sm:$0xff]
      %v294 = vld [vmem:[%s0 + $0xf0] sm:$0xff]
      %v295 = vld [vmem:[%s0 + $0xf8] sm:$0xff]
      %v296 = vld [vmem:[%s0 + $0x100] sm:$0xff]
      %v297 = vld [vmem:[%s0 + $0x108] sm:$0xff]
      %v298 = vld [vmem:[%s0 + $0x110] sm:$0xff]
      %v299 = vld [vmem:[%s0 + $0x118] sm:$0xff]
      %v300 = vld [vmem:[%s0 + $0x120] sm:$0xff]
      %v301 = vld [vmem:[%s0 + $0x128] sm:$0xff]
      %v302 = vld [vmem:[%s0 + $0x130] sm:$0xff]
      %v303 = vld [vmem:[%s0 + $0x138] sm:$0xff]
      %v304 = vld [vmem:[%s0 + $0x140] sm:$0xff]
      %v305 = vld [vmem:[%s0 + $0x148] sm:$0xff]
      %v306 = vld [vmem:[%s0 + $0x150] sm:$0xff]
      %v307 = vld [vmem:[%s0 + $0x158] sm:$0xff]
      %v308 = vld [vmem:[%s0 + $0x160] sm:$0xf]
      %v309 = vld [vmem:[%s0 + $0x168] sm:$0xf]
      %vm310 = vcmask 97280
      %v312 = vsel %vm310, %v265, 0
      %v315 = vsel %vm310, %v267, 0
      %v318 = vsel %vm310, %v269, 0
      %v321 = vsel %vm310, %v271, 0
      %v324 = vsel %vm310, %v273, 0
      %v327 = vsel %vm310, %v275, 0
      %v330 = vsel %vm310, %v277, 0
      %v333 = vsel %vm310, %v279, 0
      %v336 = vsel %vm310, %v281, 0
      %v339 = vsel %vm310, %v283, 0
      %v342 = vsel %vm310, %v285, 0
      %v345 = vsel %vm310, %v287, 0
      %v348 = vsel %vm310, %v289, 0
      %v351 = vsel %vm310, %v291, 0
      %v354 = vsel %vm310, %v293, 0
      %v357 = vsel %vm310, %v295, 0
      %v360 = vsel %vm310, %v297, 0
      %v363 = vsel %vm310, %v299, 0
      %v366 = vsel %vm310, %v301, 0
      %v369 = vsel %vm310, %v303, 0
      %v372 = vsel %vm310, %v305, 0
      %v375 = vsel %vm310, %v307, 0
      %v378 = vsel %vm310, %v309, 0
      %vm380 = vcmask 1043456
      %v382 = vsel %vm380, %v245, 0
      %384 = vmatprep.subr.mxu0 0.0
      %v385 = vand.u32 %v228, 4294901760
      %386 = vmatpush1.msra.mxu0 %v385
      %387 = vmatprep.subr.mxu0 0.0
      %v388 = vand.u32 %v229, 4294901760
      %389 = vmatpush1.msra.mxu0 %v388
      %390 = vmatprep.subr.mxu0 0.0
      %v391 = vand.u32 %v230, 4294901760
      %392 = vmatpush1.msra.mxu0 %v391
      %393 = vmatprep.subr.mxu0 0.0
      %v394 = vand.u32 %v231, 4294901760
      %395 = vmatpush1.msra.mxu0 %v394
      %396 = vmatprep.subr.mxu0 0.0
      %v397 = vand.u32 %v232, 4294901760
      %398 = vmatpush1.msra.mxu0 %v397
      %399 = vmatprep.subr.mxu0 0.0
      %v400 = vand.u32 %v233, 4294901760
      %401 = vmatpush1.msra.mxu0 %v400
      %402 = vmatprep.subr.mxu0 0.0
      %v403 = vand.u32 %v234, 4294901760
      %404 = vmatpush1.msra.mxu0 %v403
      %405 = vmatprep.subr.mxu0 0.0
      %v406 = vand.u32 %v235, 4294901760
      %407 = vmatpush1.msra.mxu0 %v406
      %408 = vmatprep.subr.mxu0 0.0
      %v409 = vand.u32 %v236, 4294901760
      %410 = vmatpush1.msra.mxu0 %v409
      %411 = vmatprep.subr.mxu0 0.0
      %v412 = vand.u32 %v237, 4294901760
      %413 = vmatpush1.msra.mxu0 %v412
      %414 = vmatprep.subr.mxu0 0.0
      %v415 = vand.u32 %v238, 4294901760
      %416 = vmatpush1.msra.mxu0 %v415
      %417 = vmatprep.subr.mxu0 0.0
      %v418 = vand.u32 %v239, 4294901760
      %419 = vmatpush1.msra.mxu0 %v418
      %420 = vmatprep.subr.mxu0 0.0
      %v421 = vand.u32 %v240, 4294901760
      %422 = vmatpush1.msra.mxu0 %v421
      %423 = vmatprep.subr.mxu0 0.0
      %v424 = vand.u32 %v241, 4294901760
      %425 = vmatpush1.msra.mxu0 %v424
      %426 = vmatprep.subr.mxu0 0.0
      %v427 = vand.u32 %v242, 4294901760
      %428 = vmatpush1.msra.mxu0 %v427
      %429 = vmatprep.subr.mxu0 0.0
      %v430 = vand.u32 %v243, 4294901760
      %431 = vmatpush1.msra.mxu0 %v430
      %432 = vmatprep.subr.mxu0 0.0
      %v433 = vand.u32 %v244, 4294901760
      %434 = vmatpush1.msra.mxu0 %v433
      %435 = vmatprep.subr.mxu0 0.0
      %v436 = vand.u32 %v382, 4294901760
      %437 = vmatpush1.msra.mxu0 %v436
      %438 = vmatprep.subr.mxu0 0.0
      %439 = vmatpush1.msra.mxu0 0.0
      %440 = vmatprep.subr.mxu0 0.0
      %441 = vmatpush1.msra.mxu0 0.0
      %442 = vmatprep.subr.mxu0 0.0
      %443 = vmatpush1.msra.mxu0 0.0
      %444 = vmatprep.subr.mxu0 0.0
      %445 = vmatpush1.msra.mxu0 0.0
      %446 = vmatprep.subr.mxu0 0.0
      %447 = vmatpush1.msra.mxu0 0.0
      %448 = vmatprep.subr.mxu0 0.0
      %449 = vmatpush1.msra.mxu0 0.0
      %450 = vmatprep.subr.mxu0 0.0
      %451 = vmatpush1.msra.mxu0 0.0
      %452 = vmatprep.subr.mxu0 0.0
      %453 = vmatpush1.msra.mxu0 0.0
      %454 = vmatprep.subr.mxu0 0.0
      %455 = vmatpush1.msra.mxu0 0.0
      %456 = vmatprep.subr.mxu0 0.0
      %457 = vmatpush1.msra.mxu0 0.0
      %458 = vmatprep.subr.mxu0 0.0
      %459 = vmatpush1.msra.mxu0 0.0
      %460 = vmatprep.subr.mxu0 0.0
      %461 = vmatpush1.msra.mxu0 0.0
      %462 = vmatprep.subr.mxu0 0.0
      %463 = vmatpush1.msra.mxu0 0.0
      %464 = vmatprep.subr.mxu0 0.0
      %465 = vmatpush1.msra.mxu0 0.0
      %v466 = vand.u32 %v312, 4294901760
      %v467 = vsub.f32 %v312, %v466
      %v468 = vand.u32 %v467, 4294901760
      %v469 = vsub.f32 %v467, %v468
      %v470 = vand.u32 %v469, 4294901760
      %471 = vmatprep.mubr.f32.mxu0 %v470
      %v472 = vand.u32 %v264, 4294901760
      %v473 = vsub.f32 %v264, %v472
      %v474 = vand.u32 %v473, 4294901760
      %v475 = vsub.f32 %v473, %v474
      %v476 = vand.u32 %v475, 4294901760
      %477 = vmatmul.mubr.f32.gmra.mrb[0].mxu0 %v476
      %v478 = vpop.f32.mrb[0].mxu0
      %v479 = vadd.f32 0.0, %v478
      %v480 = vpop.f32.mrb[0].mxu0
      %v481 = vand.u32 %v315, 4294901760
      %v482 = vsub.f32 %v315, %v481
      %v483 = vand.u32 %v482, 4294901760
      %v484 = vsub.f32 %v482, %v483
      %v485 = vand.u32 %v484, 4294901760
      %486 = vmatprep.mubr.f32.mxu0 %v485
      %v487 = vand.u32 %v266, 4294901760
      %v488 = vsub.f32 %v266, %v487
      %v489 = vand.u32 %v488, 4294901760
      %v490 = vsub.f32 %v488, %v489
      %v491 = vand.u32 %v490, 4294901760
      %492 = vmatmul.mubr.f32.gmra.mrb[0].mxu0 %v491
      %v493 = vpop.f32.mrb[0].mxu0
      %v494 = vadd.f32 0.0, %v493
      %v495 = vpop.f32.mrb[0].mxu0
      %v496 = vand.u32 %v318, 4294901760
      %v497 = vsub.f32 %v318, %v496
      %v498 = vand.u32 %v497, 4294901760
      %v499 = vsub.f32 %v497, %v498
      %v500 = vand.u32 %v499, 4294901760
      %501 = vmatprep.mubr.f32.mxu0 %v500
      %v502 = vand.u32 %v268, 4294901760
      %v503 = vsub.f32 %v268, %v502
      %v504 = vand.u32 %v503, 4294901760
      %v505 = vsub.f32 %v503, %v504
      %v506 = vand.u32 %v505, 4294901760
      %507 = vmatmul.mubr.f32.gmra.mrb[0].mxu0 %v506
      %v508 = vpop.f32.mrb[0].mxu0
      %v509 = vadd.f32 0.0, %v508
      %v510 = vpop.f32.mrb[0].mxu0
      %v511 = vand.u32 %v321, 4294901760
      %v512 = vsub.f32 %v321, %v511
      %v513 = vand.u32 %v512, 4294901760
      %v514 = vsub.f32 %v512, %v513
      %v515 = vand.u32 %v514, 4294901760
      %516 = vmatprep.mubr.f32.mxu0 %v515
      %v517 = vand.u32 %v270, 4294901760
      %v518 = vsub.f32 %v270, %v517
      %v519 = vand.u32 %v518, 4294901760
      %v520 = vsub.f32 %v518, %v519
      %v521 = vand.u32 %v520, 4294901760
      %522 = vmatmul.mubr.f32.gmra.mrb[0].mxu0 %v521
      %v523 = vpop.f32.mrb[0].mxu0
      %v524 = vadd.f32 0.0, %v523
      %v525 = vpop.f32.mrb[0].mxu0
      %v526 = vand.u32 %v324, 4294901760
      %v527 = vsub.f32 %v324, %v526
      %v528 = vand.u32 %v527, 4294901760
      %v529 = vsub.f32 %v527, %v528
      %v530 = vand.u32 %v529, 4294901760
      %531 = vmatprep.mubr.f32.mxu0 %v530
      %v532 = vand.u32 %v272, 4294901760
      %v533 = vsub.f32 %v272, %v532
      %v534 = vand.u32 %v533, 4294901760
      %v535 = vsub.f32 %v533, %v534
      %v536 = vand.u32 %v535, 4294901760
      %537 = vmatmul.mubr.f32.gmra.mrb[0].mxu0 %v536
      %v538 = vpop.f32.mrb[0].mxu0
      %v539 = vadd.f32 0.0, %v538
      %v540 = vpop.f32.mrb[0].mxu0
      %v541 = vand.u32 %v327, 4294901760
      %v542 = vsub.f32 %v327, %v541
      %v543 = vand.u32 %v542, 4294901760
      %v544 = vsub.f32 %v542, %v543
      %v545 = vand.u32 %v544, 4294901760
      %546 = vmatprep.mubr.f32.mxu0 %v545
      %v547 = vand.u32 %v274, 4294901760
      %v548 = vsub.f32 %v274, %v547
      %v549 = vand.u32 %v548, 4294901760
      %v550 = vsub.f32 %v548, %v549
      %v551 = vand.u32 %v550, 4294901760
      %552 = vmatmul.mubr.f32.gmra.mrb[0].mxu0 %v551
      %v553 = vpop.f32.mrb[0].mxu0
      %v554 = vadd.f32 0.0, %v553
      %v555 = vpop.f32.mrb[0].mxu0
      %v556 = vand.u32 %v330, 4294901760
      %v557 = vsub.f32 %v330, %v556
      %v558 = vand.u32 %v557, 4294901760
      %v559 = vsub.f32 %v557, %v558
      %v560 = vand.u32 %v559, 4294901760
      %561 = vmatprep.mubr.f32.mxu0 %v560
      %v562 = vand.u32 %v276, 4294901760
      %v563 = vsub.f32 %v276, %v562
      %v564 = vand.u32 %v563, 4294901760
      %v565 = vsub.f32 %v563, %v564
      %v566 = vand.u32 %v565, 4294901760
      %567 = vmatmul.mubr.f32.gmra.mrb[0].mxu0 %v566
      %v568 = vpop.f32.mrb[0].mxu0
      %v569 = vadd.f32 0.0, %v568
      %v570 = vpop.f32.mrb[0].mxu0
      %v571 = vand.u32 %v333, 4294901760
      %v572 = vsub.f32 %v333, %v571
      %v573 = vand.u32 %v572, 4294901760
      %v574 = vsub.f32 %v572, %v573
      %v575 = vand.u32 %v574, 4294901760
      %576 = vmatprep.mubr.f32.mxu0 %v575
      %v577 = vand.u32 %v278, 4294901760
      %v578 = vsub.f32 %v278, %v577
      %v579 = vand.u32 %v578, 4294901760
      %v580 = vsub.f32 %v578, %v579
      %v581 = vand.u32 %v580, 4294901760
      %582 = vmatmul.mubr.f32.gmra.mrb[0].mxu0 %v581
      %v583 = vpop.f32.mrb[0].mxu0
      %v584 = vadd.f32 0.0, %v583
      %v585 = vpop.f32.mrb[0].mxu0
      %v586 = vand.u32 %v336, 4294901760
      %v587 = vsub.f32 %v336, %v586
      %v588 = vand.u32 %v587, 4294901760
      %v589 = vsub.f32 %v587, %v588
      %v590 = vand.u32 %v589, 4294901760
      %591 = vmatprep.mubr.f32.mxu0 %v590
      %v592 = vand.u32 %v280, 4294901760
      %v593 = vsub.f32 %v280, %v592
      %v594 = vand.u32 %v593, 4294901760
      %v595 = vsub.f32 %v593, %v594
      %v596 = vand.u32 %v595, 4294901760
      %597 = vmatmul.mubr.f32.gmra.mrb[0].mxu0 %v596
      %v598 = vpop.f32.mrb[0].mxu0
      %v599 = vadd.f32 0.0, %v598
      %v600 = vpop.f32.mrb[0].mxu0
      %v601 = vand.u32 %v339, 4294901760
      %v602 = vsub.f32 %v339, %v601
      %v603 = vand.u32 %v602, 4294901760
      %v604 = vsub.f32 %v602, %v603
      %v605 = vand.u32 %v604, 4294901760
      %606 = vmatprep.mubr.f32.mxu0 %v605
      %v607 = vand.u32 %v282, 4294901760
      %v608 = vsub.f32 %v282, %v607
      %v609 = vand.u32 %v608, 4294901760
      %v610 = vsub.f32 %v608, %v609
      %v611 = vand.u32 %v610, 4294901760
      %612 = vmatmul.mubr.f32.gmra.mrb[0].mxu0 %v611
      %v613 = vpop.f32.mrb[0].mxu0
      %v614 = vadd.f32 0.0, %v613
      %v615 = vpop.f32.mrb[0].mxu0
      %v616 = vand.u32 %v342, 4294901760
      %v617 = vsub.f32 %v342, %v616
      %v618 = vand.u32 %v617, 4294901760
      %v619 = vsub.f32 %v617, %v618
      %v620 = vand.u32 %v619, 4294901760
      %621 = vmatprep.mubr.f32.mxu0 %v620
      %v622 = vand.u32 %v284, 4294901760
      %v623 = vsub.f32 %v284, %v622
      %v624 = vand.u32 %v623, 4294901760
      %v625 = vsub.f32 %v623, %v624
      %v626 = vand.u32 %v625, 4294901760
      %627 = vmatmul.mubr.f32.gmra.mrb[0].mxu0 %v626
      %v628 = vpop.f32.mrb[0].mxu0
      %v629 = vadd.f32 0.0, %v628
      %v630 = vpop.f32.mrb[0].mxu0
      %v631 = vand.u32 %v345, 4294901760
      %v632 = vsub.f32 %v345, %v631
      %v633 = vand.u32 %v632, 4294901760
      %v634 = vsub.f32 %v632, %v633
      %v635 = vand.u32 %v634, 4294901760
      %636 = vmatprep.mubr.f32.mxu0 %v635
      %v637 = vand.u32 %v286, 4294901760
      %v638 = vsub.f32 %v286, %v637
      %v639 = vand.u32 %v638, 4294901760
      %v640 = vsub.f32 %v638, %v639
      %v641 = vand.u32 %v640, 4294901760
      %642 = vmatmul.mubr.f32.gmra.mrb[0].mxu0 %v641
      %v643 = vpop.f32.mrb[0].mxu0
      %v644 = vadd.f32 0.0, %v643
      %v645 = vpop.f32.mrb[0].mxu0
      %v646 = vand.u32 %v348, 4294901760
      %v647 = vsub.f32 %v348, %v646
      %v648 = vand.u32 %v647, 4294901760
      %v649 = vsub.f32 %v647, %v648
      %v650 = vand.u32 %v649, 4294901760
      %651 = vmatprep.mubr.f32.mxu0 %v650
      %v652 = vand.u32 %v288, 4294901760
      %v653 = vsub.f32 %v288, %v652
      %v654 = vand.u32 %v653, 4294901760
      %v655 = vsub.f32 %v653, %v654
      %v656 = vand.u32 %v655, 4294901760
      %657 = vmatmul.mubr.f32.gmra.mrb[0].mxu0 %v656
      %v658 = vpop.f32.mrb[0].mxu0
      %v659 = vadd.f32 0.0, %v658
      %v660 = vpop.f32.mrb[0].mxu0
      %v661 = vand.u32 %v351, 4294901760
      %v662 = vsub.f32 %v351, %v661
      %v663 = vand.u32 %v662, 4294901760
      %v664 = vsub.f32 %v662, %v663
      %v665 = vand.u32 %v664, 4294901760
      %666 = vmatprep.mubr.f32.mxu0 %v665
      %v667 = vand.u32 %v290, 4294901760
      %v668 = vsub.f32 %v290, %v667
      %v669 = vand.u32 %v668, 4294901760
      %v670 = vsub.f32 %v668, %v669
      %v671 = vand.u32 %v670, 4294901760
      %672 = vmatmul.mubr.f32.gmra.mrb[0].mxu0 %v671
      %v673 = vpop.f32.mrb[0].mxu0
      %v674 = vadd.f32 0.0, %v673
      %v675 = vpop.f32.mrb[0].mxu0
      %v676 = vand.u32 %v354, 4294901760
      %v677 = vsub.f32 %v354, %v676
      %v678 = vand.u32 %v677, 4294901760
      %v679 = vsub.f32 %v677, %v678
      %v680 = vand.u32 %v679, 4294901760
      %681 = vmatprep.mubr.f32.mxu0 %v680
      %v682 = vand.u32 %v292, 4294901760
      %v683 = vsub.f32 %v292, %v682
      %v684 = vand.u32 %v683, 4294901760
      %v685 = vsub.f32 %v683, %v684
      %v686 = vand.u32 %v685, 4294901760
      %687 = vmatmul.mubr.f32.gmra.mrb[0].mxu0 %v686
      %v688 = vpop.f32.mrb[0].mxu0
      %v689 = vadd.f32 0.0, %v688
      %v690 = vpop.f32.mrb[0].mxu0
      %v691 = vand.u32 %v357, 4294901760
      %v692 = vsub.f32 %v357, %v691
      %v693 = vand.u32 %v692, 4294901760
      %v694 = vsub.f32 %v692, %v693
      %v695 = vand.u32 %v694, 4294901760
      %696 = vmatprep.mubr.f32.mxu0 %v695
      %v697 = vand.u32 %v294, 4294901760
      %v698 = vsub.f32 %v294, %v697
      %v699 = vand.u32 %v698, 4294901760
      %v700 = vsub.f32 %v698, %v699
      %v701 = vand.u32 %v700, 4294901760
      %702 = vmatmul.mubr.f32.gmra.mrb[0].mxu0 %v701
      %v703 = vpop.f32.mrb[0].mxu0
      %v704 = vpop.f32.mrb[0].mxu0
      %v705 = vand.u32 %v360, 4294901760
      %v706 = vsub.f32 %v360, %v705
      %v707 = vand.u32 %v706, 4294901760
      %v708 = vsub.f32 %v706, %v707
      %v709 = vand.u32 %v708, 4294901760
      %710 = vmatprep.mubr.f32.mxu0 %v709
      %v711 = vand.u32 %v296, 4294901760
      %v712 = vsub.f32 %v296, %v711
      %v713 = vand.u32 %v712, 4294901760
      %v714 = vsub.f32 %v712, %v713
      %v715 = vand.u32 %v714, 4294901760
      %716 = vmatmul.mubr.f32.gmra.mrb[0].mxu0 %v715
      %v717 = vpop.f32.mrb[0].mxu0
      %v718 = vpop.f32.mrb[0].mxu0
      %v719 = vand.u32 %v363, 4294901760
      %v720 = vsub.f32 %v363, %v719
      %v721 = vand.u32 %v720, 4294901760
      %v722 = vsub.f32 %v720, %v721
      %v723 = vand.u32 %v722, 4294901760
      %724 = vmatprep.mubr.f32.mxu0 %v723
      %v725 = vand.u32 %v298, 4294901760
      %v726 = vsub.f32 %v298, %v725
      %v727 = vand.u32 %v726, 4294901760
      %v728 = vsub.f32 %v726, %v727
      %v729 = vand.u32 %v728, 4294901760
      %730 = vmatmul.mubr.f32.gmra.mrb[0].mxu0 %v729
      %v731 = vpop.f32.mrb[0].mxu0
      %v732 = vpop.f32.mrb[0].mxu0
      %v733 = vand.u32 %v366, 4294901760
      %v734 = vsub.f32 %v366, %v733
      %v735 = vand.u32 %v734, 4294901760
      %v736 = vsub.f32 %v734, %v735
      %v737 = vand.u32 %v736, 4294901760
      %738 = vmatprep.mubr.f32.mxu0 %v737
      %v739 = vand.u32 %v300, 4294901760
      %v740 = vsub.f32 %v300, %v739
      %v741 = vand.u32 %v740, 4294901760
      %v742 = vsub.f32 %v740, %v741
      %v743 = vand.u32 %v742, 4294901760
      %744 = vmatmul.mubr.f32.gmra.mrb[0].mxu0 %v743
      %v745 = vpop.f32.mrb[0].mxu0
      %v746 = vpop.f32.mrb[0].mxu0
      %v747 = vand.u32 %v369, 4294901760
      %v748 = vsub.f32 %v369, %v747
      %v749 = vand.u32 %v748, 4294901760
      %v750 = vsub.f32 %v748, %v749
      %v751 = vand.u32 %v750, 4294901760
      %752 = vmatprep.mubr.f32.mxu0 %v751
      %v753 = vand.u32 %v302, 4294901760
      %v754 = vsub.f32 %v302, %v753
      %v755 = vand.u32 %v754, 4294901760
      %v756 = vsub.f32 %v754, %v755
      %v757 = vand.u32 %v756, 4294901760
      %758 = vmatmul.mubr.f32.gmra.mrb[0].mxu0 %v757
      %v759 = vpop.f32.mrb[0].mxu0
      %v760 = vpop.f32.mrb[0].mxu0
      %v761 = vand.u32 %v372, 4294901760
      %v762 = vsub.f32 %v372, %v761
      %v763 = vand.u32 %v762, 4294901760
      %v764 = vsub.f32 %v762, %v763
      %v765 = vand.u32 %v764, 4294901760
      %766 = vmatprep.mubr.f32.mxu0 %v765
      %v767 = vand.u32 %v304, 4294901760
      %v768 = vsub.f32 %v304, %v767
      %v769 = vand.u32 %v768, 4294901760
      %v770 = vsub.f32 %v768, %v769
      %v771 = vand.u32 %v770, 4294901760
      %772 = vmatmul.mubr.f32.gmra.mrb[0].mxu0 %v771
      %v773 = vpop.f32.mrb[0].mxu0
      %v774 = vadd.f32 0.0, %v773
      %v775 = vpop.f32.mrb[0].mxu0
      %v776 = vand.u32 %v375, 4294901760
      %v777 = vsub.f32 %v375, %v776
      %v778 = vand.u32 %v777, 4294901760
      %v779 = vsub.f32 %v777, %v778
      %v780 = vand.u32 %v779, 4294901760
      %781 = vmatprep.mubr.f32.mxu0 %v780
      %v782 = vand.u32 %v306, 4294901760
      %v783 = vsub.f32 %v306, %v782
      %v784 = vand.u32 %v783, 4294901760
      %v785 = vsub.f32 %v783, %v784
      %v786 = vand.u32 %v785, 4294901760
      %787 = vmatmul.mubr.f32.gmra.mrb[0].mxu0 %v786
      %v788 = vpop.f32.mrb[0].mxu0
      %v789 = vadd.f32 0.0, %v788
      %v790 = vpop.f32.mrb[0].mxu0
      %v791 = vand.u32 %v378, 4294901760
      %v792 = vsub.f32 %v378, %v791
      %v793 = vand.u32 %v792, 4294901760
      %v794 = vsub.f32 %v792, %v793
      %v795 = vand.u32 %v794, 4294901760
      %796 = vmatprep.mubr.f32.mxu0 %v795
      %v797 = vand.u32 %v308, 4294901760
      %v798 = vsub.f32 %v308, %v797
      %v799 = vand.u32 %v798, 4294901760
      %v800 = vsub.f32 %v798, %v799
      %v801 = vand.u32 %v800, 4294901760
      %802 = vmatmul.mubr.f32.gmra.mrb[0].mxu0 %v801
      %v803 = vpop.f32.mrb[0].mxu0
      %v804 = vadd.f32 0.0, %v803
      %v805 = vpop.f32.mrb[0].mxu0
      %806 = vdwg.mxu0
      %807 = vmatprep.subr.mxu0 0.0
      %v808 = vand.u32 %v228, 4294901760
      %v809 = vsub.f32 %v228, %v808
      %v810 = vand.u32 %v809, 4294901760
      %v811 = vsub.f32 %v809, %v810
      %v812 = vand.u32 %v811, 4294901760
      %813 = vmatpush1.msra.mxu0 %v812
      %814 = vmatprep.subr.mxu0 0.0
      %v815 = vand.u32 %v229, 4294901760
      %v816 = vsub.f32 %v229, %v815
      %v817 = vand.u32 %v816, 4294901760
      %v818 = vsub.f32 %v816, %v817
      %v819 = vand.u32 %v818, 4294901760
      %820 = vmatpush1.msra.mxu0 %v819
      %821 = vmatprep.subr.mxu0 0.0
      %v822 = vand.u32 %v230, 4294901760
      %v823 = vsub.f32 %v230, %v822
      %v824 = vand.u32 %v823, 4294901760
      %v825 = vsub.f32 %v823, %v824
      %v826 = vand.u32 %v825, 4294901760
      %827 = vmatpush1.msra.mxu0 %v826
      %828 = vmatprep.subr.mxu0 0.0
      %v829 = vand.u32 %v231, 4294901760
      %v830 = vsub.f32 %v231, %v829
      %v831 = vand.u32 %v830, 4294901760
      %v832 = vsub.f32 %v830, %v831
      %v833 = vand.u32 %v832, 4294901760
      %834 = vmatpush1.msra.mxu0 %v833
      %835 = vmatprep.subr.mxu0 0.0
      %v836 = vand.u32 %v232, 4294901760
      %v837 = vsub.f32 %v232, %v836
      %v838 = vand.u32 %v837, 4294901760
      %v839 = vsub.f32 %v837, %v838
      %v840 = vand.u32 %v839, 4294901760
      %841 = vmatpush1.msra.mxu0 %v840
      %842 = vmatprep.subr.mxu0 0.0
      %v843 = vand.u32 %v233, 4294901760
      %v844 = vsub.f32 %v233, %v843
      %v845 = vand.u32 %v844, 4294901760
      %v846 = vsub.f32 %v844, %v845
      %v847 = vand.u32 %v846, 4294901760
      %848 = vmatpush1.msra.mxu0 %v847
      %849 = vmatprep.subr.mxu0 0.0
      %v850 = vand.u32 %v234, 4294901760
      %v851 = vsub.f32 %v234, %v850
      %v852 = vand.u32 %v851, 4294901760
      %v853 = vsub.f32 %v851, %v852
      %v854 = vand.u32 %v853, 4294901760
      %855 = vmatpush1.msra.mxu0 %v854
      %856 = vmatprep.subr.mxu0 0.0
      %v857 = vand.u32 %v235, 4294901760
      %v858 = vsub.f32 %v235, %v857
      %v859 = vand.u32 %v858, 4294901760
      %v860 = vsub.f32 %v858, %v859
      %v861 = vand.u32 %v860, 4294901760
      %862 = vmatpush1.msra.mxu0 %v861
      %863 = vmatprep.subr.mxu0 0.0
      %v864 = vand.u32 %v236, 4294901760
      %v865 = vsub.f32 %v236, %v864
      %v866 = vand.u32 %v865, 4294901760
      %v867 = vsub.f32 %v865, %v866
      %v868 = vand.u32 %v867, 4294901760
      %869 = vmatpush1.msra.mxu0 %v868
      %870 = vmatprep.subr.mxu0 0.0
      %v871 = vand.u32 %v237, 4294901760
      %v872 = vsub.f32 %v237, %v871
      %v873 = vand.u32 %v872, 4294901760
      %v874 = vsub.f32 %v872, %v873
      %v875 = vand.u32 %v874, 4294901760
      %876 = vmatpush1.msra.mxu0 %v875
      %877 = vmatprep.subr.mxu0 0.0
      %v878 = vand.u32 %v238, 4294901760
      %v879 = vsub.f32 %v238, %v878
      %v880 = vand.u32 %v879, 4294901760
      %v881 = vsub.f32 %v879, %v880
      %v882 = vand.u32 %v881, 4294901760
      %883 = vmatpush1.msra.mxu0 %v882
      %884 = vmatprep.subr.mxu0 0.0
      %v885 = vand.u32 %v239, 4294901760
      %v886 = vsub.f32 %v239, %v885
      %v887 = vand.u32 %v886, 4294901760
      %v888 = vsub.f32 %v886, %v887
      %v889 = vand.u32 %v888, 4294901760
      %890 = vmatpush1.msra.mxu0 %v889
      %891 = vmatprep.subr.mxu0 0.0
      %v892 = vand.u32 %v240, 4294901760
      %v893 = vsub.f32 %v240, %v892
      %v894 = vand.u32 %v893, 4294901760
      %v895 = vsub.f32 %v893, %v894
      %v896 = vand.u32 %v895, 4294901760
      %897 = vmatpush1.msra.mxu0 %v896
      %898 = vmatprep.subr.mxu0 0.0
      %v899 = vand.u32 %v241, 4294901760
      %v900 = vsub.f32 %v241, %v899
      %v901 = vand.u32 %v900, 4294901760
      %v902 = vsub.f32 %v900, %v901
      %v903 = vand.u32 %v902, 4294901760
      %904 = vmatpush1.msra.mxu0 %v903
      %905 = vmatprep.subr.mxu0 0.0
      %v906 = vand.u32 %v242, 4294901760
      %v907 = vsub.f32 %v242, %v906
      %v908 = vand.u32 %v907, 4294901760
      %v909 = vsub.f32 %v907, %v908
      %v910 = vand.u32 %v909, 4294901760
      %911 = vmatpush1.msra.mxu0 %v910
      %912 = vmatprep.subr.mxu0 0.0
      %v913 = vand.u32 %v243, 4294901760
      %v914 = vsub.f32 %v243, %v913
      %v915 = vand.u32 %v914, 4294901760
      %v916 = vsub.f32 %v914, %v915
      %v917 = vand.u32 %v916, 4294901760
      %918 = vmatpush1.msra.mxu0 %v917
      %919 = vmatprep.subr.mxu0 0.0
      %v920 = vand.u32 %v244, 4294901760
      %v921 = vsub.f32 %v244, %v920
      %v922 = vand.u32 %v921, 4294901760
      %v923 = vsub.f32 %v921, %v922
      %v924 = vand.u32 %v923, 4294901760
      %925 = vmatpush1.msra.mxu0 %v924
      %926 = vmatprep.subr.mxu0 0.0
      %v927 = vand.u32 %v382, 4294901760
      %v928 = vsub.f32 %v382, %v927
      %v929 = vand.u32 %v928, 4294901760
      %v930 = vsub.f32 %v928, %v929
      %v931 = vand.u32 %v930, 4294901760
      %932 = vmatpush1.msra.mxu0 %v931
      %933 = vmatprep.subr.mxu0 0.0
      %934 = vmatpush1.msra.mxu0 0.0
      %935 = vmatprep.subr.mxu0 0.0
      %936 = vmatpush1.msra.mxu0 0.0
      %937 = vmatprep.subr.mxu0 0.0
      %938 = vmatpush1.msra.mxu0 0.0
      %939 = vmatprep.subr.mxu0 0.0
      %940 = vmatpush1.msra.mxu0 0.0
      %941 = vmatprep.subr.mxu0 0.0
      %942 = vmatpush1.msra.mxu0 0.0
      %943 = vmatprep.subr.mxu0 0.0
      %944 = vmatpush1.msra.mxu0 0.0
      %945 = vmatprep.subr.mxu0 0.0
      %946 = vmatpush1.msra.mxu0 0.0
      %947 = vmatprep.subr.mxu0 0.0
      %948 = vmatpush1.msra.mxu0 0.0
      %949 = vmatprep.subr.mxu0 0.0
      %950 = vmatpush1.msra.mxu0 0.0
      %951 = vmatprep.subr.mxu0 0.0
      %952 = vmatpush1.msra.mxu0 0.0
      %953 = vmatprep.subr.mxu0 0.0
      %954 = vmatpush1.msra.mxu0 0.0
      %955 = vmatprep.subr.mxu0 0.0
      %956 = vmatpush1.msra.mxu0 0.0
      %957 = vmatprep.subr.mxu0 0.0
      %958 = vmatpush1.msra.mxu0 0.0
      %959 = vmatprep.subr.mxu0 0.0
      %960 = vmatpush1.msra.mxu0 0.0
      %v961 = vand.u32 %v312, 4294901760
      %962 = vmatprep.mubr.f32.mxu0 %v961
      %v963 = vand.u32 %v264, 4294901760
      %964 = vmatmul.mubr.f32.gmra.mrb[0].mxu0 %v963
      %v965 = vpop.f32.mrb[0].mxu0
      %v966 = vadd.f32 %v479, %v965
      %v967 = vpop.f32.mrb[0].mxu0
      %v968 = vand.u32 %v315, 4294901760
      %969 = vmatprep.mubr.f32.mxu0 %v968
      %v970 = vand.u32 %v266, 4294901760
      %971 = vmatmul.mubr.f32.gmra.mrb[0].mxu0 %v970
      %v972 = vpop.f32.mrb[0].mxu0
      %v973 = vadd.f32 %v494, %v972
      %v974 = vpop.f32.mrb[0].mxu0
      %v975 = vand.u32 %v318, 4294901760
      %976 = vmatprep.mubr.f32.mxu0 %v975
      %v977 = vand.u32 %v268, 4294901760
      %978 = vmatmul.mubr.f32.gmra.mrb[0].mxu0 %v977
      %v979 = vpop.f32.mrb[0].mxu0
      %v980 = vadd.f32 %v509, %v979
      %v981 = vpop.f32.mrb[0].mxu0
      %v982 = vand.u32 %v321, 4294901760
      %983 = vmatprep.mubr.f32.mxu0 %v982
      %v984 = vand.u32 %v270, 4294901760
      %985 = vmatmul.mubr.f32.gmra.mrb[0].mxu0 %v984
      %v986 = vpop.f32.mrb[0].mxu0
      %v987 = vadd.f32 %v524, %v986
      %v988 = vpop.f32.mrb[0].mxu0
      %v989 = vand.u32 %v324, 4294901760
      %990 = vmatprep.mubr.f32.mxu0 %v989
      %v991 = vand.u32 %v272, 4294901760
      %992 = vmatmul.mubr.f32.gmra.mrb[0].mxu0 %v991
      %v993 = vpop.f32.mrb[0].mxu0
      %v994 = vadd.f32 %v539, %v993
      %v995 = vpop.f32.mrb[0].mxu0
      %v996 = vand.u32 %v327, 4294901760
      %997 = vmatprep.mubr.f32.mxu0 %v996
      %v998 = vand.u32 %v274, 4294901760
      %999 = vmatmul.mubr.f32.gmra.mrb[0].mxu0 %v998
      %v1000 = vpop.f32.mrb[0].mxu0
      %v1001 = vadd.f32 %v554, %v1000
      %v1002 = vpop.f32.mrb[0].mxu0
      %v1003 = vand.u32 %v330, 4294901760
      %1004 = vmatprep.mubr.f32.mxu0 %v1003
      %v1005 = vand.u32 %v276, 4294901760
      %1006 = vmatmul.mubr.f32.gmra.mrb[0].mxu0 %v1005
      %v1007 = vpop.f32.mrb[0].mxu0
      %v1008 = vadd.f32 %v569, %v1007
      %v1009 = vpop.f32.mrb[0].mxu0
      %v1010 = vand.u32 %v333, 4294901760
      %1011 = vmatprep.mubr.f32.mxu0 %v1010
      %v1012 = vand.u32 %v278, 4294901760
      %1013 = vmatmul.mubr.f32.gmra.mrb[0].mxu0 %v1012
      %v1014 = vpop.f32.mrb[0].mxu0
      %v1015 = vadd.f32 %v584, %v1014
      %v1016 = vpop.f32.mrb[0].mxu0
      %v1017 = vand.u32 %v336, 4294901760
      %1018 = vmatprep.mubr.f32.mxu0 %v1017
      %v1019 = vand.u32 %v280, 4294901760
      %1020 = vmatmul.mubr.f32.gmra.mrb[0].mxu0 %v1019
      %v1021 = vpop.f32.mrb[0].mxu0
      %v1022 = vadd.f32 %v599, %v1021
      %v1023 = vpop.f32.mrb[0].mxu0
      %v1024 = vand.u32 %v339, 4294901760
      %1025 = vmatprep.mubr.f32.mxu0 %v1024
      %v1026 = vand.u32 %v282, 4294901760
      %1027 = vmatmul.mubr.f32.gmra.mrb[0].mxu0 %v1026
      %v1028 = vpop.f32.mrb[0].mxu0
      %v1029 = vadd.f32 %v614, %v1028
      %v1030 = vpop.f32.mrb[0].mxu0
      %v1031 = vand.u32 %v342, 4294901760
      %1032 = vmatprep.mubr.f32.mxu0 %v1031
      %v1033 = vand.u32 %v284, 4294901760
      %1034 = vmatmul.mubr.f32.gmra.mrb[0].mxu0 %v1033
      %v1035 = vpop.f32.mrb[0].mxu0
      %v1036 = vadd.f32 %v629, %v1035
      %v1037 = vpop.f32.mrb[0].mxu0
      %v1038 = vand.u32 %v345, 4294901760
      %1039 = vmatprep.mubr.f32.mxu0 %v1038
      %v1040 = vand.u32 %v286, 4294901760
      %1041 = vmatmul.mubr.f32.gmra.mrb[0].mxu0 %v1040
      %v1042 = vpop.f32.mrb[0].mxu0
      %v1043 = vadd.f32 %v644, %v1042
      %v1044 = vpop.f32.mrb[0].mxu0
      %v1045 = vand.u32 %v348, 4294901760
      %1046 = vmatprep.mubr.f32.mxu0 %v1045
      %v1047 = vand.u32 %v288, 4294901760
      %1048 = vmatmul.mubr.f32.gmra.mrb[0].mxu0 %v1047
      %v1049 = vpop.f32.mrb[0].mxu0
      %v1050 = vadd.f32 %v659, %v1049
      %v1051 = vpop.f32.mrb[0].mxu0
      %v1052 = vand.u32 %v351, 4294901760
      %1053 = vmatprep.mubr.f32.mxu0 %v1052
      %v1054 = vand.u32 %v290, 4294901760
      %1055 = vmatmul.mubr.f32.gmra.mrb[0].mxu0 %v1054
      %v1056 = vpop.f32.mrb[0].mxu0
      %v1057 = vadd.f32 %v674, %v1056
      %v1058 = vpop.f32.mrb[0].mxu0
      %v1059 = vand.u32 %v354, 4294901760
      %1060 = vmatprep.mubr.f32.mxu0 %v1059
      %v1061 = vand.u32 %v292, 4294901760
      %1062 = vmatmul.mubr.f32.gmra.mrb[0].mxu0 %v1061
      %v1063 = vpop.f32.mrb[0].mxu0
      %v1064 = vadd.f32 %v689, %v1063
      %v1065 = vpop.f32.mrb[0].mxu0
      %v1066 = vand.u32 %v357, 4294901760
      %1067 = vmatprep.mubr.f32.mxu0 %v1066
      %v1068 = vand.u32 %v294, 4294901760
      %1069 = vmatmul.mubr.f32.gmra.mrb[0].mxu0 %v1068
      %v1070 = vpop.f32.mrb[0].mxu0
      %v1071 = vpop.f32.mrb[0].mxu0
      %v1072 = vand.u32 %v360, 4294901760
      %1073 = vmatprep.mubr.f32.mxu0 %v1072
      %v1074 = vand.u32 %v296, 4294901760
      %1075 = vmatmul.mubr.f32.gmra.mrb[0].mxu0 %v1074
      %v1076 = vpop.f32.mrb[0].mxu0
      %v1077 = vpop.f32.mrb[0].mxu0
      %v1078 = vand.u32 %v363, 4294901760
      %1079 = vmatprep.mubr.f32.mxu0 %v1078
      %v1080 = vand.u32 %v298, 4294901760
      %1081 = vmatmul.mubr.f32.gmra.mrb[0].mxu0 %v1080
      %v1082 = vpop.f32.mrb[0].mxu0
      %v1083 = vpop.f32.mrb[0].mxu0
      %v1084 = vand.u32 %v366, 4294901760
      %1085 = vmatprep.mubr.f32.mxu0 %v1084
      %v1086 = vand.u32 %v300, 4294901760
      %1087 = vmatmul.mubr.f32.gmra.mrb[0].mxu0 %v1086
      %v1088 = vpop.f32.mrb[0].mxu0
      %v1089 = vpop.f32.mrb[0].mxu0
      %v1090 = vand.u32 %v369, 4294901760
      %1091 = vmatprep.mubr.f32.mxu0 %v1090
      %v1092 = vand.u32 %v302, 4294901760
      %1093 = vmatmul.mubr.f32.gmra.mrb[0].mxu0 %v1092
      %v1094 = vpop.f32.mrb[0].mxu0
      %v1095 = vpop.f32.mrb[0].mxu0
      %v1096 = vand.u32 %v372, 4294901760
      %1097 = vmatprep.mubr.f32.mxu0 %v1096
      %v1098 = vand.u32 %v304, 4294901760
      %1099 = vmatmul.mubr.f32.gmra.mrb[0].mxu0 %v1098
      %v1100 = vpop.f32.mrb[0].mxu0
      %v1101 = vadd.f32 %v774, %v1100
      %v1102 = vpop.f32.mrb[0].mxu0
      %v1103 = vand.u32 %v375, 4294901760
      %1104 = vmatprep.mubr.f32.mxu0 %v1103
      %v1105 = vand.u32 %v306, 4294901760
      %1106 = vmatmul.mubr.f32.gmra.mrb[0].mxu0 %v1105
      %v1107 = vpop.f32.mrb[0].mxu0
      %v1108 = vadd.f32 %v789, %v1107
      %v1109 = vpop.f32.mrb[0].mxu0
      %v1110 = vand.u32 %v378, 4294901760
      %1111 = vmatprep.mubr.f32.mxu0 %v1110
      %v1112 = vand.u32 %v308, 4294901760
      %1113 = vmatmul.mubr.f32.gmra.mrb[0].mxu0 %v1112
      %v1114 = vpop.f32.mrb[0].mxu0
      %v1115 = vadd.f32 %v804, %v1114
      %v1116 = vpop.f32.mrb[0].mxu0
      %1117 = vdwg.mxu0
      %1118 = vmatprep.subr.mxu0 0.0
      %v1119 = vand.u32 %v228, 4294901760
      %v1120 = vsub.f32 %v228, %v1119
      %1121 = vmatpush1.msra.mxu0 %v1120
      %1122 = vmatprep.subr.mxu0 0.0
      %v1123 = vand.u32 %v229, 4294901760
      %v1124 = vsub.f32 %v229, %v1123
      %1125 = vmatpush1.msra.mxu0 %v1124
      %1126 = vmatprep.subr.mxu0 0.0
      %v1127 = vand.u32 %v230, 4294901760
      %v1128 = vsub.f32 %v230, %v1127
      %1129 = vmatpush1.msra.mxu0 %v1128
      %1130 = vmatprep.subr.mxu0 0.0
      %v1131 = vand.u32 %v231, 4294901760
      %v1132 = vsub.f32 %v231, %v1131
      %1133 = vmatpush1.msra.mxu0 %v1132
      %1134 = vmatprep.subr.mxu0 0.0
      %v1135 = vand.u32 %v232, 4294901760
      %v1136 = vsub.f32 %v232, %v1135
      %1137 = vmatpush1.msra.mxu0 %v1136
      %1138 = vmatprep.subr.mxu0 0.0
      %v1139 = vand.u32 %v233, 4294901760
      %v1140 = vsub.f32 %v233, %v1139
      %1141 = vmatpush1.msra.mxu0 %v1140
      %1142 = vmatprep.subr.mxu0 0.0
      %v1143 = vand.u32 %v234, 4294901760
      %v1144 = vsub.f32 %v234, %v1143
      %1145 = vmatpush1.msra.mxu0 %v1144
      %1146 = vmatprep.subr.mxu0 0.0
      %v1147 = vand.u32 %v235, 4294901760
      %v1148 = vsub.f32 %v235, %v1147
      %1149 = vmatpush1.msra.mxu0 %v1148
      %1150 = vmatprep.subr.mxu0 0.0
      %v1151 = vand.u32 %v236, 4294901760
      %v1152 = vsub.f32 %v236, %v1151
      %1153 = vmatpush1.msra.mxu0 %v1152
      %1154 = vmatprep.subr.mxu0 0.0
      %v1155 = vand.u32 %v237, 4294901760
      %v1156 = vsub.f32 %v237, %v1155
      %1157 = vmatpush1.msra.mxu0 %v1156
      %1158 = vmatprep.subr.mxu0 0.0
      %v1159 = vand.u32 %v238, 4294901760
      %v1160 = vsub.f32 %v238, %v1159
      %1161 = vmatpush1.msra.mxu0 %v1160
      %1162 = vmatprep.subr.mxu0 0.0
      %v1163 = vand.u32 %v239, 4294901760
      %v1164 = vsub.f32 %v239, %v1163
      %1165 = vmatpush1.msra.mxu0 %v1164
      %1166 = vmatprep.subr.mxu0 0.0
      %v1167 = vand.u32 %v240, 4294901760
      %v1168 = vsub.f32 %v240, %v1167
      %1169 = vmatpush1.msra.mxu0 %v1168
      %1170 = vmatprep.subr.mxu0 0.0
      %v1171 = vand.u32 %v241, 4294901760
      %v1172 = vsub.f32 %v241, %v1171
      %1173 = vmatpush1.msra.mxu0 %v1172
      %1174 = vmatprep.subr.mxu0 0.0
      %v1175 = vand.u32 %v242, 4294901760
      %v1176 = vsub.f32 %v242, %v1175
      %1177 = vmatpush1.msra.mxu0 %v1176
      %1178 = vmatprep.subr.mxu0 0.0
      %v1179 = vand.u32 %v243, 4294901760
      %v1180 = vsub.f32 %v243, %v1179
      %1181 = vmatpush1.msra.mxu0 %v1180
      %1182 = vmatprep.subr.mxu0 0.0
      %v1183 = vand.u32 %v244, 4294901760
      %v1184 = vsub.f32 %v244, %v1183
      %1185 = vmatpush1.msra.mxu0 %v1184
      %1186 = vmatprep.subr.mxu0 0.0
      %v1187 = vand.u32 %v382, 4294901760
      %v1188 = vsub.f32 %v382, %v1187
      %1189 = vmatpush1.msra.mxu0 %v1188
      %1190 = vmatprep.subr.mxu0 0.0
      %1191 = vmatpush1.msra.mxu0 0.0
      %1192 = vmatprep.subr.mxu0 0.0
      %1193 = vmatpush1.msra.mxu0 0.0
      %1194 = vmatprep.subr.mxu0 0.0
      %1195 = vmatpush1.msra.mxu0 0.0
      %1196 = vmatprep.subr.mxu0 0.0
      %1197 = vmatpush1.msra.mxu0 0.0
      %1198 = vmatprep.subr.mxu0 0.0
      %1199 = vmatpush1.msra.mxu0 0.0
      %1200 = vmatprep.subr.mxu0 0.0
      %1201 = vmatpush1.msra.mxu0 0.0
      %1202 = vmatprep.subr.mxu0 0.0
      %1203 = vmatpush1.msra.mxu0 0.0
      %1204 = vmatprep.subr.mxu0 0.0
      %1205 = vmatpush1.msra.mxu0 0.0
      %1206 = vmatprep.subr.mxu0 0.0
      %1207 = vmatpush1.msra.mxu0 0.0
      %1208 = vmatprep.subr.mxu0 0.0
      %1209 = vmatpush1.msra.mxu0 0.0
      %1210 = vmatprep.subr.mxu0 0.0
      %1211 = vmatpush1.msra.mxu0 0.0
      %1212 = vmatprep.subr.mxu0 0.0
      %1213 = vmatpush1.msra.mxu0 0.0
      %1214 = vmatprep.subr.mxu0 0.0
      %1215 = vmatpush1.msra.mxu0 0.0
      %1216 = vmatprep.subr.mxu0 0.0
      %1217 = vmatpush1.msra.mxu0 0.0
      %v1218 = vand.u32 %v312, 4294901760
      %v1219 = vsub.f32 %v312, %v1218
      %1220 = vmatprep.mubr.f32.mxu0 %v1219
      %v1221 = vand.u32 %v264, 4294901760
      %v1222 = vsub.f32 %v264, %v1221
      %1223 = vmatmul.mubr.f32.gmra.mrb[0].mxu0 %v1222
      %v1224 = vpop.f32.mrb[0].mxu0
      %v1225 = vadd.f32 %v966, %v1224
      %v1226 = vpop.f32.mrb[0].mxu0
      %v1227 = vand.u32 %v315, 4294901760
      %v1228 = vsub.f32 %v315, %v1227
      %1229 = vmatprep.mubr.f32.mxu0 %v1228
      %v1230 = vand.u32 %v266, 4294901760
      %v1231 = vsub.f32 %v266, %v1230
      %1232 = vmatmul.mubr.f32.gmra.mrb[0].mxu0 %v1231
      %v1233 = vpop.f32.mrb[0].mxu0
      %v1234 = vadd.f32 %v973, %v1233
      %v1235 = vpop.f32.mrb[0].mxu0
      %v1236 = vand.u32 %v318, 4294901760
      %v1237 = vsub.f32 %v318, %v1236
      %1238 = vmatprep.mubr.f32.mxu0 %v1237
      %v1239 = vand.u32 %v268, 4294901760
      %v1240 = vsub.f32 %v268, %v1239
      %1241 = vmatmul.mubr.f32.gmra.mrb[0].mxu0 %v1240
      %v1242 = vpop.f32.mrb[0].mxu0
      %v1243 = vadd.f32 %v980, %v1242
      %v1244 = vpop.f32.mrb[0].mxu0
      %v1245 = vand.u32 %v321, 4294901760
      %v1246 = vsub.f32 %v321, %v1245
      %1247 = vmatprep.mubr.f32.mxu0 %v1246
      %v1248 = vand.u32 %v270, 4294901760
      %v1249 = vsub.f32 %v270, %v1248
      %1250 = vmatmul.mubr.f32.gmra.mrb[0].mxu0 %v1249
      %v1251 = vpop.f32.mrb[0].mxu0
      %v1252 = vadd.f32 %v987, %v1251
      %v1253 = vpop.f32.mrb[0].mxu0
      %v1254 = vand.u32 %v324, 4294901760
      %v1255 = vsub.f32 %v324, %v1254
      %1256 = vmatprep.mubr.f32.mxu0 %v1255
      %v1257 = vand.u32 %v272, 4294901760
      %v1258 = vsub.f32 %v272, %v1257
      %1259 = vmatmul.mubr.f32.gmra.mrb[0].mxu0 %v1258
      %v1260 = vpop.f32.mrb[0].mxu0
      %v1261 = vadd.f32 %v994, %v1260
      %v1262 = vpop.f32.mrb[0].mxu0
      %v1263 = vand.u32 %v327, 4294901760
      %v1264 = vsub.f32 %v327, %v1263
      %1265 = vmatprep.mubr.f32.mxu0 %v1264
      %v1266 = vand.u32 %v274, 4294901760
      %v1267 = vsub.f32 %v274, %v1266
      %1268 = vmatmul.mubr.f32.gmra.mrb[0].mxu0 %v1267
      %v1269 = vpop.f32.mrb[0].mxu0
      %v1270 = vadd.f32 %v1001, %v1269
      %v1271 = vpop.f32.mrb[0].mxu0
      %v1272 = vand.u32 %v330, 4294901760
      %v1273 = vsub.f32 %v330, %v1272
      %1274 = vmatprep.mubr.f32.mxu0 %v1273
      %v1275 = vand.u32 %v276, 4294901760
      %v1276 = vsub.f32 %v276, %v1275
      %1277 = vmatmul.mubr.f32.gmra.mrb[0].mxu0 %v1276
      %v1278 = vpop.f32.mrb[0].mxu0
      %v1279 = vadd.f32 %v1008, %v1278
      %v1280 = vpop.f32.mrb[0].mxu0
      %v1281 = vand.u32 %v333, 4294901760
      %v1282 = vsub.f32 %v333, %v1281
      %1283 = vmatprep.mubr.f32.mxu0 %v1282
      %v1284 = vand.u32 %v278, 4294901760
      %v1285 = vsub.f32 %v278, %v1284
      %1286 = vmatmul.mubr.f32.gmra.mrb[0].mxu0 %v1285
      %v1287 = vpop.f32.mrb[0].mxu0
      %v1288 = vadd.f32 %v1015, %v1287
      %v1289 = vpop.f32.mrb[0].mxu0
      %v1290 = vand.u32 %v336, 4294901760
      %v1291 = vsub.f32 %v336, %v1290
      %1292 = vmatprep.mubr.f32.mxu0 %v1291
      %v1293 = vand.u32 %v280, 4294901760
      %v1294 = vsub.f32 %v280, %v1293
      %1295 = vmatmul.mubr.f32.gmra.mrb[0].mxu0 %v1294
      %v1296 = vpop.f32.mrb[0].mxu0
      %v1297 = vadd.f32 %v1022, %v1296
      %v1298 = vpop.f32.mrb[0].mxu0
      %v1299 = vand.u32 %v339, 4294901760
      %v1300 = vsub.f32 %v339, %v1299
      %1301 = vmatprep.mubr.f32.mxu0 %v1300
      %v1302 = vand.u32 %v282, 4294901760
      %v1303 = vsub.f32 %v282, %v1302
      %1304 = vmatmul.mubr.f32.gmra.mrb[0].mxu0 %v1303
      %v1305 = vpop.f32.mrb[0].mxu0
      %v1306 = vadd.f32 %v1029, %v1305
      %v1307 = vpop.f32.mrb[0].mxu0
      %v1308 = vand.u32 %v342, 4294901760
      %v1309 = vsub.f32 %v342, %v1308
      %1310 = vmatprep.mubr.f32.mxu0 %v1309
      %v1311 = vand.u32 %v284, 4294901760
      %v1312 = vsub.f32 %v284, %v1311
      %1313 = vmatmul.mubr.f32.gmra.mrb[0].mxu0 %v1312
      %v1314 = vpop.f32.mrb[0].mxu0
      %v1315 = vadd.f32 %v1036, %v1314
      %v1316 = vpop.f32.mrb[0].mxu0
      %v1317 = vand.u32 %v345, 4294901760
      %v1318 = vsub.f32 %v345, %v1317
      %1319 = vmatprep.mubr.f32.mxu0 %v1318
      %v1320 = vand.u32 %v286, 4294901760
      %v1321 = vsub.f32 %v286, %v1320
      %1322 = vmatmul.mubr.f32.gmra.mrb[0].mxu0 %v1321
      %v1323 = vpop.f32.mrb[0].mxu0
      %v1324 = vadd.f32 %v1043, %v1323
      %v1325 = vpop.f32.mrb[0].mxu0
      %v1326 = vand.u32 %v348, 4294901760
      %v1327 = vsub.f32 %v348, %v1326
      %1328 = vmatprep.mubr.f32.mxu0 %v1327
      %v1329 = vand.u32 %v288, 4294901760
      %v1330 = vsub.f32 %v288, %v1329
      %1331 = vmatmul.mubr.f32.gmra.mrb[0].mxu0 %v1330
      %v1332 = vpop.f32.mrb[0].mxu0
      %v1333 = vadd.f32 %v1050, %v1332
      %v1334 = vpop.f32.mrb[0].mxu0
      %v1335 = vand.u32 %v351, 4294901760
      %v1336 = vsub.f32 %v351, %v1335
      %1337 = vmatprep.mubr.f32.mxu0 %v1336
      %v1338 = vand.u32 %v290, 4294901760
      %v1339 = vsub.f32 %v290, %v1338
      %1340 = vmatmul.mubr.f32.gmra.mrb[0].mxu0 %v1339
      %v1341 = vpop.f32.mrb[0].mxu0
      %v1342 = vadd.f32 %v1057, %v1341
      %v1343 = vpop.f32.mrb[0].mxu0
      %v1344 = vand.u32 %v354, 4294901760
      %v1345 = vsub.f32 %v354, %v1344
      %1346 = vmatprep.mubr.f32.mxu0 %v1345
      %v1347 = vand.u32 %v292, 4294901760
      %v1348 = vsub.f32 %v292, %v1347
      %1349 = vmatmul.mubr.f32.gmra.mrb[0].mxu0 %v1348
      %v1350 = vpop.f32.mrb[0].mxu0
      %v1351 = vadd.f32 %v1064, %v1350
      %v1352 = vpop.f32.mrb[0].mxu0
      %v1353 = vand.u32 %v357, 4294901760
      %v1354 = vsub.f32 %v357, %v1353
      %1355 = vmatprep.mubr.f32.mxu0 %v1354
      %v1356 = vand.u32 %v294, 4294901760
      %v1357 = vsub.f32 %v294, %v1356
      %1358 = vmatmul.mubr.f32.gmra.mrb[0].mxu0 %v1357
      %v1359 = vpop.f32.mrb[0].mxu0
      %v1360 = vpop.f32.mrb[0].mxu0
      %v1361 = vand.u32 %v360, 4294901760
      %v1362 = vsub.f32 %v360, %v1361
      %1363 = vmatprep.mubr.f32.mxu0 %v1362
      %v1364 = vand.u32 %v296, 4294901760
      %v1365 = vsub.f32 %v296, %v1364
      %1366 = vmatmul.mubr.f32.gmra.mrb[0].mxu0 %v1365
      %v1367 = vpop.f32.mrb[0].mxu0
      %v1368 = vpop.f32.mrb[0].mxu0
      %v1369 = vand.u32 %v363, 4294901760
      %v1370 = vsub.f32 %v363, %v1369
      %1371 = vmatprep.mubr.f32.mxu0 %v1370
      %v1372 = vand.u32 %v298, 4294901760
      %v1373 = vsub.f32 %v298, %v1372
      %1374 = vmatmul.mubr.f32.gmra.mrb[0].mxu0 %v1373
      %v1375 = vpop.f32.mrb[0].mxu0
      %v1376 = vpop.f32.mrb[0].mxu0
      %v1377 = vand.u32 %v366, 4294901760
      %v1378 = vsub.f32 %v366, %v1377
      %1379 = vmatprep.mubr.f32.mxu0 %v1378
      %v1380 = vand.u32 %v300, 4294901760
      %v1381 = vsub.f32 %v300, %v1380
      %1382 = vmatmul.mubr.f32.gmra.mrb[0].mxu0 %v1381
      %v1383 = vpop.f32.mrb[0].mxu0
      %v1384 = vpop.f32.mrb[0].mxu0
      %v1385 = vand.u32 %v369, 4294901760
      %v1386 = vsub.f32 %v369, %v1385
      %1387 = vmatprep.mubr.f32.mxu0 %v1386
      %v1388 = vand.u32 %v302, 4294901760
      %v1389 = vsub.f32 %v302, %v1388
      %1390 = vmatmul.mubr.f32.gmra.mrb[0].mxu0 %v1389
      %v1391 = vpop.f32.mrb[0].mxu0
      %v1392 = vpop.f32.mrb[0].mxu0
      %v1393 = vand.u32 %v372, 4294901760
      %v1394 = vsub.f32 %v372, %v1393
      %1395 = vmatprep.mubr.f32.mxu0 %v1394
      %v1396 = vand.u32 %v304, 4294901760
      %v1397 = vsub.f32 %v304, %v1396
      %1398 = vmatmul.mubr.f32.gmra.mrb[0].mxu0 %v1397
      %v1399 = vpop.f32.mrb[0].mxu0
      %v1400 = vadd.f32 %v1101, %v1399
      %v1401 = vpop.f32.mrb[0].mxu0
      %v1402 = vand.u32 %v375, 4294901760
      %v1403 = vsub.f32 %v375, %v1402
      %1404 = vmatprep.mubr.f32.mxu0 %v1403
      %v1405 = vand.u32 %v306, 4294901760
      %v1406 = vsub.f32 %v306, %v1405
      %1407 = vmatmul.mubr.f32.gmra.mrb[0].mxu0 %v1406
      %v1408 = vpop.f32.mrb[0].mxu0
      %v1409 = vadd.f32 %v1108, %v1408
      %v1410 = vpop.f32.mrb[0].mxu0
      %v1411 = vand.u32 %v378, 4294901760
      %v1412 = vsub.f32 %v378, %v1411
      %1413 = vmatprep.mubr.f32.mxu0 %v1412
      %v1414 = vand.u32 %v308, 4294901760
      %v1415 = vsub.f32 %v308, %v1414
      %1416 = vmatmul.mubr.f32.gmra.mrb[0].mxu0 %v1415
      %v1417 = vpop.f32.mrb[0].mxu0
      %v1418 = vadd.f32 %v1115, %v1417
      %v1419 = vpop.f32.mrb[0].mxu0
      %1420 = vdwg.mxu0
      %1421 = vmatprep.subr.mxu0 0.0
      %v1422 = vand.u32 %v228, 4294901760
      %1423 = vmatpush1.msra.mxu0 %v1422
      %1424 = vmatprep.subr.mxu0 0.0
      %v1425 = vand.u32 %v229, 4294901760
      %1426 = vmatpush1.msra.mxu0 %v1425
      %1427 = vmatprep.subr.mxu0 0.0
      %v1428 = vand.u32 %v230, 4294901760
      %1429 = vmatpush1.msra.mxu0 %v1428
      %1430 = vmatprep.subr.mxu0 0.0
      %v1431 = vand.u32 %v231, 4294901760
      %1432 = vmatpush1.msra.mxu0 %v1431
      %1433 = vmatprep.subr.mxu0 0.0
      %v1434 = vand.u32 %v232, 4294901760
      %1435 = vmatpush1.msra.mxu0 %v1434
      %1436 = vmatprep.subr.mxu0 0.0
      %v1437 = vand.u32 %v233, 4294901760
      %1438 = vmatpush1.msra.mxu0 %v1437
      %1439 = vmatprep.subr.mxu0 0.0
      %v1440 = vand.u32 %v234, 4294901760
      %1441 = vmatpush1.msra.mxu0 %v1440
      %1442 = vmatprep.subr.mxu0 0.0
      %v1443 = vand.u32 %v235, 4294901760
      %1444 = vmatpush1.msra.mxu0 %v1443
      %1445 = vmatprep.subr.mxu0 0.0
      %v1446 = vand.u32 %v236, 4294901760
      %1447 = vmatpush1.msra.mxu0 %v1446
      %1448 = vmatprep.subr.mxu0 0.0
      %v1449 = vand.u32 %v237, 4294901760
      %1450 = vmatpush1.msra.mxu0 %v1449
      %1451 = vmatprep.subr.mxu0 0.0
      %v1452 = vand.u32 %v238, 4294901760
      %1453 = vmatpush1.msra.mxu0 %v1452
      %1454 = vmatprep.subr.mxu0 0.0
      %v1455 = vand.u32 %v239, 4294901760
      %1456 = vmatpush1.msra.mxu0 %v1455
      %1457 = vmatprep.subr.mxu0 0.0
      %v1458 = vand.u32 %v240, 4294901760
      %1459 = vmatpush1.msra.mxu0 %v1458
      %1460 = vmatprep.subr.mxu0 0.0
      %v1461 = vand.u32 %v241, 4294901760
      %1462 = vmatpush1.msra.mxu0 %v1461
      %1463 = vmatprep.subr.mxu0 0.0
      %v1464 = vand.u32 %v242, 4294901760
      %1465 = vmatpush1.msra.mxu0 %v1464
      %1466 = vmatprep.subr.mxu0 0.0
      %v1467 = vand.u32 %v243, 4294901760
      %1468 = vmatpush1.msra.mxu0 %v1467
      %1469 = vmatprep.subr.mxu0 0.0
      %v1470 = vand.u32 %v244, 4294901760
      %1471 = vmatpush1.msra.mxu0 %v1470
      %1472 = vmatprep.subr.mxu0 0.0
      %v1473 = vand.u32 %v382, 4294901760
      %1474 = vmatpush1.msra.mxu0 %v1473
      %1475 = vmatprep.subr.mxu0 0.0
      %1476 = vmatpush1.msra.mxu0 0.0
      %1477 = vmatprep.subr.mxu0 0.0
      %1478 = vmatpush1.msra.mxu0 0.0
      %1479 = vmatprep.subr.mxu0 0.0
      %1480 = vmatpush1.msra.mxu0 0.0
      %1481 = vmatprep.subr.mxu0 0.0
      %1482 = vmatpush1.msra.mxu0 0.0
      %1483 = vmatprep.subr.mxu0 0.0
      %1484 = vmatpush1.msra.mxu0 0.0
      %1485 = vmatprep.subr.mxu0 0.0
      %1486 = vmatpush1.msra.mxu0 0.0
      %1487 = vmatprep.subr.mxu0 0.0
      %1488 = vmatpush1.msra.mxu0 0.0
      %1489 = vmatprep.subr.mxu0 0.0
      %1490 = vmatpush1.msra.mxu0 0.0
      %1491 = vmatprep.subr.mxu0 0.0
      %1492 = vmatpush1.msra.mxu0 0.0
      %1493 = vmatprep.subr.mxu0 0.0
      %1494 = vmatpush1.msra.mxu0 0.0
      %1495 = vmatprep.subr.mxu0 0.0
      %1496 = vmatpush1.msra.mxu0 0.0
      %1497 = vmatprep.subr.mxu0 0.0
      %1498 = vmatpush1.msra.mxu0 0.0
      %1499 = vmatprep.subr.mxu0 0.0
      %1500 = vmatpush1.msra.mxu0 0.0
      %1501 = vmatprep.subr.mxu0 0.0
      %1502 = vmatpush1.msra.mxu0 0.0
      %v1503 = vand.u32 %v312, 4294901760
      %v1504 = vsub.f32 %v312, %v1503
      %v1505 = vand.u32 %v1504, 4294901760
      %1506 = vmatprep.mubr.f32.mxu0 %v1505
      %v1507 = vand.u32 %v264, 4294901760
      %v1508 = vsub.f32 %v264, %v1507
      %v1509 = vand.u32 %v1508, 4294901760
      %1510 = vmatmul.mubr.f32.gmra.mrb[0].mxu0 %v1509
      %v1511 = vpop.f32.mrb[0].mxu0
      %v1512 = vadd.f32 %v1225, %v1511
      %v1513 = vpop.f32.mrb[0].mxu0
      %v1514 = vand.u32 %v315, 4294901760
      %v1515 = vsub.f32 %v315, %v1514
      %v1516 = vand.u32 %v1515, 4294901760
      %1517 = vmatprep.mubr.f32.mxu0 %v1516
      %v1518 = vand.u32 %v266, 4294901760
      %v1519 = vsub.f32 %v266, %v1518
      %v1520 = vand.u32 %v1519, 4294901760
      %1521 = vmatmul.mubr.f32.gmra.mrb[0].mxu0 %v1520
      %v1522 = vpop.f32.mrb[0].mxu0
      %v1523 = vadd.f32 %v1234, %v1522
      %v1524 = vpop.f32.mrb[0].mxu0
      %v1525 = vand.u32 %v318, 4294901760
      %v1526 = vsub.f32 %v318, %v1525
      %v1527 = vand.u32 %v1526, 4294901760
      %1528 = vmatprep.mubr.f32.mxu0 %v1527
      %v1529 = vand.u32 %v268, 4294901760
      %v1530 = vsub.f32 %v268, %v1529
      %v1531 = vand.u32 %v1530, 4294901760
      %1532 = vmatmul.mubr.f32.gmra.mrb[0].mxu0 %v1531
      %v1533 = vpop.f32.mrb[0].mxu0
      %v1534 = vadd.f32 %v1243, %v1533
      %v1535 = vpop.f32.mrb[0].mxu0
      %v1536 = vand.u32 %v321, 4294901760
      %v1537 = vsub.f32 %v321, %v1536
      %v1538 = vand.u32 %v1537, 4294901760
      %1539 = vmatprep.mubr.f32.mxu0 %v1538
      %v1540 = vand.u32 %v270, 4294901760
      %v1541 = vsub.f32 %v270, %v1540
      %v1542 = vand.u32 %v1541, 4294901760
      %1543 = vmatmul.mubr.f32.gmra.mrb[0].mxu0 %v1542
      %v1544 = vpop.f32.mrb[0].mxu0
      %v1545 = vadd.f32 %v1252, %v1544
      %v1546 = vpop.f32.mrb[0].mxu0
      %v1547 = vand.u32 %v324, 4294901760
      %v1548 = vsub.f32 %v324, %v1547
      %v1549 = vand.u32 %v1548, 4294901760
      %1550 = vmatprep.mubr.f32.mxu0 %v1549
      %v1551 = vand.u32 %v272, 4294901760
      %v1552 = vsub.f32 %v272, %v1551
      %v1553 = vand.u32 %v1552, 4294901760
      %1554 = vmatmul.mubr.f32.gmra.mrb[0].mxu0 %v1553
      %v1555 = vpop.f32.mrb[0].mxu0
      %v1556 = vadd.f32 %v1261, %v1555
      %v1557 = vpop.f32.mrb[0].mxu0
      %v1558 = vand.u32 %v327, 4294901760
      %v1559 = vsub.f32 %v327, %v1558
      %v1560 = vand.u32 %v1559, 4294901760
      %1561 = vmatprep.mubr.f32.mxu0 %v1560
      %v1562 = vand.u32 %v274, 4294901760
      %v1563 = vsub.f32 %v274, %v1562
      %v1564 = vand.u32 %v1563, 4294901760
      %1565 = vmatmul.mubr.f32.gmra.mrb[0].mxu0 %v1564
      %v1566 = vpop.f32.mrb[0].mxu0
      %v1567 = vadd.f32 %v1270, %v1566
      %v1568 = vpop.f32.mrb[0].mxu0
      %v1569 = vand.u32 %v330, 4294901760
      %v1570 = vsub.f32 %v330, %v1569
      %v1571 = vand.u32 %v1570, 4294901760
      %1572 = vmatprep.mubr.f32.mxu0 %v1571
      %v1573 = vand.u32 %v276, 4294901760
      %v1574 = vsub.f32 %v276, %v1573
      %v1575 = vand.u32 %v1574, 4294901760
      %1576 = vmatmul.mubr.f32.gmra.mrb[0].mxu0 %v1575
      %v1577 = vpop.f32.mrb[0].mxu0
      %v1578 = vadd.f32 %v1279, %v1577
      %v1579 = vpop.f32.mrb[0].mxu0
      %v1580 = vand.u32 %v333, 4294901760
      %v1581 = vsub.f32 %v333, %v1580
      %v1582 = vand.u32 %v1581, 4294901760
      %1583 = vmatprep.mubr.f32.mxu0 %v1582
      %v1584 = vand.u32 %v278, 4294901760
      %v1585 = vsub.f32 %v278, %v1584
      %v1586 = vand.u32 %v1585, 4294901760
      %1587 = vmatmul.mubr.f32.gmra.mrb[0].mxu0 %v1586
      %v1588 = vpop.f32.mrb[0].mxu0
      %v1589 = vadd.f32 %v1288, %v1588
      %v1590 = vpop.f32.mrb[0].mxu0
      %v1591 = vand.u32 %v336, 4294901760
      %v1592 = vsub.f32 %v336, %v1591
      %v1593 = vand.u32 %v1592, 4294901760
      %1594 = vmatprep.mubr.f32.mxu0 %v1593
      %v1595 = vand.u32 %v280, 4294901760
      %v1596 = vsub.f32 %v280, %v1595
      %v1597 = vand.u32 %v1596, 4294901760
      %1598 = vmatmul.mubr.f32.gmra.mrb[0].mxu0 %v1597
      %v1599 = vpop.f32.mrb[0].mxu0
      %v1600 = vadd.f32 %v1297, %v1599
      %v1601 = vpop.f32.mrb[0].mxu0
      %v1602 = vand.u32 %v339, 4294901760
      %v1603 = vsub.f32 %v339, %v1602
      %v1604 = vand.u32 %v1603, 4294901760
      %1605 = vmatprep.mubr.f32.mxu0 %v1604
      %v1606 = vand.u32 %v282, 4294901760
      %v1607 = vsub.f32 %v282, %v1606
      %v1608 = vand.u32 %v1607, 4294901760
      %1609 = vmatmul.mubr.f32.gmra.mrb[0].mxu0 %v1608
      %v1610 = vpop.f32.mrb[0].mxu0
      %v1611 = vadd.f32 %v1306, %v1610
      %v1612 = vpop.f32.mrb[0].mxu0
      %v1613 = vand.u32 %v342, 4294901760
      %v1614 = vsub.f32 %v342, %v1613
      %v1615 = vand.u32 %v1614, 4294901760
      %1616 = vmatprep.mubr.f32.mxu0 %v1615
      %v1617 = vand.u32 %v284, 4294901760
      %v1618 = vsub.f32 %v284, %v1617
      %v1619 = vand.u32 %v1618, 4294901760
      %1620 = vmatmul.mubr.f32.gmra.mrb[0].mxu0 %v1619
      %v1621 = vpop.f32.mrb[0].mxu0
      %v1622 = vadd.f32 %v1315, %v1621
      %v1623 = vpop.f32.mrb[0].mxu0
      %v1624 = vand.u32 %v345, 4294901760
      %v1625 = vsub.f32 %v345, %v1624
      %v1626 = vand.u32 %v1625, 4294901760
      %1627 = vmatprep.mubr.f32.mxu0 %v1626
      %v1628 = vand.u32 %v286, 4294901760
      %v1629 = vsub.f32 %v286, %v1628
      %v1630 = vand.u32 %v1629, 4294901760
      %1631 = vmatmul.mubr.f32.gmra.mrb[0].mxu0 %v1630
      %v1632 = vpop.f32.mrb[0].mxu0
      %v1633 = vadd.f32 %v1324, %v1632
      %v1634 = vpop.f32.mrb[0].mxu0
      %v1635 = vand.u32 %v348, 4294901760
      %v1636 = vsub.f32 %v348, %v1635
      %v1637 = vand.u32 %v1636, 4294901760
      %1638 = vmatprep.mubr.f32.mxu0 %v1637
      %v1639 = vand.u32 %v288, 4294901760
      %v1640 = vsub.f32 %v288, %v1639
      %v1641 = vand.u32 %v1640, 4294901760
      %1642 = vmatmul.mubr.f32.gmra.mrb[0].mxu0 %v1641
      %v1643 = vpop.f32.mrb[0].mxu0
      %v1644 = vadd.f32 %v1333, %v1643
      %v1645 = vpop.f32.mrb[0].mxu0
      %v1646 = vand.u32 %v351, 4294901760
      %v1647 = vsub.f32 %v351, %v1646
      %v1648 = vand.u32 %v1647, 4294901760
      %1649 = vmatprep.mubr.f32.mxu0 %v1648
      %v1650 = vand.u32 %v290, 4294901760
      %v1651 = vsub.f32 %v290, %v1650
      %v1652 = vand.u32 %v1651, 4294901760
      %1653 = vmatmul.mubr.f32.gmra.mrb[0].mxu0 %v1652
      %v1654 = vpop.f32.mrb[0].mxu0
      %v1655 = vadd.f32 %v1342, %v1654
      %v1656 = vpop.f32.mrb[0].mxu0
      %v1657 = vand.u32 %v354, 4294901760
      %v1658 = vsub.f32 %v354, %v1657
      %v1659 = vand.u32 %v1658, 4294901760
      %1660 = vmatprep.mubr.f32.mxu0 %v1659
      %v1661 = vand.u32 %v292, 4294901760
      %v1662 = vsub.f32 %v292, %v1661
      %v1663 = vand.u32 %v1662, 4294901760
      %1664 = vmatmul.mubr.f32.gmra.mrb[0].mxu0 %v1663
      %v1665 = vpop.f32.mrb[0].mxu0
      %v1666 = vadd.f32 %v1351, %v1665
      %v1667 = vpop.f32.mrb[0].mxu0
      %v1668 = vand.u32 %v357, 4294901760
      %v1669 = vsub.f32 %v357, %v1668
      %v1670 = vand.u32 %v1669, 4294901760
      %1671 = vmatprep.mubr.f32.mxu0 %v1670
      %v1672 = vand.u32 %v294, 4294901760
      %v1673 = vsub.f32 %v294, %v1672
      %v1674 = vand.u32 %v1673, 4294901760
      %1675 = vmatmul.mubr.f32.gmra.mrb[0].mxu0 %v1674
      %v1676 = vpop.f32.mrb[0].mxu0
      %v1677 = vpop.f32.mrb[0].mxu0
      %v1678 = vand.u32 %v360, 4294901760
      %v1679 = vsub.f32 %v360, %v1678
      %v1680 = vand.u32 %v1679, 4294901760
      %1681 = vmatprep.mubr.f32.mxu0 %v1680
      %v1682 = vand.u32 %v296, 4294901760
      %v1683 = vsub.f32 %v296, %v1682
      %v1684 = vand.u32 %v1683, 4294901760
      %1685 = vmatmul.mubr.f32.gmra.mrb[0].mxu0 %v1684
      %v1686 = vpop.f32.mrb[0].mxu0
      %v1687 = vpop.f32.mrb[0].mxu0
      %v1688 = vand.u32 %v363, 4294901760
      %v1689 = vsub.f32 %v363, %v1688
      %v1690 = vand.u32 %v1689, 4294901760
      %1691 = vmatprep.mubr.f32.mxu0 %v1690
      %v1692 = vand.u32 %v298, 4294901760
      %v1693 = vsub.f32 %v298, %v1692
      %v1694 = vand.u32 %v1693, 4294901760
      %1695 = vmatmul.mubr.f32.gmra.mrb[0].mxu0 %v1694
      %v1696 = vpop.f32.mrb[0].mxu0
      %v1697 = vpop.f32.mrb[0].mxu0
      %v1698 = vand.u32 %v366, 4294901760
      %v1699 = vsub.f32 %v366, %v1698
      %v1700 = vand.u32 %v1699, 4294901760
      %1701 = vmatprep.mubr.f32.mxu0 %v1700
      %v1702 = vand.u32 %v300, 4294901760
      %v1703 = vsub.f32 %v300, %v1702
      %v1704 = vand.u32 %v1703, 4294901760
      %1705 = vmatmul.mubr.f32.gmra.mrb[0].mxu0 %v1704
      %v1706 = vpop.f32.mrb[0].mxu0
      %v1707 = vpop.f32.mrb[0].mxu0
      %v1708 = vand.u32 %v369, 4294901760
      %v1709 = vsub.f32 %v369, %v1708
      %v1710 = vand.u32 %v1709, 4294901760
      %1711 = vmatprep.mubr.f32.mxu0 %v1710
      %v1712 = vand.u32 %v302, 4294901760
      %v1713 = vsub.f32 %v302, %v1712
      %v1714 = vand.u32 %v1713, 4294901760
      %1715 = vmatmul.mubr.f32.gmra.mrb[0].mxu0 %v1714
      %v1716 = vpop.f32.mrb[0].mxu0
      %v1717 = vpop.f32.mrb[0].mxu0
      %v1718 = vand.u32 %v372, 4294901760
      %v1719 = vsub.f32 %v372, %v1718
      %v1720 = vand.u32 %v1719, 4294901760
      %1721 = vmatprep.mubr.f32.mxu0 %v1720
      %v1722 = vand.u32 %v304, 4294901760
      %v1723 = vsub.f32 %v304, %v1722
      %v1724 = vand.u32 %v1723, 4294901760
      %1725 = vmatmul.mubr.f32.gmra.mrb[0].mxu0 %v1724
      %v1726 = vpop.f32.mrb[0].mxu0
      %v1727 = vadd.f32 %v1400, %v1726
      %v1728 = vpop.f32.mrb[0].mxu0
      %v1729 = vand.u32 %v375, 4294901760
      %v1730 = vsub.f32 %v375, %v1729
      %v1731 = vand.u32 %v1730, 4294901760
      %1732 = vmatprep.mubr.f32.mxu0 %v1731
      %v1733 = vand.u32 %v306, 4294901760
      %v1734 = vsub.f32 %v306, %v1733
      %v1735 = vand.u32 %v1734, 4294901760
      %1736 = vmatmul.mubr.f32.gmra.mrb[0].mxu0 %v1735
      %v1737 = vpop.f32.mrb[0].mxu0
      %v1738 = vadd.f32 %v1409, %v1737
      %v1739 = vpop.f32.mrb[0].mxu0
      %v1740 = vand.u32 %v378, 4294901760
      %v1741 = vsub.f32 %v378, %v1740
      %v1742 = vand.u32 %v1741, 4294901760
      %1743 = vmatprep.mubr.f32.mxu0 %v1742
      %v1744 = vand.u32 %v308, 4294901760
      %v1745 = vsub.f32 %v308, %v1744
      %v1746 = vand.u32 %v1745, 4294901760
      %1747 = vmatmul.mubr.f32.gmra.mrb[0].mxu0 %v1746
      %v1748 = vpop.f32.mrb[0].mxu0
      %v1749 = vadd.f32 %v1418, %v1748
      %v1750 = vpop.f32.mrb[0].mxu0
      %1751 = vdwg.mxu0
      %1752 = vmatprep.subr.mxu0 0.0
      %v1753 = vand.u32 %v228, 4294901760
      %v1754 = vsub.f32 %v228, %v1753
      %v1755 = vand.u32 %v1754, 4294901760
      %1756 = vmatpush1.msra.mxu0 %v1755
      %1757 = vmatprep.subr.mxu0 0.0
      %v1758 = vand.u32 %v229, 4294901760
      %v1759 = vsub.f32 %v229, %v1758
      %v1760 = vand.u32 %v1759, 4294901760
      %1761 = vmatpush1.msra.mxu0 %v1760
      %1762 = vmatprep.subr.mxu0 0.0
      %v1763 = vand.u32 %v230, 4294901760
      %v1764 = vsub.f32 %v230, %v1763
      %v1765 = vand.u32 %v1764, 4294901760
      %1766 = vmatpush1.msra.mxu0 %v1765
      %1767 = vmatprep.subr.mxu0 0.0
      %v1768 = vand.u32 %v231, 4294901760
      %v1769 = vsub.f32 %v231, %v1768
      %v1770 = vand.u32 %v1769, 4294901760
      %1771 = vmatpush1.msra.mxu0 %v1770
      %1772 = vmatprep.subr.mxu0 0.0
      %v1773 = vand.u32 %v232, 4294901760
      %v1774 = vsub.f32 %v232, %v1773
      %v1775 = vand.u32 %v1774, 4294901760
      %1776 = vmatpush1.msra.mxu0 %v1775
      %1777 = vmatprep.subr.mxu0 0.0
      %v1778 = vand.u32 %v233, 4294901760
      %v1779 = vsub.f32 %v233, %v1778
      %v1780 = vand.u32 %v1779, 4294901760
      %1781 = vmatpush1.msra.mxu0 %v1780
      %1782 = vmatprep.subr.mxu0 0.0
      %v1783 = vand.u32 %v234, 4294901760
      %v1784 = vsub.f32 %v234, %v1783
      %v1785 = vand.u32 %v1784, 4294901760
      %1786 = vmatpush1.msra.mxu0 %v1785
      %1787 = vmatprep.subr.mxu0 0.0
      %v1788 = vand.u32 %v235, 4294901760
      %v1789 = vsub.f32 %v235, %v1788
      %v1790 = vand.u32 %v1789, 4294901760
      %1791 = vmatpush1.msra.mxu0 %v1790
      %1792 = vmatprep.subr.mxu0 0.0
      %v1793 = vand.u32 %v236, 4294901760
      %v1794 = vsub.f32 %v236, %v1793
      %v1795 = vand.u32 %v1794, 4294901760
      %1796 = vmatpush1.msra.mxu0 %v1795
      %1797 = vmatprep.subr.mxu0 0.0
      %v1798 = vand.u32 %v237, 4294901760
      %v1799 = vsub.f32 %v237, %v1798
      %v1800 = vand.u32 %v1799, 4294901760
      %1801 = vmatpush1.msra.mxu0 %v1800
      %1802 = vmatprep.subr.mxu0 0.0
      %v1803 = vand.u32 %v238, 4294901760
      %v1804 = vsub.f32 %v238, %v1803
      %v1805 = vand.u32 %v1804, 4294901760
      %1806 = vmatpush1.msra.mxu0 %v1805
      %1807 = vmatprep.subr.mxu0 0.0
      %v1808 = vand.u32 %v239, 4294901760
      %v1809 = vsub.f32 %v239, %v1808
      %v1810 = vand.u32 %v1809, 4294901760
      %1811 = vmatpush1.msra.mxu0 %v1810
      %1812 = vmatprep.subr.mxu0 0.0
      %v1813 = vand.u32 %v240, 4294901760
      %v1814 = vsub.f32 %v240, %v1813
      %v1815 = vand.u32 %v1814, 4294901760
      %1816 = vmatpush1.msra.mxu0 %v1815
      %1817 = vmatprep.subr.mxu0 0.0
      %v1818 = vand.u32 %v241, 4294901760
      %v1819 = vsub.f32 %v241, %v1818
      %v1820 = vand.u32 %v1819, 4294901760
      %1821 = vmatpush1.msra.mxu0 %v1820
      %1822 = vmatprep.subr.mxu0 0.0
      %v1823 = vand.u32 %v242, 4294901760
      %v1824 = vsub.f32 %v242, %v1823
      %v1825 = vand.u32 %v1824, 4294901760
      %1826 = vmatpush1.msra.mxu0 %v1825
      %1827 = vmatprep.subr.mxu0 0.0
      %v1828 = vand.u32 %v243, 4294901760
      %v1829 = vsub.f32 %v243, %v1828
      %v1830 = vand.u32 %v1829, 4294901760
      %1831 = vmatpush1.msra.mxu0 %v1830
      %1832 = vmatprep.subr.mxu0 0.0
      %v1833 = vand.u32 %v244, 4294901760
      %v1834 = vsub.f32 %v244, %v1833
      %v1835 = vand.u32 %v1834, 4294901760
      %1836 = vmatpush1.msra.mxu0 %v1835
      %1837 = vmatprep.subr.mxu0 0.0
      %v1838 = vand.u32 %v382, 4294901760
      %v1839 = vsub.f32 %v382, %v1838
      %v1840 = vand.u32 %v1839, 4294901760
      %1841 = vmatpush1.msra.mxu0 %v1840
      %1842 = vmatprep.subr.mxu0 0.0
      %1843 = vmatpush1.msra.mxu0 0.0
      %1844 = vmatprep.subr.mxu0 0.0
      %1845 = vmatpush1.msra.mxu0 0.0
      %1846 = vmatprep.subr.mxu0 0.0
      %1847 = vmatpush1.msra.mxu0 0.0
      %1848 = vmatprep.subr.mxu0 0.0
      %1849 = vmatpush1.msra.mxu0 0.0
      %1850 = vmatprep.subr.mxu0 0.0
      %1851 = vmatpush1.msra.mxu0 0.0
      %1852 = vmatprep.subr.mxu0 0.0
      %1853 = vmatpush1.msra.mxu0 0.0
      %1854 = vmatprep.subr.mxu0 0.0
      %1855 = vmatpush1.msra.mxu0 0.0
      %1856 = vmatprep.subr.mxu0 0.0
      %1857 = vmatpush1.msra.mxu0 0.0
      %1858 = vmatprep.subr.mxu0 0.0
      %1859 = vmatpush1.msra.mxu0 0.0
      %1860 = vmatprep.subr.mxu0 0.0
      %1861 = vmatpush1.msra.mxu0 0.0
      %1862 = vmatprep.subr.mxu0 0.0
      %1863 = vmatpush1.msra.mxu0 0.0
      %1864 = vmatprep.subr.mxu0 0.0
      %1865 = vmatpush1.msra.mxu0 0.0
      %1866 = vmatprep.subr.mxu0 0.0
      %1867 = vmatpush1.msra.mxu0 0.0
      %1868 = vmatprep.subr.mxu0 0.0
      %1869 = vmatpush1.msra.mxu0 0.0
      %v1870 = vand.u32 %v312, 4294901760
      %1871 = vmatprep.mubr.f32.mxu0 %v1870
      %v1872 = vand.u32 %v264, 4294901760
      %1873 = vmatmul.mubr.f32.gmra.mrb[0].mxu0 %v1872
      %v1874 = vpop.f32.mrb[0].mxu0
      %v1875 = vadd.f32 %v1512, %v1874
      %v1876 = vpop.f32.mrb[0].mxu0
      %v1877 = vand.u32 %v315, 4294901760
      %1878 = vmatprep.mubr.f32.mxu0 %v1877
      %v1879 = vand.u32 %v266, 4294901760
      %1880 = vmatmul.mubr.f32.gmra.mrb[0].mxu0 %v1879
      %v1881 = vpop.f32.mrb[0].mxu0
      %v1882 = vadd.f32 %v1523, %v1881
      %v1883 = vpop.f32.mrb[0].mxu0
      %v1884 = vand.u32 %v318, 4294901760
      %1885 = vmatprep.mubr.f32.mxu0 %v1884
      %v1886 = vand.u32 %v268, 4294901760
      %1887 = vmatmul.mubr.f32.gmra.mrb[0].mxu0 %v1886
      %v1888 = vpop.f32.mrb[0].mxu0
      %v1889 = vadd.f32 %v1534, %v1888
      %v1890 = vpop.f32.mrb[0].mxu0
      %v1891 = vand.u32 %v321, 4294901760
      %1892 = vmatprep.mubr.f32.mxu0 %v1891
      %v1893 = vand.u32 %v270, 4294901760
      %1894 = vmatmul.mubr.f32.gmra.mrb[0].mxu0 %v1893
      %v1895 = vpop.f32.mrb[0].mxu0
      %v1896 = vadd.f32 %v1545, %v1895
      %v1897 = vpop.f32.mrb[0].mxu0
      %v1898 = vand.u32 %v324, 4294901760
      %1899 = vmatprep.mubr.f32.mxu0 %v1898
      %v1900 = vand.u32 %v272, 4294901760
      %1901 = vmatmul.mubr.f32.gmra.mrb[0].mxu0 %v1900
      %v1902 = vpop.f32.mrb[0].mxu0
      %v1903 = vadd.f32 %v1556, %v1902
      %v1904 = vpop.f32.mrb[0].mxu0
      %v1905 = vand.u32 %v327, 4294901760
      %1906 = vmatprep.mubr.f32.mxu0 %v1905
      %v1907 = vand.u32 %v274, 4294901760
      %1908 = vmatmul.mubr.f32.gmra.mrb[0].mxu0 %v1907
      %v1909 = vpop.f32.mrb[0].mxu0
      %v1910 = vadd.f32 %v1567, %v1909
      %v1911 = vpop.f32.mrb[0].mxu0
      %v1912 = vand.u32 %v330, 4294901760
      %1913 = vmatprep.mubr.f32.mxu0 %v1912
      %v1914 = vand.u32 %v276, 4294901760
      %1915 = vmatmul.mubr.f32.gmra.mrb[0].mxu0 %v1914
      %v1916 = vpop.f32.mrb[0].mxu0
      %v1917 = vadd.f32 %v1578, %v1916
      %v1918 = vpop.f32.mrb[0].mxu0
      %v1919 = vand.u32 %v333, 4294901760
      %1920 = vmatprep.mubr.f32.mxu0 %v1919
      %v1921 = vand.u32 %v278, 4294901760
      %1922 = vmatmul.mubr.f32.gmra.mrb[0].mxu0 %v1921
      %v1923 = vpop.f32.mrb[0].mxu0
      %v1924 = vadd.f32 %v1589, %v1923
      %v1925 = vpop.f32.mrb[0].mxu0
      %v1926 = vand.u32 %v336, 4294901760
      %1927 = vmatprep.mubr.f32.mxu0 %v1926
      %v1928 = vand.u32 %v280, 4294901760
      %1929 = vmatmul.mubr.f32.gmra.mrb[0].mxu0 %v1928
      %v1930 = vpop.f32.mrb[0].mxu0
      %v1931 = vadd.f32 %v1600, %v1930
      %v1932 = vpop.f32.mrb[0].mxu0
      %v1933 = vand.u32 %v339, 4294901760
      %1934 = vmatprep.mubr.f32.mxu0 %v1933
      %v1935 = vand.u32 %v282, 4294901760
      %1936 = vmatmul.mubr.f32.gmra.mrb[0].mxu0 %v1935
      %v1937 = vpop.f32.mrb[0].mxu0
      %v1938 = vadd.f32 %v1611, %v1937
      %v1939 = vpop.f32.mrb[0].mxu0
      %v1940 = vand.u32 %v342, 4294901760
      %1941 = vmatprep.mubr.f32.mxu0 %v1940
      %v1942 = vand.u32 %v284, 4294901760
      %1943 = vmatmul.mubr.f32.gmra.mrb[0].mxu0 %v1942
      %v1944 = vpop.f32.mrb[0].mxu0
      %v1945 = vadd.f32 %v1622, %v1944
      %v1946 = vpop.f32.mrb[0].mxu0
      %v1947 = vand.u32 %v345, 4294901760
      %1948 = vmatprep.mubr.f32.mxu0 %v1947
      %v1949 = vand.u32 %v286, 4294901760
      %1950 = vmatmul.mubr.f32.gmra.mrb[0].mxu0 %v1949
      %v1951 = vpop.f32.mrb[0].mxu0
      %v1952 = vadd.f32 %v1633, %v1951
      %v1953 = vpop.f32.mrb[0].mxu0
      %v1954 = vand.u32 %v348, 4294901760
      %1955 = vmatprep.mubr.f32.mxu0 %v1954
      %v1956 = vand.u32 %v288, 4294901760
      %1957 = vmatmul.mubr.f32.gmra.mrb[0].mxu0 %v1956
      %v1958 = vpop.f32.mrb[0].mxu0
      %v1959 = vadd.f32 %v1644, %v1958
      %v1960 = vpop.f32.mrb[0].mxu0
      %v1961 = vand.u32 %v351, 4294901760
      %1962 = vmatprep.mubr.f32.mxu0 %v1961
      %v1963 = vand.u32 %v290, 4294901760
      %1964 = vmatmul.mubr.f32.gmra.mrb[0].mxu0 %v1963
      %v1965 = vpop.f32.mrb[0].mxu0
      %v1966 = vadd.f32 %v1655, %v1965
      %v1967 = vpop.f32.mrb[0].mxu0
      %v1968 = vand.u32 %v354, 4294901760
      %1969 = vmatprep.mubr.f32.mxu0 %v1968
      %v1970 = vand.u32 %v292, 4294901760
      %1971 = vmatmul.mubr.f32.gmra.mrb[0].mxu0 %v1970
      %v1972 = vpop.f32.mrb[0].mxu0
      %v1973 = vadd.f32 %v1666, %v1972
      %v1974 = vpop.f32.mrb[0].mxu0
      %v1975 = vand.u32 %v357, 4294901760
      %1976 = vmatprep.mubr.f32.mxu0 %v1975
      %v1977 = vand.u32 %v294, 4294901760
      %1978 = vmatmul.mubr.f32.gmra.mrb[0].mxu0 %v1977
      %v1979 = vpop.f32.mrb[0].mxu0
      %v1980 = vpop.f32.mrb[0].mxu0
      %v1981 = vand.u32 %v360, 4294901760
      %1982 = vmatprep.mubr.f32.mxu0 %v1981
      %v1983 = vand.u32 %v296, 4294901760
      %1984 = vmatmul.mubr.f32.gmra.mrb[0].mxu0 %v1983
      %v1985 = vpop.f32.mrb[0].mxu0
      %v1986 = vpop.f32.mrb[0].mxu0
      %v1987 = vand.u32 %v363, 4294901760
      %1988 = vmatprep.mubr.f32.mxu0 %v1987
      %v1989 = vand.u32 %v298, 4294901760
      %1990 = vmatmul.mubr.f32.gmra.mrb[0].mxu0 %v1989
      %v1991 = vpop.f32.mrb[0].mxu0
      %v1992 = vpop.f32.mrb[0].mxu0
      %v1993 = vand.u32 %v366, 4294901760
      %1994 = vmatprep.mubr.f32.mxu0 %v1993
      %v1995 = vand.u32 %v300, 4294901760
      %1996 = vmatmul.mubr.f32.gmra.mrb[0].mxu0 %v1995
      %v1997 = vpop.f32.mrb[0].mxu0
      %v1998 = vpop.f32.mrb[0].mxu0
      %v1999 = vand.u32 %v369, 4294901760
      %2000 = vmatprep.mubr.f32.mxu0 %v1999
      %v2001 = vand.u32 %v302, 4294901760
      %2002 = vmatmul.mubr.f32.gmra.mrb[0].mxu0 %v2001
      %v2003 = vpop.f32.mrb[0].mxu0
      %v2004 = vpop.f32.mrb[0].mxu0
      %v2005 = vand.u32 %v372, 4294901760
      %2006 = vmatprep.mubr.f32.mxu0 %v2005
      %v2007 = vand.u32 %v304, 4294901760
      %2008 = vmatmul.mubr.f32.gmra.mrb[0].mxu0 %v2007
      %v2009 = vpop.f32.mrb[0].mxu0
      %v2010 = vadd.f32 %v1727, %v2009
      %v2011 = vpop.f32.mrb[0].mxu0
      %v2012 = vand.u32 %v375, 4294901760
      %2013 = vmatprep.mubr.f32.mxu0 %v2012
      %v2014 = vand.u32 %v306, 4294901760
      %2015 = vmatmul.mubr.f32.gmra.mrb[0].mxu0 %v2014
      %v2016 = vpop.f32.mrb[0].mxu0
      %v2017 = vadd.f32 %v1738, %v2016
      %v2018 = vpop.f32.mrb[0].mxu0
      %v2019 = vand.u32 %v378, 4294901760
      %2020 = vmatprep.mubr.f32.mxu0 %v2019
      %v2021 = vand.u32 %v308, 4294901760
      %2022 = vmatmul.mubr.f32.gmra.mrb[0].mxu0 %v2021
      %v2023 = vpop.f32.mrb[0].mxu0
      %v2024 = vadd.f32 %v1749, %v2023
      %v2025 = vpop.f32.mrb[0].mxu0
      %2026 = vdwg.mxu0
      %2027 = vmatprep.subr.mxu0 0.0
      %v2028 = vand.u32 %v228, 4294901760
      %2029 = vmatpush1.msra.mxu0 %v2028
      %2030 = vmatprep.subr.mxu0 0.0
      %v2031 = vand.u32 %v229, 4294901760
      %2032 = vmatpush1.msra.mxu0 %v2031
      %2033 = vmatprep.subr.mxu0 0.0
      %v2034 = vand.u32 %v230, 4294901760
      %2035 = vmatpush1.msra.mxu0 %v2034
      %2036 = vmatprep.subr.mxu0 0.0
      %v2037 = vand.u32 %v231, 4294901760
      %2038 = vmatpush1.msra.mxu0 %v2037
      %2039 = vmatprep.subr.mxu0 0.0
      %v2040 = vand.u32 %v232, 4294901760
      %2041 = vmatpush1.msra.mxu0 %v2040
      %2042 = vmatprep.subr.mxu0 0.0
      %v2043 = vand.u32 %v233, 4294901760
      %2044 = vmatpush1.msra.mxu0 %v2043
      %2045 = vmatprep.subr.mxu0 0.0
      %v2046 = vand.u32 %v234, 4294901760
      %2047 = vmatpush1.msra.mxu0 %v2046
      %2048 = vmatprep.subr.mxu0 0.0
      %v2049 = vand.u32 %v235, 4294901760
      %2050 = vmatpush1.msra.mxu0 %v2049
      %2051 = vmatprep.subr.mxu0 0.0
      %v2052 = vand.u32 %v236, 4294901760
      %2053 = vmatpush1.msra.mxu0 %v2052
      %2054 = vmatprep.subr.mxu0 0.0
      %v2055 = vand.u32 %v237, 4294901760
      %2056 = vmatpush1.msra.mxu0 %v2055
      %2057 = vmatprep.subr.mxu0 0.0
      %v2058 = vand.u32 %v238, 4294901760
      %2059 = vmatpush1.msra.mxu0 %v2058
      %2060 = vmatprep.subr.mxu0 0.0
      %v2061 = vand.u32 %v239, 4294901760
      %2062 = vmatpush1.msra.mxu0 %v2061
      %2063 = vmatprep.subr.mxu0 0.0
      %v2064 = vand.u32 %v240, 4294901760
      %2065 = vmatpush1.msra.mxu0 %v2064
      %2066 = vmatprep.subr.mxu0 0.0
      %v2067 = vand.u32 %v241, 4294901760
      %2068 = vmatpush1.msra.mxu0 %v2067
      %2069 = vmatprep.subr.mxu0 0.0
      %v2070 = vand.u32 %v242, 4294901760
      %2071 = vmatpush1.msra.mxu0 %v2070
      %2072 = vmatprep.subr.mxu0 0.0
      %v2073 = vand.u32 %v243, 4294901760
      %2074 = vmatpush1.msra.mxu0 %v2073
      %2075 = vmatprep.subr.mxu0 0.0
      %v2076 = vand.u32 %v244, 4294901760
      %2077 = vmatpush1.msra.mxu0 %v2076
      %2078 = vmatprep.subr.mxu0 0.0
      %v2079 = vand.u32 %v382, 4294901760
      %2080 = vmatpush1.msra.mxu0 %v2079
      %2081 = vmatprep.subr.mxu0 0.0
      %2082 = vmatpush1.msra.mxu0 0.0
      %2083 = vmatprep.subr.mxu0 0.0
      %2084 = vmatpush1.msra.mxu0 0.0
      %2085 = vmatprep.subr.mxu0 0.0
      %2086 = vmatpush1.msra.mxu0 0.0
      %2087 = vmatprep.subr.mxu0 0.0
      %2088 = vmatpush1.msra.mxu0 0.0
      %2089 = vmatprep.subr.mxu0 0.0
      %2090 = vmatpush1.msra.mxu0 0.0
      %2091 = vmatprep.subr.mxu0 0.0
      %2092 = vmatpush1.msra.mxu0 0.0
      %2093 = vmatprep.subr.mxu0 0.0
      %2094 = vmatpush1.msra.mxu0 0.0
      %2095 = vmatprep.subr.mxu0 0.0
      %2096 = vmatpush1.msra.mxu0 0.0
      %2097 = vmatprep.subr.mxu0 0.0
      %2098 = vmatpush1.msra.mxu0 0.0
      %2099 = vmatprep.subr.mxu0 0.0
      %2100 = vmatpush1.msra.mxu0 0.0
      %2101 = vmatprep.subr.mxu0 0.0
      %2102 = vmatpush1.msra.mxu0 0.0
      %2103 = vmatprep.subr.mxu0 0.0
      %2104 = vmatpush1.msra.mxu0 0.0
      %2105 = vmatprep.subr.mxu0 0.0
      %2106 = vmatpush1.msra.mxu0 0.0
      %2107 = vmatprep.subr.mxu0 0.0
      %2108 = vmatpush1.msra.mxu0 0.0
      %v2109 = vand.u32 %v312, 4294901760
      %2110 = vmatprep.mubr.f32.mxu0 %v2109
      %v2111 = vand.u32 %v264, 4294901760
      %2112 = vmatmul.mubr.f32.gmra.mrb[0].mxu0 %v2111
      %v2113 = vpop.f32.mrb[0].mxu0
      %v2114 = vadd.f32 %v1875, %v2113
      %v2115 = vpop.f32.mrb[0].mxu0
      %v2116 = vand.u32 %v315, 4294901760
      %2117 = vmatprep.mubr.f32.mxu0 %v2116
      %v2118 = vand.u32 %v266, 4294901760
      %2119 = vmatmul.mubr.f32.gmra.mrb[0].mxu0 %v2118
      %v2120 = vpop.f32.mrb[0].mxu0
      %v2121 = vadd.f32 %v1882, %v2120
      %v2122 = vpop.f32.mrb[0].mxu0
      %v2123 = vand.u32 %v318, 4294901760
      %2124 = vmatprep.mubr.f32.mxu0 %v2123
      %v2125 = vand.u32 %v268, 4294901760
      %2126 = vmatmul.mubr.f32.gmra.mrb[0].mxu0 %v2125
      %v2127 = vpop.f32.mrb[0].mxu0
      %v2128 = vadd.f32 %v1889, %v2127
      %v2129 = vpop.f32.mrb[0].mxu0
      %v2130 = vand.u32 %v321, 4294901760
      %2131 = vmatprep.mubr.f32.mxu0 %v2130
      %v2132 = vand.u32 %v270, 4294901760
      %2133 = vmatmul.mubr.f32.gmra.mrb[0].mxu0 %v2132
      %v2134 = vpop.f32.mrb[0].mxu0
      %v2135 = vadd.f32 %v1896, %v2134
      %v2136 = vpop.f32.mrb[0].mxu0
      %v2137 = vand.u32 %v324, 4294901760
      %2138 = vmatprep.mubr.f32.mxu0 %v2137
      %v2139 = vand.u32 %v272, 4294901760
      %2140 = vmatmul.mubr.f32.gmra.mrb[0].mxu0 %v2139
      %v2141 = vpop.f32.mrb[0].mxu0
      %v2142 = vadd.f32 %v1903, %v2141
      %v2143 = vpop.f32.mrb[0].mxu0
      %v2144 = vand.u32 %v327, 4294901760
      %2145 = vmatprep.mubr.f32.mxu0 %v2144
      %v2146 = vand.u32 %v274, 4294901760
      %2147 = vmatmul.mubr.f32.gmra.mrb[0].mxu0 %v2146
      %v2148 = vpop.f32.mrb[0].mxu0
      %v2149 = vadd.f32 %v1910, %v2148
      %v2150 = vpop.f32.mrb[0].mxu0
      %v2151 = vand.u32 %v330, 4294901760
      %2152 = vmatprep.mubr.f32.mxu0 %v2151
      %v2153 = vand.u32 %v276, 4294901760
      %2154 = vmatmul.mubr.f32.gmra.mrb[0].mxu0 %v2153
      %v2155 = vpop.f32.mrb[0].mxu0
      %v2156 = vadd.f32 %v1917, %v2155
      %v2157 = vpop.f32.mrb[0].mxu0
      %v2158 = vand.u32 %v333, 4294901760
      %2159 = vmatprep.mubr.f32.mxu0 %v2158
      %v2160 = vand.u32 %v278, 4294901760
      %2161 = vmatmul.mubr.f32.gmra.mrb[0].mxu0 %v2160
      %v2162 = vpop.f32.mrb[0].mxu0
      %v2163 = vadd.f32 %v1924, %v2162
      %v2164 = vpop.f32.mrb[0].mxu0
      %v2165 = vand.u32 %v336, 4294901760
      %2166 = vmatprep.mubr.f32.mxu0 %v2165
      %v2167 = vand.u32 %v280, 4294901760
      %2168 = vmatmul.mubr.f32.gmra.mrb[0].mxu0 %v2167
      %v2169 = vpop.f32.mrb[0].mxu0
      %v2170 = vadd.f32 %v1931, %v2169
      %v2171 = vpop.f32.mrb[0].mxu0
      %v2172 = vand.u32 %v339, 4294901760
      %2173 = vmatprep.mubr.f32.mxu0 %v2172
      %v2174 = vand.u32 %v282, 4294901760
      %2175 = vmatmul.mubr.f32.gmra.mrb[0].mxu0 %v2174
      %v2176 = vpop.f32.mrb[0].mxu0
      %v2177 = vadd.f32 %v1938, %v2176
      %v2178 = vpop.f32.mrb[0].mxu0
      %v2179 = vand.u32 %v342, 4294901760
      %2180 = vmatprep.mubr.f32.mxu0 %v2179
      %v2181 = vand.u32 %v284, 4294901760
      %2182 = vmatmul.mubr.f32.gmra.mrb[0].mxu0 %v2181
      %v2183 = vpop.f32.mrb[0].mxu0
      %v2184 = vadd.f32 %v1945, %v2183
      %v2185 = vpop.f32.mrb[0].mxu0
      %v2186 = vand.u32 %v345, 4294901760
      %2187 = vmatprep.mubr.f32.mxu0 %v2186
      %v2188 = vand.u32 %v286, 4294901760
      %2189 = vmatmul.mubr.f32.gmra.mrb[0].mxu0 %v2188
      %v2190 = vpop.f32.mrb[0].mxu0
      %v2191 = vadd.f32 %v1952, %v2190
      %v2192 = vpop.f32.mrb[0].mxu0
      %v2193 = vand.u32 %v348, 4294901760
      %2194 = vmatprep.mubr.f32.mxu0 %v2193
      %v2195 = vand.u32 %v288, 4294901760
      %2196 = vmatmul.mubr.f32.gmra.mrb[0].mxu0 %v2195
      %v2197 = vpop.f32.mrb[0].mxu0
      %v2198 = vadd.f32 %v1959, %v2197
      %v2199 = vpop.f32.mrb[0].mxu0
      %v2200 = vand.u32 %v351, 4294901760
      %2201 = vmatprep.mubr.f32.mxu0 %v2200
      %v2202 = vand.u32 %v290, 4294901760
      %2203 = vmatmul.mubr.f32.gmra.mrb[0].mxu0 %v2202
      %v2204 = vpop.f32.mrb[0].mxu0
      %v2205 = vadd.f32 %v1966, %v2204
      %v2206 = vpop.f32.mrb[0].mxu0
      %v2207 = vand.u32 %v354, 4294901760
      %2208 = vmatprep.mubr.f32.mxu0 %v2207
      %v2209 = vand.u32 %v292, 4294901760
      %2210 = vmatmul.mubr.f32.gmra.mrb[0].mxu0 %v2209
      %v2211 = vpop.f32.mrb[0].mxu0
      %v2212 = vadd.f32 %v1973, %v2211
      %v2213 = vpop.f32.mrb[0].mxu0
      %v2214 = vand.u32 %v357, 4294901760
      %2215 = vmatprep.mubr.f32.mxu0 %v2214
      %v2216 = vand.u32 %v294, 4294901760
      %2217 = vmatmul.mubr.f32.gmra.mrb[0].mxu0 %v2216
      %v2218 = vpop.f32.mrb[0].mxu0
      %v2219 = vpop.f32.mrb[0].mxu0
      %v2220 = vand.u32 %v360, 4294901760
      %2221 = vmatprep.mubr.f32.mxu0 %v2220
      %v2222 = vand.u32 %v296, 4294901760
      %2223 = vmatmul.mubr.f32.gmra.mrb[0].mxu0 %v2222
      %v2224 = vpop.f32.mrb[0].mxu0
      %v2225 = vpop.f32.mrb[0].mxu0
      %v2226 = vand.u32 %v363, 4294901760
      %2227 = vmatprep.mubr.f32.mxu0 %v2226
      %v2228 = vand.u32 %v298, 4294901760
      %2229 = vmatmul.mubr.f32.gmra.mrb[0].mxu0 %v2228
      %v2230 = vpop.f32.mrb[0].mxu0
      %v2231 = vpop.f32.mrb[0].mxu0
      %v2232 = vand.u32 %v366, 4294901760
      %2233 = vmatprep.mubr.f32.mxu0 %v2232
      %v2234 = vand.u32 %v300, 4294901760
      %2235 = vmatmul.mubr.f32.gmra.mrb[0].mxu0 %v2234
      %v2236 = vpop.f32.mrb[0].mxu0
      %v2237 = vpop.f32.mrb[0].mxu0
      %v2238 = vand.u32 %v369, 4294901760
      %2239 = vmatprep.mubr.f32.mxu0 %v2238
      %v2240 = vand.u32 %v302, 4294901760
      %2241 = vmatmul.mubr.f32.gmra.mrb[0].mxu0 %v2240
      %v2242 = vpop.f32.mrb[0].mxu0
      %v2243 = vpop.f32.mrb[0].mxu0
      %v2244 = vand.u32 %v372, 4294901760
      %2245 = vmatprep.mubr.f32.mxu0 %v2244
      %v2246 = vand.u32 %v304, 4294901760
      %2247 = vmatmul.mubr.f32.gmra.mrb[0].mxu0 %v2246
      %v2248 = vpop.f32.mrb[0].mxu0
      %v2249 = vadd.f32 %v2010, %v2248
      %v2250 = vpop.f32.mrb[0].mxu0
      %v2251 = vand.u32 %v375, 4294901760
      %2252 = vmatprep.mubr.f32.mxu0 %v2251
      %v2253 = vand.u32 %v306, 4294901760
      %2254 = vmatmul.mubr.f32.gmra.mrb[0].mxu0 %v2253
      %v2255 = vpop.f32.mrb[0].mxu0
      %v2256 = vadd.f32 %v2017, %v2255
      %v2257 = vpop.f32.mrb[0].mxu0
      %v2258 = vand.u32 %v378, 4294901760
      %2259 = vmatprep.mubr.f32.mxu0 %v2258
      %v2260 = vand.u32 %v308, 4294901760
      %2261 = vmatmul.mubr.f32.gmra.mrb[0].mxu0 %v2260
      %v2262 = vpop.f32.mrb[0].mxu0
      %v2263 = vadd.f32 %v2024, %v2262
      %v2264 = vpop.f32.mrb[0].mxu0
      %2265 = vdwg.mxu0
      %v2267 = vsel %vm380, %v263, 0
      %2269 = vmatprep.subr.mxu0 0.0
      %v2270 = vand.u32 %v246, 4294901760
      %2271 = vmatpush1.msra.mxu0 %v2270
      %2272 = vmatprep.subr.mxu0 0.0
      %v2273 = vand.u32 %v247, 4294901760
      %2274 = vmatpush1.msra.mxu0 %v2273
      %2275 = vmatprep.subr.mxu0 0.0
      %v2276 = vand.u32 %v248, 4294901760
      %2277 = vmatpush1.msra.mxu0 %v2276
      %2278 = vmatprep.subr.mxu0 0.0
      %v2279 = vand.u32 %v249, 4294901760
      %2280 = vmatpush1.msra.mxu0 %v2279
      %2281 = vmatprep.subr.mxu0 0.0
      %v2282 = vand.u32 %v250, 4294901760
      %2283 = vmatpush1.msra.mxu0 %v2282
      %2284 = vmatprep.subr.mxu0 0.0
      %v2285 = vand.u32 %v251, 4294901760
      %2286 = vmatpush1.msra.mxu0 %v2285
      %2287 = vmatprep.subr.mxu0 0.0
      %v2288 = vand.u32 %v252, 4294901760
      %2289 = vmatpush1.msra.mxu0 %v2288
      %2290 = vmatprep.subr.mxu0 0.0
      %v2291 = vand.u32 %v253, 4294901760
      %2292 = vmatpush1.msra.mxu0 %v2291
      %2293 = vmatprep.subr.mxu0 0.0
      %v2294 = vand.u32 %v254, 4294901760
      %2295 = vmatpush1.msra.mxu0 %v2294
      %2296 = vmatprep.subr.mxu0 0.0
      %v2297 = vand.u32 %v255, 4294901760
      %2298 = vmatpush1.msra.mxu0 %v2297
      %2299 = vmatprep.subr.mxu0 0.0
      %v2300 = vand.u32 %v256, 4294901760
      %2301 = vmatpush1.msra.mxu0 %v2300
      %2302 = vmatprep.subr.mxu0 0.0
      %v2303 = vand.u32 %v257, 4294901760
      %2304 = vmatpush1.msra.mxu0 %v2303
      %2305 = vmatprep.subr.mxu0 0.0
      %v2306 = vand.u32 %v258, 4294901760
      %2307 = vmatpush1.msra.mxu0 %v2306
      %2308 = vmatprep.subr.mxu0 0.0
      %v2309 = vand.u32 %v259, 4294901760
      %2310 = vmatpush1.msra.mxu0 %v2309
      %2311 = vmatprep.subr.mxu0 0.0
      %v2312 = vand.u32 %v260, 4294901760
      %2313 = vmatpush1.msra.mxu0 %v2312
      %2314 = vmatprep.subr.mxu0 0.0
      %v2315 = vand.u32 %v261, 4294901760
      %2316 = vmatpush1.msra.mxu0 %v2315
      %2317 = vmatprep.subr.mxu0 0.0
      %v2318 = vand.u32 %v262, 4294901760
      %2319 = vmatpush1.msra.mxu0 %v2318
      %2320 = vmatprep.subr.mxu0 0.0
      %v2321 = vand.u32 %v2267, 4294901760
      %2322 = vmatpush1.msra.mxu0 %v2321
      %2323 = vmatprep.subr.mxu0 0.0
      %2324 = vmatpush1.msra.mxu0 0.0
      %2325 = vmatprep.subr.mxu0 0.0
      %2326 = vmatpush1.msra.mxu0 0.0
      %2327 = vmatprep.subr.mxu0 0.0
      %2328 = vmatpush1.msra.mxu0 0.0
      %2329 = vmatprep.subr.mxu0 0.0
      %2330 = vmatpush1.msra.mxu0 0.0
      %2331 = vmatprep.subr.mxu0 0.0
      %2332 = vmatpush1.msra.mxu0 0.0
      %2333 = vmatprep.subr.mxu0 0.0
      %2334 = vmatpush1.msra.mxu0 0.0
      %2335 = vmatprep.subr.mxu0 0.0
      %2336 = vmatpush1.msra.mxu0 0.0
      %2337 = vmatprep.subr.mxu0 0.0
      %2338 = vmatpush1.msra.mxu0 0.0
      %2339 = vmatprep.subr.mxu0 0.0
      %2340 = vmatpush1.msra.mxu0 0.0
      %2341 = vmatprep.subr.mxu0 0.0
      %2342 = vmatpush1.msra.mxu0 0.0
      %2343 = vmatprep.subr.mxu0 0.0
      %2344 = vmatpush1.msra.mxu0 0.0
      %2345 = vmatprep.subr.mxu0 0.0
      %2346 = vmatpush1.msra.mxu0 0.0
      %2347 = vmatprep.subr.mxu0 0.0
      %2348 = vmatpush1.msra.mxu0 0.0
      %2349 = vmatprep.subr.mxu0 0.0
      %2350 = vmatpush1.msra.mxu0 0.0
      %v2351 = vand.u32 %v312, 4294901760
      %v2352 = vsub.f32 %v312, %v2351
      %v2353 = vand.u32 %v2352, 4294901760
      %v2354 = vsub.f32 %v2352, %v2353
      %v2355 = vand.u32 %v2354, 4294901760
      %2356 = vmatprep.mubr.f32.mxu0 %v2355
      %v2357 = vand.u32 %v264, 4294901760
      %v2358 = vsub.f32 %v264, %v2357
      %v2359 = vand.u32 %v2358, 4294901760
      %v2360 = vsub.f32 %v2358, %v2359
      %v2361 = vand.u32 %v2360, 4294901760
      %2362 = vmatmul.mubr.f32.gmra.mrb[0].mxu0 %v2361
      %v2363 = vpop.f32.mrb[0].mxu0
      %v2364 = vadd.f32 0.0, %v2363
      %v2365 = vpop.f32.mrb[0].mxu0
      %v2366 = vand.u32 %v315, 4294901760
      %v2367 = vsub.f32 %v315, %v2366
      %v2368 = vand.u32 %v2367, 4294901760
      %v2369 = vsub.f32 %v2367, %v2368
      %v2370 = vand.u32 %v2369, 4294901760
      %2371 = vmatprep.mubr.f32.mxu0 %v2370
      %v2372 = vand.u32 %v266, 4294901760
      %v2373 = vsub.f32 %v266, %v2372
      %v2374 = vand.u32 %v2373, 4294901760
      %v2375 = vsub.f32 %v2373, %v2374
      %v2376 = vand.u32 %v2375, 4294901760
      %2377 = vmatmul.mubr.f32.gmra.mrb[0].mxu0 %v2376
      %v2378 = vpop.f32.mrb[0].mxu0
      %v2379 = vadd.f32 0.0, %v2378
      %v2380 = vpop.f32.mrb[0].mxu0
      %v2381 = vand.u32 %v318, 4294901760
      %v2382 = vsub.f32 %v318, %v2381
      %v2383 = vand.u32 %v2382, 4294901760
      %v2384 = vsub.f32 %v2382, %v2383
      %v2385 = vand.u32 %v2384, 4294901760
      %2386 = vmatprep.mubr.f32.mxu0 %v2385
      %v2387 = vand.u32 %v268, 4294901760
      %v2388 = vsub.f32 %v268, %v2387
      %v2389 = vand.u32 %v2388, 4294901760
      %v2390 = vsub.f32 %v2388, %v2389
      %v2391 = vand.u32 %v2390, 4294901760
      %2392 = vmatmul.mubr.f32.gmra.mrb[0].mxu0 %v2391
      %v2393 = vpop.f32.mrb[0].mxu0
      %v2394 = vadd.f32 0.0, %v2393
      %v2395 = vpop.f32.mrb[0].mxu0
      %v2396 = vand.u32 %v321, 4294901760
      %v2397 = vsub.f32 %v321, %v2396
      %v2398 = vand.u32 %v2397, 4294901760
      %v2399 = vsub.f32 %v2397, %v2398
      %v2400 = vand.u32 %v2399, 4294901760
      %2401 = vmatprep.mubr.f32.mxu0 %v2400
      %v2402 = vand.u32 %v270, 4294901760
      %v2403 = vsub.f32 %v270, %v2402
      %v2404 = vand.u32 %v2403, 4294901760
      %v2405 = vsub.f32 %v2403, %v2404
      %v2406 = vand.u32 %v2405, 4294901760
      %2407 = vmatmul.mubr.f32.gmra.mrb[0].mxu0 %v2406
      %v2408 = vpop.f32.mrb[0].mxu0
      %v2409 = vadd.f32 0.0, %v2408
      %v2410 = vpop.f32.mrb[0].mxu0
      %v2411 = vand.u32 %v324, 4294901760
      %v2412 = vsub.f32 %v324, %v2411
      %v2413 = vand.u32 %v2412, 4294901760
      %v2414 = vsub.f32 %v2412, %v2413
      %v2415 = vand.u32 %v2414, 4294901760
      %2416 = vmatprep.mubr.f32.mxu0 %v2415
      %v2417 = vand.u32 %v272, 4294901760
      %v2418 = vsub.f32 %v272, %v2417
      %v2419 = vand.u32 %v2418, 4294901760
      %v2420 = vsub.f32 %v2418, %v2419
      %v2421 = vand.u32 %v2420, 4294901760
      %2422 = vmatmul.mubr.f32.gmra.mrb[0].mxu0 %v2421
      %v2423 = vpop.f32.mrb[0].mxu0
      %v2424 = vadd.f32 0.0, %v2423
      %v2425 = vpop.f32.mrb[0].mxu0
      %v2426 = vand.u32 %v327, 4294901760
      %v2427 = vsub.f32 %v327, %v2426
      %v2428 = vand.u32 %v2427, 4294901760
      %v2429 = vsub.f32 %v2427, %v2428
      %v2430 = vand.u32 %v2429, 4294901760
      %2431 = vmatprep.mubr.f32.mxu0 %v2430
      %v2432 = vand.u32 %v274, 4294901760
      %v2433 = vsub.f32 %v274, %v2432
      %v2434 = vand.u32 %v2433, 4294901760
      %v2435 = vsub.f32 %v2433, %v2434
      %v2436 = vand.u32 %v2435, 4294901760
      %2437 = vmatmul.mubr.f32.gmra.mrb[0].mxu0 %v2436
      %v2438 = vpop.f32.mrb[0].mxu0
      %v2439 = vadd.f32 0.0, %v2438
      %v2440 = vpop.f32.mrb[0].mxu0
      %v2441 = vand.u32 %v330, 4294901760
      %v2442 = vsub.f32 %v330, %v2441
      %v2443 = vand.u32 %v2442, 4294901760
      %v2444 = vsub.f32 %v2442, %v2443
      %v2445 = vand.u32 %v2444, 4294901760
      %2446 = vmatprep.mubr.f32.mxu0 %v2445
      %v2447 = vand.u32 %v276, 4294901760
      %v2448 = vsub.f32 %v276, %v2447
      %v2449 = vand.u32 %v2448, 4294901760
      %v2450 = vsub.f32 %v2448, %v2449
      %v2451 = vand.u32 %v2450, 4294901760
      %2452 = vmatmul.mubr.f32.gmra.mrb[0].mxu0 %v2451
      %v2453 = vpop.f32.mrb[0].mxu0
      %v2454 = vadd.f32 0.0, %v2453
      %v2455 = vpop.f32.mrb[0].mxu0
      %v2456 = vand.u32 %v333, 4294901760
      %v2457 = vsub.f32 %v333, %v2456
      %v2458 = vand.u32 %v2457, 4294901760
      %v2459 = vsub.f32 %v2457, %v2458
      %v2460 = vand.u32 %v2459, 4294901760
      %2461 = vmatprep.mubr.f32.mxu0 %v2460
      %v2462 = vand.u32 %v278, 4294901760
      %v2463 = vsub.f32 %v278, %v2462
      %v2464 = vand.u32 %v2463, 4294901760
      %v2465 = vsub.f32 %v2463, %v2464
      %v2466 = vand.u32 %v2465, 4294901760
      %2467 = vmatmul.mubr.f32.gmra.mrb[0].mxu0 %v2466
      %v2468 = vpop.f32.mrb[0].mxu0
      %v2469 = vadd.f32 0.0, %v2468
      %v2470 = vpop.f32.mrb[0].mxu0
      %v2471 = vand.u32 %v336, 4294901760
      %v2472 = vsub.f32 %v336, %v2471
      %v2473 = vand.u32 %v2472, 4294901760
      %v2474 = vsub.f32 %v2472, %v2473
      %v2475 = vand.u32 %v2474, 4294901760
      %2476 = vmatprep.mubr.f32.mxu0 %v2475
      %v2477 = vand.u32 %v280, 4294901760
      %v2478 = vsub.f32 %v280, %v2477
      %v2479 = vand.u32 %v2478, 4294901760
      %v2480 = vsub.f32 %v2478, %v2479
      %v2481 = vand.u32 %v2480, 4294901760
      %2482 = vmatmul.mubr.f32.gmra.mrb[0].mxu0 %v2481
      %v2483 = vpop.f32.mrb[0].mxu0
      %v2484 = vadd.f32 0.0, %v2483
      %v2485 = vpop.f32.mrb[0].mxu0
      %v2486 = vand.u32 %v339, 4294901760
      %v2487 = vsub.f32 %v339, %v2486
      %v2488 = vand.u32 %v2487, 4294901760
      %v2489 = vsub.f32 %v2487, %v2488
      %v2490 = vand.u32 %v2489, 4294901760
      %2491 = vmatprep.mubr.f32.mxu0 %v2490
      %v2492 = vand.u32 %v282, 4294901760
      %v2493 = vsub.f32 %v282, %v2492
      %v2494 = vand.u32 %v2493, 4294901760
      %v2495 = vsub.f32 %v2493, %v2494
      %v2496 = vand.u32 %v2495, 4294901760
      %2497 = vmatmul.mubr.f32.gmra.mrb[0].mxu0 %v2496
      %v2498 = vpop.f32.mrb[0].mxu0
      %v2499 = vadd.f32 0.0, %v2498
      %v2500 = vpop.f32.mrb[0].mxu0
      %v2501 = vand.u32 %v342, 4294901760
      %v2502 = vsub.f32 %v342, %v2501
      %v2503 = vand.u32 %v2502, 4294901760
      %v2504 = vsub.f32 %v2502, %v2503
      %v2505 = vand.u32 %v2504, 4294901760
      %2506 = vmatprep.mubr.f32.mxu0 %v2505
      %v2507 = vand.u32 %v284, 4294901760
      %v2508 = vsub.f32 %v284, %v2507
      %v2509 = vand.u32 %v2508, 4294901760
      %v2510 = vsub.f32 %v2508, %v2509
      %v2511 = vand.u32 %v2510, 4294901760
      %2512 = vmatmul.mubr.f32.gmra.mrb[0].mxu0 %v2511
      %v2513 = vpop.f32.mrb[0].mxu0
      %v2514 = vadd.f32 0.0, %v2513
      %v2515 = vpop.f32.mrb[0].mxu0
      %v2516 = vand.u32 %v345, 4294901760
      %v2517 = vsub.f32 %v345, %v2516
      %v2518 = vand.u32 %v2517, 4294901760
      %v2519 = vsub.f32 %v2517, %v2518
      %v2520 = vand.u32 %v2519, 4294901760
      %2521 = vmatprep.mubr.f32.mxu0 %v2520
      %v2522 = vand.u32 %v286, 4294901760
      %v2523 = vsub.f32 %v286, %v2522
      %v2524 = vand.u32 %v2523, 4294901760
      %v2525 = vsub.f32 %v2523, %v2524
      %v2526 = vand.u32 %v2525, 4294901760
      %2527 = vmatmul.mubr.f32.gmra.mrb[0].mxu0 %v2526
      %v2528 = vpop.f32.mrb[0].mxu0
      %v2529 = vadd.f32 0.0, %v2528
      %v2530 = vpop.f32.mrb[0].mxu0
      %v2531 = vand.u32 %v348, 4294901760
      %v2532 = vsub.f32 %v348, %v2531
      %v2533 = vand.u32 %v2532, 4294901760
      %v2534 = vsub.f32 %v2532, %v2533
      %v2535 = vand.u32 %v2534, 4294901760
      %2536 = vmatprep.mubr.f32.mxu0 %v2535
      %v2537 = vand.u32 %v288, 4294901760
      %v2538 = vsub.f32 %v288, %v2537
      %v2539 = vand.u32 %v2538, 4294901760
      %v2540 = vsub.f32 %v2538, %v2539
      %v2541 = vand.u32 %v2540, 4294901760
      %2542 = vmatmul.mubr.f32.gmra.mrb[0].mxu0 %v2541
      %v2543 = vpop.f32.mrb[0].mxu0
      %v2544 = vadd.f32 0.0, %v2543
      %v2545 = vpop.f32.mrb[0].mxu0
      %v2546 = vand.u32 %v351, 4294901760
      %v2547 = vsub.f32 %v351, %v2546
      %v2548 = vand.u32 %v2547, 4294901760
      %v2549 = vsub.f32 %v2547, %v2548
      %v2550 = vand.u32 %v2549, 4294901760
      %2551 = vmatprep.mubr.f32.mxu0 %v2550
      %v2552 = vand.u32 %v290, 4294901760
      %v2553 = vsub.f32 %v290, %v2552
      %v2554 = vand.u32 %v2553, 4294901760
      %v2555 = vsub.f32 %v2553, %v2554
      %v2556 = vand.u32 %v2555, 4294901760
      %2557 = vmatmul.mubr.f32.gmra.mrb[0].mxu0 %v2556
      %v2558 = vpop.f32.mrb[0].mxu0
      %v2559 = vadd.f32 0.0, %v2558
      %v2560 = vpop.f32.mrb[0].mxu0
      %v2561 = vand.u32 %v354, 4294901760
      %v2562 = vsub.f32 %v354, %v2561
      %v2563 = vand.u32 %v2562, 4294901760
      %v2564 = vsub.f32 %v2562, %v2563
      %v2565 = vand.u32 %v2564, 4294901760
      %2566 = vmatprep.mubr.f32.mxu0 %v2565
      %v2567 = vand.u32 %v292, 4294901760
      %v2568 = vsub.f32 %v292, %v2567
      %v2569 = vand.u32 %v2568, 4294901760
      %v2570 = vsub.f32 %v2568, %v2569
      %v2571 = vand.u32 %v2570, 4294901760
      %2572 = vmatmul.mubr.f32.gmra.mrb[0].mxu0 %v2571
      %v2573 = vpop.f32.mrb[0].mxu0
      %v2574 = vadd.f32 0.0, %v2573
      %v2575 = vpop.f32.mrb[0].mxu0
      %v2576 = vand.u32 %v357, 4294901760
      %v2577 = vsub.f32 %v357, %v2576
      %v2578 = vand.u32 %v2577, 4294901760
      %v2579 = vsub.f32 %v2577, %v2578
      %v2580 = vand.u32 %v2579, 4294901760
      %2581 = vmatprep.mubr.f32.mxu0 %v2580
      %v2582 = vand.u32 %v294, 4294901760
      %v2583 = vsub.f32 %v294, %v2582
      %v2584 = vand.u32 %v2583, 4294901760
      %v2585 = vsub.f32 %v2583, %v2584
      %v2586 = vand.u32 %v2585, 4294901760
      %2587 = vmatmul.mubr.f32.gmra.mrb[0].mxu0 %v2586
      %v2588 = vpop.f32.mrb[0].mxu0
      %v2589 = vadd.f32 0.0, %v2588
      %v2590 = vpop.f32.mrb[0].mxu0
      %v2591 = vand.u32 %v360, 4294901760
      %v2592 = vsub.f32 %v360, %v2591
      %v2593 = vand.u32 %v2592, 4294901760
      %v2594 = vsub.f32 %v2592, %v2593
      %v2595 = vand.u32 %v2594, 4294901760
      %2596 = vmatprep.mubr.f32.mxu0 %v2595
      %v2597 = vand.u32 %v296, 4294901760
      %v2598 = vsub.f32 %v296, %v2597
      %v2599 = vand.u32 %v2598, 4294901760
      %v2600 = vsub.f32 %v2598, %v2599
      %v2601 = vand.u32 %v2600, 4294901760
      %2602 = vmatmul.mubr.f32.gmra.mrb[0].mxu0 %v2601
      %v2603 = vpop.f32.mrb[0].mxu0
      %v2604 = vadd.f32 0.0, %v2603
      %v2605 = vpop.f32.mrb[0].mxu0
      %v2606 = vand.u32 %v363, 4294901760
      %v2607 = vsub.f32 %v363, %v2606
      %v2608 = vand.u32 %v2607, 4294901760
      %v2609 = vsub.f32 %v2607, %v2608
      %v2610 = vand.u32 %v2609, 4294901760
      %2611 = vmatprep.mubr.f32.mxu0 %v2610
      %v2612 = vand.u32 %v298, 4294901760
      %v2613 = vsub.f32 %v298, %v2612
      %v2614 = vand.u32 %v2613, 4294901760
      %v2615 = vsub.f32 %v2613, %v2614
      %v2616 = vand.u32 %v2615, 4294901760
      %2617 = vmatmul.mubr.f32.gmra.mrb[0].mxu0 %v2616
      %v2618 = vpop.f32.mrb[0].mxu0
      %v2619 = vadd.f32 0.0, %v2618
      %v2620 = vpop.f32.mrb[0].mxu0
      %v2621 = vand.u32 %v366, 4294901760
      %v2622 = vsub.f32 %v366, %v2621
      %v2623 = vand.u32 %v2622, 4294901760
      %v2624 = vsub.f32 %v2622, %v2623
      %v2625 = vand.u32 %v2624, 4294901760
      %2626 = vmatprep.mubr.f32.mxu0 %v2625
      %v2627 = vand.u32 %v300, 4294901760
      %v2628 = vsub.f32 %v300, %v2627
      %v2629 = vand.u32 %v2628, 4294901760
      %v2630 = vsub.f32 %v2628, %v2629
      %v2631 = vand.u32 %v2630, 4294901760
      %2632 = vmatmul.mubr.f32.gmra.mrb[0].mxu0 %v2631
      %v2633 = vpop.f32.mrb[0].mxu0
      %v2634 = vadd.f32 0.0, %v2633
      %v2635 = vpop.f32.mrb[0].mxu0
      %v2636 = vand.u32 %v369, 4294901760
      %v2637 = vsub.f32 %v369, %v2636
      %v2638 = vand.u32 %v2637, 4294901760
      %v2639 = vsub.f32 %v2637, %v2638
      %v2640 = vand.u32 %v2639, 4294901760
      %2641 = vmatprep.mubr.f32.mxu0 %v2640
      %v2642 = vand.u32 %v302, 4294901760
      %v2643 = vsub.f32 %v302, %v2642
      %v2644 = vand.u32 %v2643, 4294901760
      %v2645 = vsub.f32 %v2643, %v2644
      %v2646 = vand.u32 %v2645, 4294901760
      %2647 = vmatmul.mubr.f32.gmra.mrb[0].mxu0 %v2646
      %v2648 = vpop.f32.mrb[0].mxu0
      %v2649 = vadd.f32 0.0, %v2648
      %v2650 = vpop.f32.mrb[0].mxu0
      %v2651 = vand.u32 %v372, 4294901760
      %v2652 = vsub.f32 %v372, %v2651
      %v2653 = vand.u32 %v2652, 4294901760
      %v2654 = vsub.f32 %v2652, %v2653
      %v2655 = vand.u32 %v2654, 4294901760
      %2656 = vmatprep.mubr.f32.mxu0 %v2655
      %v2657 = vand.u32 %v304, 4294901760
      %v2658 = vsub.f32 %v304, %v2657
      %v2659 = vand.u32 %v2658, 4294901760
      %v2660 = vsub.f32 %v2658, %v2659
      %v2661 = vand.u32 %v2660, 4294901760
      %2662 = vmatmul.mubr.f32.gmra.mrb[0].mxu0 %v2661
      %v2663 = vpop.f32.mrb[0].mxu0
      %v2664 = vadd.f32 0.0, %v2663
      %v2665 = vpop.f32.mrb[0].mxu0
      %v2666 = vand.u32 %v375, 4294901760
      %v2667 = vsub.f32 %v375, %v2666
      %v2668 = vand.u32 %v2667, 4294901760
      %v2669 = vsub.f32 %v2667, %v2668
      %v2670 = vand.u32 %v2669, 4294901760
      %2671 = vmatprep.mubr.f32.mxu0 %v2670
      %v2672 = vand.u32 %v306, 4294901760
      %v2673 = vsub.f32 %v306, %v2672
      %v2674 = vand.u32 %v2673, 4294901760
      %v2675 = vsub.f32 %v2673, %v2674
      %v2676 = vand.u32 %v2675, 4294901760
      %2677 = vmatmul.mubr.f32.gmra.mrb[0].mxu0 %v2676
      %v2678 = vpop.f32.mrb[0].mxu0
      %v2679 = vadd.f32 0.0, %v2678
      %v2680 = vpop.f32.mrb[0].mxu0
      %v2681 = vand.u32 %v378, 4294901760
      %v2682 = vsub.f32 %v378, %v2681
      %v2683 = vand.u32 %v2682, 4294901760
      %v2684 = vsub.f32 %v2682, %v2683
      %v2685 = vand.u32 %v2684, 4294901760
      %2686 = vmatprep.mubr.f32.mxu0 %v2685
      %v2687 = vand.u32 %v308, 4294901760
      %v2688 = vsub.f32 %v308, %v2687
      %v2689 = vand.u32 %v2688, 4294901760
      %v2690 = vsub.f32 %v2688, %v2689
      %v2691 = vand.u32 %v2690, 4294901760
      %2692 = vmatmul.mubr.f32.gmra.mrb[0].mxu0 %v2691
      %v2693 = vpop.f32.mrb[0].mxu0
      %v2694 = vadd.f32 0.0, %v2693
      %v2695 = vpop.f32.mrb[0].mxu0
      %2696 = vdwg.mxu0
      %2697 = vmatprep.subr.mxu0 0.0
      %v2698 = vand.u32 %v246, 4294901760
      %v2699 = vsub.f32 %v246, %v2698
      %v2700 = vand.u32 %v2699, 4294901760
      %v2701 = vsub.f32 %v2699, %v2700
      %v2702 = vand.u32 %v2701, 4294901760
      %2703 = vmatpush1.msra.mxu0 %v2702
      %2704 = vmatprep.subr.mxu0 0.0
      %v2705 = vand.u32 %v247, 4294901760
      %v2706 = vsub.f32 %v247, %v2705
      %v2707 = vand.u32 %v2706, 4294901760
      %v2708 = vsub.f32 %v2706, %v2707
      %v2709 = vand.u32 %v2708, 4294901760
      %2710 = vmatpush1.msra.mxu0 %v2709
      %2711 = vmatprep.subr.mxu0 0.0
      %v2712 = vand.u32 %v248, 4294901760
      %v2713 = vsub.f32 %v248, %v2712
      %v2714 = vand.u32 %v2713, 4294901760
      %v2715 = vsub.f32 %v2713, %v2714
      %v2716 = vand.u32 %v2715, 4294901760
      %2717 = vmatpush1.msra.mxu0 %v2716
      %2718 = vmatprep.subr.mxu0 0.0
      %v2719 = vand.u32 %v249, 4294901760
      %v2720 = vsub.f32 %v249, %v2719
      %v2721 = vand.u32 %v2720, 4294901760
      %v2722 = vsub.f32 %v2720, %v2721
      %v2723 = vand.u32 %v2722, 4294901760
      %2724 = vmatpush1.msra.mxu0 %v2723
      %2725 = vmatprep.subr.mxu0 0.0
      %v2726 = vand.u32 %v250, 4294901760
      %v2727 = vsub.f32 %v250, %v2726
      %v2728 = vand.u32 %v2727, 4294901760
      %v2729 = vsub.f32 %v2727, %v2728
      %v2730 = vand.u32 %v2729, 4294901760
      %2731 = vmatpush1.msra.mxu0 %v2730
      %2732 = vmatprep.subr.mxu0 0.0
      %v2733 = vand.u32 %v251, 4294901760
      %v2734 = vsub.f32 %v251, %v2733
      %v2735 = vand.u32 %v2734, 4294901760
      %v2736 = vsub.f32 %v2734, %v2735
      %v2737 = vand.u32 %v2736, 4294901760
      %2738 = vmatpush1.msra.mxu0 %v2737
      %2739 = vmatprep.subr.mxu0 0.0
      %v2740 = vand.u32 %v252, 4294901760
      %v2741 = vsub.f32 %v252, %v2740
      %v2742 = vand.u32 %v2741, 4294901760
      %v2743 = vsub.f32 %v2741, %v2742
      %v2744 = vand.u32 %v2743, 4294901760
      %2745 = vmatpush1.msra.mxu0 %v2744
      %2746 = vmatprep.subr.mxu0 0.0
      %v2747 = vand.u32 %v253, 4294901760
      %v2748 = vsub.f32 %v253, %v2747
      %v2749 = vand.u32 %v2748, 4294901760
      %v2750 = vsub.f32 %v2748, %v2749
      %v2751 = vand.u32 %v2750, 4294901760
      %2752 = vmatpush1.msra.mxu0 %v2751
      %2753 = vmatprep.subr.mxu0 0.0
      %v2754 = vand.u32 %v254, 4294901760
      %v2755 = vsub.f32 %v254, %v2754
      %v2756 = vand.u32 %v2755, 4294901760
      %v2757 = vsub.f32 %v2755, %v2756
      %v2758 = vand.u32 %v2757, 4294901760
      %2759 = vmatpush1.msra.mxu0 %v2758
      %2760 = vmatprep.subr.mxu0 0.0
      %v2761 = vand.u32 %v255, 4294901760
      %v2762 = vsub.f32 %v255, %v2761
      %v2763 = vand.u32 %v2762, 4294901760
      %v2764 = vsub.f32 %v2762, %v2763
      %v2765 = vand.u32 %v2764, 4294901760
      %2766 = vmatpush1.msra.mxu0 %v2765
      %2767 = vmatprep.subr.mxu0 0.0
      %v2768 = vand.u32 %v256, 4294901760
      %v2769 = vsub.f32 %v256, %v2768
      %v2770 = vand.u32 %v2769, 4294901760
      %v2771 = vsub.f32 %v2769, %v2770
      %v2772 = vand.u32 %v2771, 4294901760
      %2773 = vmatpush1.msra.mxu0 %v2772
      %2774 = vmatprep.subr.mxu0 0.0
      %v2775 = vand.u32 %v257, 4294901760
      %v2776 = vsub.f32 %v257, %v2775
      %v2777 = vand.u32 %v2776, 4294901760
      %v2778 = vsub.f32 %v2776, %v2777
      %v2779 = vand.u32 %v2778, 4294901760
      %2780 = vmatpush1.msra.mxu0 %v2779
      %2781 = vmatprep.subr.mxu0 0.0
      %v2782 = vand.u32 %v258, 4294901760
      %v2783 = vsub.f32 %v258, %v2782
      %v2784 = vand.u32 %v2783, 4294901760
      %v2785 = vsub.f32 %v2783, %v2784
      %v2786 = vand.u32 %v2785, 4294901760
      %2787 = vmatpush1.msra.mxu0 %v2786
      %2788 = vmatprep.subr.mxu0 0.0
      %v2789 = vand.u32 %v259, 4294901760
      %v2790 = vsub.f32 %v259, %v2789
      %v2791 = vand.u32 %v2790, 4294901760
      %v2792 = vsub.f32 %v2790, %v2791
      %v2793 = vand.u32 %v2792, 4294901760
      %2794 = vmatpush1.msra.mxu0 %v2793
      %2795 = vmatprep.subr.mxu0 0.0
      %v2796 = vand.u32 %v260, 4294901760
      %v2797 = vsub.f32 %v260, %v2796
      %v2798 = vand.u32 %v2797, 4294901760
      %v2799 = vsub.f32 %v2797, %v2798
      %v2800 = vand.u32 %v2799, 4294901760
      %2801 = vmatpush1.msra.mxu0 %v2800
      %2802 = vmatprep.subr.mxu0 0.0
      %v2803 = vand.u32 %v261, 4294901760
      %v2804 = vsub.f32 %v261, %v2803
      %v2805 = vand.u32 %v2804, 4294901760
      %v2806 = vsub.f32 %v2804, %v2805
      %v2807 = vand.u32 %v2806, 4294901760
      %2808 = vmatpush1.msra.mxu0 %v2807
      %2809 = vmatprep.subr.mxu0 0.0
      %v2810 = vand.u32 %v262, 4294901760
      %v2811 = vsub.f32 %v262, %v2810
      %v2812 = vand.u32 %v2811, 4294901760
      %v2813 = vsub.f32 %v2811, %v2812
      %v2814 = vand.u32 %v2813, 4294901760
      %2815 = vmatpush1.msra.mxu0 %v2814
      %2816 = vmatprep.subr.mxu0 0.0
      %v2817 = vand.u32 %v2267, 4294901760
      %v2818 = vsub.f32 %v2267, %v2817
      %v2819 = vand.u32 %v2818, 4294901760
      %v2820 = vsub.f32 %v2818, %v2819
      %v2821 = vand.u32 %v2820, 4294901760
      %2822 = vmatpush1.msra.mxu0 %v2821
      %2823 = vmatprep.subr.mxu0 0.0
      %2824 = vmatpush1.msra.mxu0 0.0
      %2825 = vmatprep.subr.mxu0 0.0
      %2826 = vmatpush1.msra.mxu0 0.0
      %2827 = vmatprep.subr.mxu0 0.0
      %2828 = vmatpush1.msra.mxu0 0.0
      %2829 = vmatprep.subr.mxu0 0.0
      %2830 = vmatpush1.msra.mxu0 0.0
      %2831 = vmatprep.subr.mxu0 0.0
      %2832 = vmatpush1.msra.mxu0 0.0
      %2833 = vmatprep.subr.mxu0 0.0
      %2834 = vmatpush1.msra.mxu0 0.0
      %2835 = vmatprep.subr.mxu0 0.0
      %2836 = vmatpush1.msra.mxu0 0.0
      %2837 = vmatprep.subr.mxu0 0.0
      %2838 = vmatpush1.msra.mxu0 0.0
      %2839 = vmatprep.subr.mxu0 0.0
      %2840 = vmatpush1.msra.mxu0 0.0
      %2841 = vmatprep.subr.mxu0 0.0
      %2842 = vmatpush1.msra.mxu0 0.0
      %2843 = vmatprep.subr.mxu0 0.0
      %2844 = vmatpush1.msra.mxu0 0.0
      %2845 = vmatprep.subr.mxu0 0.0
      %2846 = vmatpush1.msra.mxu0 0.0
      %2847 = vmatprep.subr.mxu0 0.0
      %2848 = vmatpush1.msra.mxu0 0.0
      %2849 = vmatprep.subr.mxu0 0.0
      %2850 = vmatpush1.msra.mxu0 0.0
      %v2851 = vand.u32 %v312, 4294901760
      %2852 = vmatprep.mubr.f32.mxu0 %v2851
      %v2853 = vand.u32 %v264, 4294901760
      %2854 = vmatmul.mubr.f32.gmra.mrb[0].mxu0 %v2853
      %v2855 = vpop.f32.mrb[0].mxu0
      %v2856 = vadd.f32 %v2364, %v2855
      %v2857 = vpop.f32.mrb[0].mxu0
      %v2858 = vand.u32 %v315, 4294901760
      %2859 = vmatprep.mubr.f32.mxu0 %v2858
      %v2860 = vand.u32 %v266, 4294901760
      %2861 = vmatmul.mubr.f32.gmra.mrb[0].mxu0 %v2860
      %v2862 = vpop.f32.mrb[0].mxu0
      %v2863 = vadd.f32 %v2379, %v2862
      %v2864 = vpop.f32.mrb[0].mxu0
      %v2865 = vand.u32 %v318, 4294901760
      %2866 = vmatprep.mubr.f32.mxu0 %v2865
      %v2867 = vand.u32 %v268, 4294901760
      %2868 = vmatmul.mubr.f32.gmra.mrb[0].mxu0 %v2867
      %v2869 = vpop.f32.mrb[0].mxu0
      %v2870 = vadd.f32 %v2394, %v2869
      %v2871 = vpop.f32.mrb[0].mxu0
      %v2872 = vand.u32 %v321, 4294901760
      %2873 = vmatprep.mubr.f32.mxu0 %v2872
      %v2874 = vand.u32 %v270, 4294901760
      %2875 = vmatmul.mubr.f32.gmra.mrb[0].mxu0 %v2874
      %v2876 = vpop.f32.mrb[0].mxu0
      %v2877 = vadd.f32 %v2409, %v2876
      %v2878 = vpop.f32.mrb[0].mxu0
      %v2879 = vand.u32 %v324, 4294901760
      %2880 = vmatprep.mubr.f32.mxu0 %v2879
      %v2881 = vand.u32 %v272, 4294901760
      %2882 = vmatmul.mubr.f32.gmra.mrb[0].mxu0 %v2881
      %v2883 = vpop.f32.mrb[0].mxu0
      %v2884 = vadd.f32 %v2424, %v2883
      %v2885 = vpop.f32.mrb[0].mxu0
      %v2886 = vand.u32 %v327, 4294901760
      %2887 = vmatprep.mubr.f32.mxu0 %v2886
      %v2888 = vand.u32 %v274, 4294901760
      %2889 = vmatmul.mubr.f32.gmra.mrb[0].mxu0 %v2888
      %v2890 = vpop.f32.mrb[0].mxu0
      %v2891 = vadd.f32 %v2439, %v2890
      %v2892 = vpop.f32.mrb[0].mxu0
      %v2893 = vand.u32 %v330, 4294901760
      %2894 = vmatprep.mubr.f32.mxu0 %v2893
      %v2895 = vand.u32 %v276, 4294901760
      %2896 = vmatmul.mubr.f32.gmra.mrb[0].mxu0 %v2895
      %v2897 = vpop.f32.mrb[0].mxu0
      %v2898 = vadd.f32 %v2454, %v2897
      %v2899 = vpop.f32.mrb[0].mxu0
      %v2900 = vand.u32 %v333, 4294901760
      %2901 = vmatprep.mubr.f32.mxu0 %v2900
      %v2902 = vand.u32 %v278, 4294901760
      %2903 = vmatmul.mubr.f32.gmra.mrb[0].mxu0 %v2902
      %v2904 = vpop.f32.mrb[0].mxu0
      %v2905 = vadd.f32 %v2469, %v2904
      %v2906 = vpop.f32.mrb[0].mxu0
      %v2907 = vand.u32 %v336, 4294901760
      %2908 = vmatprep.mubr.f32.mxu0 %v2907
      %v2909 = vand.u32 %v280, 4294901760
      %2910 = vmatmul.mubr.f32.gmra.mrb[0].mxu0 %v2909
      %v2911 = vpop.f32.mrb[0].mxu0
      %v2912 = vadd.f32 %v2484, %v2911
      %v2913 = vpop.f32.mrb[0].mxu0
      %v2914 = vand.u32 %v339, 4294901760
      %2915 = vmatprep.mubr.f32.mxu0 %v2914
      %v2916 = vand.u32 %v282, 4294901760
      %2917 = vmatmul.mubr.f32.gmra.mrb[0].mxu0 %v2916
      %v2918 = vpop.f32.mrb[0].mxu0
      %v2919 = vadd.f32 %v2499, %v2918
      %v2920 = vpop.f32.mrb[0].mxu0
      %v2921 = vand.u32 %v342, 4294901760
      %2922 = vmatprep.mubr.f32.mxu0 %v2921
      %v2923 = vand.u32 %v284, 4294901760
      %2924 = vmatmul.mubr.f32.gmra.mrb[0].mxu0 %v2923
      %v2925 = vpop.f32.mrb[0].mxu0
      %v2926 = vadd.f32 %v2514, %v2925
      %v2927 = vpop.f32.mrb[0].mxu0
      %v2928 = vand.u32 %v345, 4294901760
      %2929 = vmatprep.mubr.f32.mxu0 %v2928
      %v2930 = vand.u32 %v286, 4294901760
      %2931 = vmatmul.mubr.f32.gmra.mrb[0].mxu0 %v2930
      %v2932 = vpop.f32.mrb[0].mxu0
      %v2933 = vadd.f32 %v2529, %v2932
      %v2934 = vpop.f32.mrb[0].mxu0
      %v2935 = vand.u32 %v348, 4294901760
      %2936 = vmatprep.mubr.f32.mxu0 %v2935
      %v2937 = vand.u32 %v288, 4294901760
      %2938 = vmatmul.mubr.f32.gmra.mrb[0].mxu0 %v2937
      %v2939 = vpop.f32.mrb[0].mxu0
      %v2940 = vadd.f32 %v2544, %v2939
      %v2941 = vpop.f32.mrb[0].mxu0
      %v2942 = vand.u32 %v351, 4294901760
      %2943 = vmatprep.mubr.f32.mxu0 %v2942
      %v2944 = vand.u32 %v290, 4294901760
      %2945 = vmatmul.mubr.f32.gmra.mrb[0].mxu0 %v2944
      %v2946 = vpop.f32.mrb[0].mxu0
      %v2947 = vadd.f32 %v2559, %v2946
      %v2948 = vpop.f32.mrb[0].mxu0
      %v2949 = vand.u32 %v354, 4294901760
      %2950 = vmatprep.mubr.f32.mxu0 %v2949
      %v2951 = vand.u32 %v292, 4294901760
      %2952 = vmatmul.mubr.f32.gmra.mrb[0].mxu0 %v2951
      %v2953 = vpop.f32.mrb[0].mxu0
      %v2954 = vadd.f32 %v2574, %v2953
      %v2955 = vpop.f32.mrb[0].mxu0
      %v2956 = vand.u32 %v357, 4294901760
      %2957 = vmatprep.mubr.f32.mxu0 %v2956
      %v2958 = vand.u32 %v294, 4294901760
      %2959 = vmatmul.mubr.f32.gmra.mrb[0].mxu0 %v2958
      %v2960 = vpop.f32.mrb[0].mxu0
      %v2961 = vadd.f32 %v2589, %v2960
      %v2962 = vpop.f32.mrb[0].mxu0
      %v2963 = vand.u32 %v360, 4294901760
      %2964 = vmatprep.mubr.f32.mxu0 %v2963
      %v2965 = vand.u32 %v296, 4294901760
      %2966 = vmatmul.mubr.f32.gmra.mrb[0].mxu0 %v2965
      %v2967 = vpop.f32.mrb[0].mxu0
      %v2968 = vadd.f32 %v2604, %v2967
      %v2969 = vpop.f32.mrb[0].mxu0
      %v2970 = vand.u32 %v363, 4294901760
      %2971 = vmatprep.mubr.f32.mxu0 %v2970
      %v2972 = vand.u32 %v298, 4294901760
      %2973 = vmatmul.mubr.f32.gmra.mrb[0].mxu0 %v2972
      %v2974 = vpop.f32.mrb[0].mxu0
      %v2975 = vadd.f32 %v2619, %v2974
      %v2976 = vpop.f32.mrb[0].mxu0
      %v2977 = vand.u32 %v366, 4294901760
      %2978 = vmatprep.mubr.f32.mxu0 %v2977
      %v2979 = vand.u32 %v300, 4294901760
      %2980 = vmatmul.mubr.f32.gmra.mrb[0].mxu0 %v2979
      %v2981 = vpop.f32.mrb[0].mxu0
      %v2982 = vadd.f32 %v2634, %v2981
      %v2983 = vpop.f32.mrb[0].mxu0
      %v2984 = vand.u32 %v369, 4294901760
      %2985 = vmatprep.mubr.f32.mxu0 %v2984
      %v2986 = vand.u32 %v302, 4294901760
      %2987 = vmatmul.mubr.f32.gmra.mrb[0].mxu0 %v2986
      %v2988 = vpop.f32.mrb[0].mxu0
      %v2989 = vadd.f32 %v2649, %v2988
      %v2990 = vpop.f32.mrb[0].mxu0
      %v2991 = vand.u32 %v372, 4294901760
      %2992 = vmatprep.mubr.f32.mxu0 %v2991
      %v2993 = vand.u32 %v304, 4294901760
      %2994 = vmatmul.mubr.f32.gmra.mrb[0].mxu0 %v2993
      %v2995 = vpop.f32.mrb[0].mxu0
      %v2996 = vadd.f32 %v2664, %v2995
      %v2997 = vpop.f32.mrb[0].mxu0
      %v2998 = vand.u32 %v375, 4294901760
      %2999 = vmatprep.mubr.f32.mxu0 %v2998
      %v3000 = vand.u32 %v306, 4294901760
      %3001 = vmatmul.mubr.f32.gmra.mrb[0].mxu0 %v3000
      %v3002 = vpop.f32.mrb[0].mxu0
      %v3003 = vadd.f32 %v2679, %v3002
      %v3004 = vpop.f32.mrb[0].mxu0
      %v3005 = vand.u32 %v378, 4294901760
      %3006 = vmatprep.mubr.f32.mxu0 %v3005
      %v3007 = vand.u32 %v308, 4294901760
      %3008 = vmatmul.mubr.f32.gmra.mrb[0].mxu0 %v3007
      %v3009 = vpop.f32.mrb[0].mxu0
      %v3010 = vadd.f32 %v2694, %v3009
      %v3011 = vpop.f32.mrb[0].mxu0
      %3012 = vdwg.mxu0
      %3013 = vmatprep.subr.mxu0 0.0
      %v3014 = vand.u32 %v246, 4294901760
      %v3015 = vsub.f32 %v246, %v3014
      %3016 = vmatpush1.msra.mxu0 %v3015
      %3017 = vmatprep.subr.mxu0 0.0
      %v3018 = vand.u32 %v247, 4294901760
      %v3019 = vsub.f32 %v247, %v3018
      %3020 = vmatpush1.msra.mxu0 %v3019
      %3021 = vmatprep.subr.mxu0 0.0
      %v3022 = vand.u32 %v248, 4294901760
      %v3023 = vsub.f32 %v248, %v3022
      %3024 = vmatpush1.msra.mxu0 %v3023
      %3025 = vmatprep.subr.mxu0 0.0
      %v3026 = vand.u32 %v249, 4294901760
      %v3027 = vsub.f32 %v249, %v3026
      %3028 = vmatpush1.msra.mxu0 %v3027
      %3029 = vmatprep.subr.mxu0 0.0
      %v3030 = vand.u32 %v250, 4294901760
      %v3031 = vsub.f32 %v250, %v3030
      %3032 = vmatpush1.msra.mxu0 %v3031
      %3033 = vmatprep.subr.mxu0 0.0
      %v3034 = vand.u32 %v251, 4294901760
      %v3035 = vsub.f32 %v251, %v3034
      %3036 = vmatpush1.msra.mxu0 %v3035
      %3037 = vmatprep.subr.mxu0 0.0
      %v3038 = vand.u32 %v252, 4294901760
      %v3039 = vsub.f32 %v252, %v3038
      %3040 = vmatpush1.msra.mxu0 %v3039
      %3041 = vmatprep.subr.mxu0 0.0
      %v3042 = vand.u32 %v253, 4294901760
      %v3043 = vsub.f32 %v253, %v3042
      %3044 = vmatpush1.msra.mxu0 %v3043
      %3045 = vmatprep.subr.mxu0 0.0
      %v3046 = vand.u32 %v254, 4294901760
      %v3047 = vsub.f32 %v254, %v3046
      %3048 = vmatpush1.msra.mxu0 %v3047
      %3049 = vmatprep.subr.mxu0 0.0
      %v3050 = vand.u32 %v255, 4294901760
      %v3051 = vsub.f32 %v255, %v3050
      %3052 = vmatpush1.msra.mxu0 %v3051
      %3053 = vmatprep.subr.mxu0 0.0
      %v3054 = vand.u32 %v256, 4294901760
      %v3055 = vsub.f32 %v256, %v3054
      %3056 = vmatpush1.msra.mxu0 %v3055
      %3057 = vmatprep.subr.mxu0 0.0
      %v3058 = vand.u32 %v257, 4294901760
      %v3059 = vsub.f32 %v257, %v3058
      %3060 = vmatpush1.msra.mxu0 %v3059
      %3061 = vmatprep.subr.mxu0 0.0
      %v3062 = vand.u32 %v258, 4294901760
      %v3063 = vsub.f32 %v258, %v3062
      %3064 = vmatpush1.msra.mxu0 %v3063
      %3065 = vmatprep.subr.mxu0 0.0
      %v3066 = vand.u32 %v259, 4294901760
      %v3067 = vsub.f32 %v259, %v3066
      %3068 = vmatpush1.msra.mxu0 %v3067
      %3069 = vmatprep.subr.mxu0 0.0
      %v3070 = vand.u32 %v260, 4294901760
      %v3071 = vsub.f32 %v260, %v3070
      %3072 = vmatpush1.msra.mxu0 %v3071
      %3073 = vmatprep.subr.mxu0 0.0
      %v3074 = vand.u32 %v261, 4294901760
      %v3075 = vsub.f32 %v261, %v3074
      %3076 = vmatpush1.msra.mxu0 %v3075
      %3077 = vmatprep.subr.mxu0 0.0
      %v3078 = vand.u32 %v262, 4294901760
      %v3079 = vsub.f32 %v262, %v3078
      %3080 = vmatpush1.msra.mxu0 %v3079
      %3081 = vmatprep.subr.mxu0 0.0
      %v3082 = vand.u32 %v2267, 4294901760
      %v3083 = vsub.f32 %v2267, %v3082
      %3084 = vmatpush1.msra.mxu0 %v3083
      %3085 = vmatprep.subr.mxu0 0.0
      %3086 = vmatpush1.msra.mxu0 0.0
      %3087 = vmatprep.subr.mxu0 0.0
      %3088 = vmatpush1.msra.mxu0 0.0
      %3089 = vmatprep.subr.mxu0 0.0
      %3090 = vmatpush1.msra.mxu0 0.0
      %3091 = vmatprep.subr.mxu0 0.0
      %3092 = vmatpush1.msra.mxu0 0.0
      %3093 = vmatprep.subr.mxu0 0.0
      %3094 = vmatpush1.msra.mxu0 0.0
      %3095 = vmatprep.subr.mxu0 0.0
      %3096 = vmatpush1.msra.mxu0 0.0
      %3097 = vmatprep.subr.mxu0 0.0
      %3098 = vmatpush1.msra.mxu0 0.0
      %3099 = vmatprep.subr.mxu0 0.0
      %3100 = vmatpush1.msra.mxu0 0.0
      %3101 = vmatprep.subr.mxu0 0.0
      %3102 = vmatpush1.msra.mxu0 0.0
      %3103 = vmatprep.subr.mxu0 0.0
      %3104 = vmatpush1.msra.mxu0 0.0
      %3105 = vmatprep.subr.mxu0 0.0
      %3106 = vmatpush1.msra.mxu0 0.0
      %3107 = vmatprep.subr.mxu0 0.0
      %3108 = vmatpush1.msra.mxu0 0.0
      %3109 = vmatprep.subr.mxu0 0.0
      %3110 = vmatpush1.msra.mxu0 0.0
      %3111 = vmatprep.subr.mxu0 0.0
      %3112 = vmatpush1.msra.mxu0 0.0
      %v3113 = vand.u32 %v312, 4294901760
      %v3114 = vsub.f32 %v312, %v3113
      %3115 = vmatprep.mubr.f32.mxu0 %v3114
      %v3116 = vand.u32 %v264, 4294901760
      %v3117 = vsub.f32 %v264, %v3116
      %3118 = vmatmul.mubr.f32.gmra.mrb[0].mxu0 %v3117
      %v3119 = vpop.f32.mrb[0].mxu0
      %v3120 = vadd.f32 %v2856, %v3119
      %v3121 = vpop.f32.mrb[0].mxu0
      %v3122 = vand.u32 %v315, 4294901760
      %v3123 = vsub.f32 %v315, %v3122
      %3124 = vmatprep.mubr.f32.mxu0 %v3123
      %v3125 = vand.u32 %v266, 4294901760
      %v3126 = vsub.f32 %v266, %v3125
      %3127 = vmatmul.mubr.f32.gmra.mrb[0].mxu0 %v3126
      %v3128 = vpop.f32.mrb[0].mxu0
      %v3129 = vadd.f32 %v2863, %v3128
      %v3130 = vpop.f32.mrb[0].mxu0
      %v3131 = vand.u32 %v318, 4294901760
      %v3132 = vsub.f32 %v318, %v3131
      %3133 = vmatprep.mubr.f32.mxu0 %v3132
      %v3134 = vand.u32 %v268, 4294901760
      %v3135 = vsub.f32 %v268, %v3134
      %3136 = vmatmul.mubr.f32.gmra.mrb[0].mxu0 %v3135
      %v3137 = vpop.f32.mrb[0].mxu0
      %v3138 = vadd.f32 %v2870, %v3137
      %v3139 = vpop.f32.mrb[0].mxu0
      %v3140 = vand.u32 %v321, 4294901760
      %v3141 = vsub.f32 %v321, %v3140
      %3142 = vmatprep.mubr.f32.mxu0 %v3141
      %v3143 = vand.u32 %v270, 4294901760
      %v3144 = vsub.f32 %v270, %v3143
      %3145 = vmatmul.mubr.f32.gmra.mrb[0].mxu0 %v3144
      %v3146 = vpop.f32.mrb[0].mxu0
      %v3147 = vadd.f32 %v2877, %v3146
      %v3148 = vpop.f32.mrb[0].mxu0
      %v3149 = vand.u32 %v324, 4294901760
      %v3150 = vsub.f32 %v324, %v3149
      %3151 = vmatprep.mubr.f32.mxu0 %v3150
      %v3152 = vand.u32 %v272, 4294901760
      %v3153 = vsub.f32 %v272, %v3152
      %3154 = vmatmul.mubr.f32.gmra.mrb[0].mxu0 %v3153
      %v3155 = vpop.f32.mrb[0].mxu0
      %v3156 = vadd.f32 %v2884, %v3155
      %v3157 = vpop.f32.mrb[0].mxu0
      %v3158 = vand.u32 %v327, 4294901760
      %v3159 = vsub.f32 %v327, %v3158
      %3160 = vmatprep.mubr.f32.mxu0 %v3159
      %v3161 = vand.u32 %v274, 4294901760
      %v3162 = vsub.f32 %v274, %v3161
      %3163 = vmatmul.mubr.f32.gmra.mrb[0].mxu0 %v3162
      %v3164 = vpop.f32.mrb[0].mxu0
      %v3165 = vadd.f32 %v2891, %v3164
      %v3166 = vpop.f32.mrb[0].mxu0
      %v3167 = vand.u32 %v330, 4294901760
      %v3168 = vsub.f32 %v330, %v3167
      %3169 = vmatprep.mubr.f32.mxu0 %v3168
      %v3170 = vand.u32 %v276, 4294901760
      %v3171 = vsub.f32 %v276, %v3170
      %3172 = vmatmul.mubr.f32.gmra.mrb[0].mxu0 %v3171
      %v3173 = vpop.f32.mrb[0].mxu0
      %v3174 = vadd.f32 %v2898, %v3173
      %v3175 = vpop.f32.mrb[0].mxu0
      %v3176 = vand.u32 %v333, 4294901760
      %v3177 = vsub.f32 %v333, %v3176
      %3178 = vmatprep.mubr.f32.mxu0 %v3177
      %v3179 = vand.u32 %v278, 4294901760
      %v3180 = vsub.f32 %v278, %v3179
      %3181 = vmatmul.mubr.f32.gmra.mrb[0].mxu0 %v3180
      %v3182 = vpop.f32.mrb[0].mxu0
      %v3183 = vadd.f32 %v2905, %v3182
      %v3184 = vpop.f32.mrb[0].mxu0
      %v3185 = vand.u32 %v336, 4294901760
      %v3186 = vsub.f32 %v336, %v3185
      %3187 = vmatprep.mubr.f32.mxu0 %v3186
      %v3188 = vand.u32 %v280, 4294901760
      %v3189 = vsub.f32 %v280, %v3188
      %3190 = vmatmul.mubr.f32.gmra.mrb[0].mxu0 %v3189
      %v3191 = vpop.f32.mrb[0].mxu0
      %v3192 = vadd.f32 %v2912, %v3191
      %v3193 = vpop.f32.mrb[0].mxu0
      %v3194 = vand.u32 %v339, 4294901760
      %v3195 = vsub.f32 %v339, %v3194
      %3196 = vmatprep.mubr.f32.mxu0 %v3195
      %v3197 = vand.u32 %v282, 4294901760
      %v3198 = vsub.f32 %v282, %v3197
      %3199 = vmatmul.mubr.f32.gmra.mrb[0].mxu0 %v3198
      %v3200 = vpop.f32.mrb[0].mxu0
      %v3201 = vadd.f32 %v2919, %v3200
      %v3202 = vpop.f32.mrb[0].mxu0
      %v3203 = vand.u32 %v342, 4294901760
      %v3204 = vsub.f32 %v342, %v3203
      %3205 = vmatprep.mubr.f32.mxu0 %v3204
      %v3206 = vand.u32 %v284, 4294901760
      %v3207 = vsub.f32 %v284, %v3206
      %3208 = vmatmul.mubr.f32.gmra.mrb[0].mxu0 %v3207
      %v3209 = vpop.f32.mrb[0].mxu0
      %v3210 = vadd.f32 %v2926, %v3209
      %v3211 = vpop.f32.mrb[0].mxu0
      %v3212 = vand.u32 %v345, 4294901760
      %v3213 = vsub.f32 %v345, %v3212
      %3214 = vmatprep.mubr.f32.mxu0 %v3213
      %v3215 = vand.u32 %v286, 4294901760
      %v3216 = vsub.f32 %v286, %v3215
      %3217 = vmatmul.mubr.f32.gmra.mrb[0].mxu0 %v3216
      %v3218 = vpop.f32.mrb[0].mxu0
      %v3219 = vadd.f32 %v2933, %v3218
      %v3220 = vpop.f32.mrb[0].mxu0
      %v3221 = vand.u32 %v348, 4294901760
      %v3222 = vsub.f32 %v348, %v3221
      %3223 = vmatprep.mubr.f32.mxu0 %v3222
      %v3224 = vand.u32 %v288, 4294901760
      %v3225 = vsub.f32 %v288, %v3224
      %3226 = vmatmul.mubr.f32.gmra.mrb[0].mxu0 %v3225
      %v3227 = vpop.f32.mrb[0].mxu0
      %v3228 = vadd.f32 %v2940, %v3227
      %v3229 = vpop.f32.mrb[0].mxu0
      %v3230 = vand.u32 %v351, 4294901760
      %v3231 = vsub.f32 %v351, %v3230
      %3232 = vmatprep.mubr.f32.mxu0 %v3231
      %v3233 = vand.u32 %v290, 4294901760
      %v3234 = vsub.f32 %v290, %v3233
      %3235 = vmatmul.mubr.f32.gmra.mrb[0].mxu0 %v3234
      %v3236 = vpop.f32.mrb[0].mxu0
      %v3237 = vadd.f32 %v2947, %v3236
      %v3238 = vpop.f32.mrb[0].mxu0
      %v3239 = vand.u32 %v354, 4294901760
      %v3240 = vsub.f32 %v354, %v3239
      %3241 = vmatprep.mubr.f32.mxu0 %v3240
      %v3242 = vand.u32 %v292, 4294901760
      %v3243 = vsub.f32 %v292, %v3242
      %3244 = vmatmul.mubr.f32.gmra.mrb[0].mxu0 %v3243
      %v3245 = vpop.f32.mrb[0].mxu0
      %v3246 = vadd.f32 %v2954, %v3245
      %v3247 = vpop.f32.mrb[0].mxu0
      %v3248 = vand.u32 %v357, 4294901760
      %v3249 = vsub.f32 %v357, %v3248
      %3250 = vmatprep.mubr.f32.mxu0 %v3249
      %v3251 = vand.u32 %v294, 4294901760
      %v3252 = vsub.f32 %v294, %v3251
      %3253 = vmatmul.mubr.f32.gmra.mrb[0].mxu0 %v3252
      %v3254 = vpop.f32.mrb[0].mxu0
      %v3255 = vadd.f32 %v2961, %v3254
      %v3256 = vpop.f32.mrb[0].mxu0
      %v3257 = vand.u32 %v360, 4294901760
      %v3258 = vsub.f32 %v360, %v3257
      %3259 = vmatprep.mubr.f32.mxu0 %v3258
      %v3260 = vand.u32 %v296, 4294901760
      %v3261 = vsub.f32 %v296, %v3260
      %3262 = vmatmul.mubr.f32.gmra.mrb[0].mxu0 %v3261
      %v3263 = vpop.f32.mrb[0].mxu0
      %v3264 = vadd.f32 %v2968, %v3263
      %v3265 = vpop.f32.mrb[0].mxu0
      %v3266 = vand.u32 %v363, 4294901760
      %v3267 = vsub.f32 %v363, %v3266
      %3268 = vmatprep.mubr.f32.mxu0 %v3267
      %v3269 = vand.u32 %v298, 4294901760
      %v3270 = vsub.f32 %v298, %v3269
      %3271 = vmatmul.mubr.f32.gmra.mrb[0].mxu0 %v3270
      %v3272 = vpop.f32.mrb[0].mxu0
      %v3273 = vadd.f32 %v2975, %v3272
      %v3274 = vpop.f32.mrb[0].mxu0
      %v3275 = vand.u32 %v366, 4294901760
      %v3276 = vsub.f32 %v366, %v3275
      %3277 = vmatprep.mubr.f32.mxu0 %v3276
      %v3278 = vand.u32 %v300, 4294901760
      %v3279 = vsub.f32 %v300, %v3278
      %3280 = vmatmul.mubr.f32.gmra.mrb[0].mxu0 %v3279
      %v3281 = vpop.f32.mrb[0].mxu0
      %v3282 = vadd.f32 %v2982, %v3281
      %v3283 = vpop.f32.mrb[0].mxu0
      %v3284 = vand.u32 %v369, 4294901760
      %v3285 = vsub.f32 %v369, %v3284
      %3286 = vmatprep.mubr.f32.mxu0 %v3285
      %v3287 = vand.u32 %v302, 4294901760
      %v3288 = vsub.f32 %v302, %v3287
      %3289 = vmatmul.mubr.f32.gmra.mrb[0].mxu0 %v3288
      %v3290 = vpop.f32.mrb[0].mxu0
      %v3291 = vadd.f32 %v2989, %v3290
      %v3292 = vpop.f32.mrb[0].mxu0
      %v3293 = vand.u32 %v372, 4294901760
      %v3294 = vsub.f32 %v372, %v3293
      %3295 = vmatprep.mubr.f32.mxu0 %v3294
      %v3296 = vand.u32 %v304, 4294901760
      %v3297 = vsub.f32 %v304, %v3296
      %3298 = vmatmul.mubr.f32.gmra.mrb[0].mxu0 %v3297
      %v3299 = vpop.f32.mrb[0].mxu0
      %v3300 = vadd.f32 %v2996, %v3299
      %v3301 = vpop.f32.mrb[0].mxu0
      %v3302 = vand.u32 %v375, 4294901760
      %v3303 = vsub.f32 %v375, %v3302
      %3304 = vmatprep.mubr.f32.mxu0 %v3303
      %v3305 = vand.u32 %v306, 4294901760
      %v3306 = vsub.f32 %v306, %v3305
      %3307 = vmatmul.mubr.f32.gmra.mrb[0].mxu0 %v3306
      %v3308 = vpop.f32.mrb[0].mxu0
      %v3309 = vadd.f32 %v3003, %v3308
      %v3310 = vpop.f32.mrb[0].mxu0
      %v3311 = vand.u32 %v378, 4294901760
      %v3312 = vsub.f32 %v378, %v3311
      %3313 = vmatprep.mubr.f32.mxu0 %v3312
      %v3314 = vand.u32 %v308, 4294901760
      %v3315 = vsub.f32 %v308, %v3314
      %3316 = vmatmul.mubr.f32.gmra.mrb[0].mxu0 %v3315
      %v3317 = vpop.f32.mrb[0].mxu0
      %v3318 = vadd.f32 %v3010, %v3317
      %v3319 = vpop.f32.mrb[0].mxu0
      %3320 = vdwg.mxu0
      %3321 = vmatprep.subr.mxu0 0.0
      %v3322 = vand.u32 %v246, 4294901760
      %3323 = vmatpush1.msra.mxu0 %v3322
      %3324 = vmatprep.subr.mxu0 0.0
      %v3325 = vand.u32 %v247, 4294901760
      %3326 = vmatpush1.msra.mxu0 %v3325
      %3327 = vmatprep.subr.mxu0 0.0
      %v3328 = vand.u32 %v248, 4294901760
      %3329 = vmatpush1.msra.mxu0 %v3328
      %3330 = vmatprep.subr.mxu0 0.0
      %v3331 = vand.u32 %v249, 4294901760
      %3332 = vmatpush1.msra.mxu0 %v3331
      %3333 = vmatprep.subr.mxu0 0.0
      %v3334 = vand.u32 %v250, 4294901760
      %3335 = vmatpush1.msra.mxu0 %v3334
      %3336 = vmatprep.subr.mxu0 0.0
      %v3337 = vand.u32 %v251, 4294901760
      %3338 = vmatpush1.msra.mxu0 %v3337
      %3339 = vmatprep.subr.mxu0 0.0
      %v3340 = vand.u32 %v252, 4294901760
      %3341 = vmatpush1.msra.mxu0 %v3340
      %3342 = vmatprep.subr.mxu0 0.0
      %v3343 = vand.u32 %v253, 4294901760
      %3344 = vmatpush1.msra.mxu0 %v3343
      %3345 = vmatprep.subr.mxu0 0.0
      %v3346 = vand.u32 %v254, 4294901760
      %3347 = vmatpush1.msra.mxu0 %v3346
      %3348 = vmatprep.subr.mxu0 0.0
      %v3349 = vand.u32 %v255, 4294901760
      %3350 = vmatpush1.msra.mxu0 %v3349
      %3351 = vmatprep.subr.mxu0 0.0
      %v3352 = vand.u32 %v256, 4294901760
      %3353 = vmatpush1.msra.mxu0 %v3352
      %3354 = vmatprep.subr.mxu0 0.0
      %v3355 = vand.u32 %v257, 4294901760
      %3356 = vmatpush1.msra.mxu0 %v3355
      %3357 = vmatprep.subr.mxu0 0.0
      %v3358 = vand.u32 %v258, 4294901760
      %3359 = vmatpush1.msra.mxu0 %v3358
      %3360 = vmatprep.subr.mxu0 0.0
      %v3361 = vand.u32 %v259, 4294901760
      %3362 = vmatpush1.msra.mxu0 %v3361
      %3363 = vmatprep.subr.mxu0 0.0
      %v3364 = vand.u32 %v260, 4294901760
      %3365 = vmatpush1.msra.mxu0 %v3364
      %3366 = vmatprep.subr.mxu0 0.0
      %v3367 = vand.u32 %v261, 4294901760
      %3368 = vmatpush1.msra.mxu0 %v3367
      %3369 = vmatprep.subr.mxu0 0.0
      %v3370 = vand.u32 %v262, 4294901760
      %3371 = vmatpush1.msra.mxu0 %v3370
      %3372 = vmatprep.subr.mxu0 0.0
      %v3373 = vand.u32 %v2267, 4294901760
      %3374 = vmatpush1.msra.mxu0 %v3373
      %3375 = vmatprep.subr.mxu0 0.0
      %3376 = vmatpush1.msra.mxu0 0.0
      %3377 = vmatprep.subr.mxu0 0.0
      %3378 = vmatpush1.msra.mxu0 0.0
      %3379 = vmatprep.subr.mxu0 0.0
      %3380 = vmatpush1.msra.mxu0 0.0
      %3381 = vmatprep.subr.mxu0 0.0
      %3382 = vmatpush1.msra.mxu0 0.0
      %3383 = vmatprep.subr.mxu0 0.0
      %3384 = vmatpush1.msra.mxu0 0.0
      %3385 = vmatprep.subr.mxu0 0.0
      %3386 = vmatpush1.msra.mxu0 0.0
      %3387 = vmatprep.subr.mxu0 0.0
      %3388 = vmatpush1.msra.mxu0 0.0
      %3389 = vmatprep.subr.mxu0 0.0
      %3390 = vmatpush1.msra.mxu0 0.0
      %3391 = vmatprep.subr.mxu0 0.0
      %3392 = vmatpush1.msra.mxu0 0.0
      %3393 = vmatprep.subr.mxu0 0.0
      %3394 = vmatpush1.msra.mxu0 0.0
      %3395 = vmatprep.subr.mxu0 0.0
      %3396 = vmatpush1.msra.mxu0 0.0
      %3397 = vmatprep.subr.mxu0 0.0
      %3398 = vmatpush1.msra.mxu0 0.0
      %3399 = vmatprep.subr.mxu0 0.0
      %3400 = vmatpush1.msra.mxu0 0.0
      %3401 = vmatprep.subr.mxu0 0.0
      %3402 = vmatpush1.msra.mxu0 0.0
      %v3403 = vand.u32 %v312, 4294901760
      %v3404 = vsub.f32 %v312, %v3403
      %v3405 = vand.u32 %v3404, 4294901760
      %3406 = vmatprep.mubr.f32.mxu0 %v3405
      %v3407 = vand.u32 %v264, 4294901760
      %v3408 = vsub.f32 %v264, %v3407
      %v3409 = vand.u32 %v3408, 4294901760
      %3410 = vmatmul.mubr.f32.gmra.mrb[0].mxu0 %v3409
      %v3411 = vpop.f32.mrb[0].mxu0
      %v3412 = vadd.f32 %v3120, %v3411
      %v3413 = vpop.f32.mrb[0].mxu0
      %v3414 = vand.u32 %v315, 4294901760
      %v3415 = vsub.f32 %v315, %v3414
      %v3416 = vand.u32 %v3415, 4294901760
      %3417 = vmatprep.mubr.f32.mxu0 %v3416
      %v3418 = vand.u32 %v266, 4294901760
      %v3419 = vsub.f32 %v266, %v3418
      %v3420 = vand.u32 %v3419, 4294901760
      %3421 = vmatmul.mubr.f32.gmra.mrb[0].mxu0 %v3420
      %v3422 = vpop.f32.mrb[0].mxu0
      %v3423 = vadd.f32 %v3129, %v3422
      %v3424 = vpop.f32.mrb[0].mxu0
      %v3425 = vand.u32 %v318, 4294901760
      %v3426 = vsub.f32 %v318, %v3425
      %v3427 = vand.u32 %v3426, 4294901760
      %3428 = vmatprep.mubr.f32.mxu0 %v3427
      %v3429 = vand.u32 %v268, 4294901760
      %v3430 = vsub.f32 %v268, %v3429
      %v3431 = vand.u32 %v3430, 4294901760
      %3432 = vmatmul.mubr.f32.gmra.mrb[0].mxu0 %v3431
      %v3433 = vpop.f32.mrb[0].mxu0
      %v3434 = vadd.f32 %v3138, %v3433
      %v3435 = vpop.f32.mrb[0].mxu0
      %v3436 = vand.u32 %v321, 4294901760
      %v3437 = vsub.f32 %v321, %v3436
      %v3438 = vand.u32 %v3437, 4294901760
      %3439 = vmatprep.mubr.f32.mxu0 %v3438
      %v3440 = vand.u32 %v270, 4294901760
      %v3441 = vsub.f32 %v270, %v3440
      %v3442 = vand.u32 %v3441, 4294901760
      %3443 = vmatmul.mubr.f32.gmra.mrb[0].mxu0 %v3442
      %v3444 = vpop.f32.mrb[0].mxu0
      %v3445 = vadd.f32 %v3147, %v3444
      %v3446 = vpop.f32.mrb[0].mxu0
      %v3447 = vand.u32 %v324, 4294901760
      %v3448 = vsub.f32 %v324, %v3447
      %v3449 = vand.u32 %v3448, 4294901760
      %3450 = vmatprep.mubr.f32.mxu0 %v3449
      %v3451 = vand.u32 %v272, 4294901760
      %v3452 = vsub.f32 %v272, %v3451
      %v3453 = vand.u32 %v3452, 4294901760
      %3454 = vmatmul.mubr.f32.gmra.mrb[0].mxu0 %v3453
      %v3455 = vpop.f32.mrb[0].mxu0
      %v3456 = vadd.f32 %v3156, %v3455
      %v3457 = vpop.f32.mrb[0].mxu0
      %v3458 = vand.u32 %v327, 4294901760
      %v3459 = vsub.f32 %v327, %v3458
      %v3460 = vand.u32 %v3459, 4294901760
      %3461 = vmatprep.mubr.f32.mxu0 %v3460
      %v3462 = vand.u32 %v274, 4294901760
      %v3463 = vsub.f32 %v274, %v3462
      %v3464 = vand.u32 %v3463, 4294901760
      %3465 = vmatmul.mubr.f32.gmra.mrb[0].mxu0 %v3464
      %v3466 = vpop.f32.mrb[0].mxu0
      %v3467 = vadd.f32 %v3165, %v3466
      %v3468 = vpop.f32.mrb[0].mxu0
      %v3469 = vand.u32 %v330, 4294901760
      %v3470 = vsub.f32 %v330, %v3469
      %v3471 = vand.u32 %v3470, 4294901760
      %3472 = vmatprep.mubr.f32.mxu0 %v3471
      %v3473 = vand.u32 %v276, 4294901760
      %v3474 = vsub.f32 %v276, %v3473
      %v3475 = vand.u32 %v3474, 4294901760
      %3476 = vmatmul.mubr.f32.gmra.mrb[0].mxu0 %v3475
      %v3477 = vpop.f32.mrb[0].mxu0
      %v3478 = vadd.f32 %v3174, %v3477
      %v3479 = vpop.f32.mrb[0].mxu0
      %v3480 = vand.u32 %v333, 4294901760
      %v3481 = vsub.f32 %v333, %v3480
      %v3482 = vand.u32 %v3481, 4294901760
      %3483 = vmatprep.mubr.f32.mxu0 %v3482
      %v3484 = vand.u32 %v278, 4294901760
      %v3485 = vsub.f32 %v278, %v3484
      %v3486 = vand.u32 %v3485, 4294901760
      %3487 = vmatmul.mubr.f32.gmra.mrb[0].mxu0 %v3486
      %v3488 = vpop.f32.mrb[0].mxu0
      %v3489 = vadd.f32 %v3183, %v3488
      %v3490 = vpop.f32.mrb[0].mxu0
      %v3491 = vand.u32 %v336, 4294901760
      %v3492 = vsub.f32 %v336, %v3491
      %v3493 = vand.u32 %v3492, 4294901760
      %3494 = vmatprep.mubr.f32.mxu0 %v3493
      %v3495 = vand.u32 %v280, 4294901760
      %v3496 = vsub.f32 %v280, %v3495
      %v3497 = vand.u32 %v3496, 4294901760
      %3498 = vmatmul.mubr.f32.gmra.mrb[0].mxu0 %v3497
      %v3499 = vpop.f32.mrb[0].mxu0
      %v3500 = vadd.f32 %v3192, %v3499
      %v3501 = vpop.f32.mrb[0].mxu0
      %v3502 = vand.u32 %v339, 4294901760
      %v3503 = vsub.f32 %v339, %v3502
      %v3504 = vand.u32 %v3503, 4294901760
      %3505 = vmatprep.mubr.f32.mxu0 %v3504
      %v3506 = vand.u32 %v282, 4294901760
      %v3507 = vsub.f32 %v282, %v3506
      %v3508 = vand.u32 %v3507, 4294901760
      %3509 = vmatmul.mubr.f32.gmra.mrb[0].mxu0 %v3508
      %v3510 = vpop.f32.mrb[0].mxu0
      %v3511 = vadd.f32 %v3201, %v3510
      %v3512 = vpop.f32.mrb[0].mxu0
      %v3513 = vand.u32 %v342, 4294901760
      %v3514 = vsub.f32 %v342, %v3513
      %v3515 = vand.u32 %v3514, 4294901760
      %3516 = vmatprep.mubr.f32.mxu0 %v3515
      %v3517 = vand.u32 %v284, 4294901760
      %v3518 = vsub.f32 %v284, %v3517
      %v3519 = vand.u32 %v3518, 4294901760
      %3520 = vmatmul.mubr.f32.gmra.mrb[0].mxu0 %v3519
      %v3521 = vpop.f32.mrb[0].mxu0
      %v3522 = vadd.f32 %v3210, %v3521
      %v3523 = vpop.f32.mrb[0].mxu0
      %v3524 = vand.u32 %v345, 4294901760
      %v3525 = vsub.f32 %v345, %v3524
      %v3526 = vand.u32 %v3525, 4294901760
      %3527 = vmatprep.mubr.f32.mxu0 %v3526
      %v3528 = vand.u32 %v286, 4294901760
      %v3529 = vsub.f32 %v286, %v3528
      %v3530 = vand.u32 %v3529, 4294901760
      %3531 = vmatmul.mubr.f32.gmra.mrb[0].mxu0 %v3530
      %v3532 = vpop.f32.mrb[0].mxu0
      %v3533 = vadd.f32 %v3219, %v3532
      %v3534 = vpop.f32.mrb[0].mxu0
      %v3535 = vand.u32 %v348, 4294901760
      %v3536 = vsub.f32 %v348, %v3535
      %v3537 = vand.u32 %v3536, 4294901760
      %3538 = vmatprep.mubr.f32.mxu0 %v3537
      %v3539 = vand.u32 %v288, 4294901760
      %v3540 = vsub.f32 %v288, %v3539
      %v3541 = vand.u32 %v3540, 4294901760
      %3542 = vmatmul.mubr.f32.gmra.mrb[0].mxu0 %v3541
      %v3543 = vpop.f32.mrb[0].mxu0
      %v3544 = vadd.f32 %v3228, %v3543
      %v3545 = vpop.f32.mrb[0].mxu0
      %v3546 = vand.u32 %v351, 4294901760
      %v3547 = vsub.f32 %v351, %v3546
      %v3548 = vand.u32 %v3547, 4294901760
      %3549 = vmatprep.mubr.f32.mxu0 %v3548
      %v3550 = vand.u32 %v290, 4294901760
      %v3551 = vsub.f32 %v290, %v3550
      %v3552 = vand.u32 %v3551, 4294901760
      %3553 = vmatmul.mubr.f32.gmra.mrb[0].mxu0 %v3552
      %v3554 = vpop.f32.mrb[0].mxu0
      %v3555 = vadd.f32 %v3237, %v3554
      %v3556 = vpop.f32.mrb[0].mxu0
      %v3557 = vand.u32 %v354, 4294901760
      %v3558 = vsub.f32 %v354, %v3557
      %v3559 = vand.u32 %v3558, 4294901760
      %3560 = vmatprep.mubr.f32.mxu0 %v3559
      %v3561 = vand.u32 %v292, 4294901760
      %v3562 = vsub.f32 %v292, %v3561
      %v3563 = vand.u32 %v3562, 4294901760
      %3564 = vmatmul.mubr.f32.gmra.mrb[0].mxu0 %v3563
      %v3565 = vpop.f32.mrb[0].mxu0
      %v3566 = vadd.f32 %v3246, %v3565
      %v3567 = vpop.f32.mrb[0].mxu0
      %v3568 = vand.u32 %v357, 4294901760
      %v3569 = vsub.f32 %v357, %v3568
      %v3570 = vand.u32 %v3569, 4294901760
      %3571 = vmatprep.mubr.f32.mxu0 %v3570
      %v3572 = vand.u32 %v294, 4294901760
      %v3573 = vsub.f32 %v294, %v3572
      %v3574 = vand.u32 %v3573, 4294901760
      %3575 = vmatmul.mubr.f32.gmra.mrb[0].mxu0 %v3574
      %v3576 = vpop.f32.mrb[0].mxu0
      %v3577 = vadd.f32 %v3255, %v3576
      %v3578 = vpop.f32.mrb[0].mxu0
      %v3579 = vand.u32 %v360, 4294901760
      %v3580 = vsub.f32 %v360, %v3579
      %v3581 = vand.u32 %v3580, 4294901760
      %3582 = vmatprep.mubr.f32.mxu0 %v3581
      %v3583 = vand.u32 %v296, 4294901760
      %v3584 = vsub.f32 %v296, %v3583
      %v3585 = vand.u32 %v3584, 4294901760
      %3586 = vmatmul.mubr.f32.gmra.mrb[0].mxu0 %v3585
      %v3587 = vpop.f32.mrb[0].mxu0
      %v3588 = vadd.f32 %v3264, %v3587
      %v3589 = vpop.f32.mrb[0].mxu0
      %v3590 = vand.u32 %v363, 4294901760
      %v3591 = vsub.f32 %v363, %v3590
      %v3592 = vand.u32 %v3591, 4294901760
      %3593 = vmatprep.mubr.f32.mxu0 %v3592
      %v3594 = vand.u32 %v298, 4294901760
      %v3595 = vsub.f32 %v298, %v3594
      %v3596 = vand.u32 %v3595, 4294901760
      %3597 = vmatmul.mubr.f32.gmra.mrb[0].mxu0 %v3596
      %v3598 = vpop.f32.mrb[0].mxu0
      %v3599 = vadd.f32 %v3273, %v3598
      %v3600 = vpop.f32.mrb[0].mxu0
      %v3601 = vand.u32 %v366, 4294901760
      %v3602 = vsub.f32 %v366, %v3601
      %v3603 = vand.u32 %v3602, 4294901760
      %3604 = vmatprep.mubr.f32.mxu0 %v3603
      %v3605 = vand.u32 %v300, 4294901760
      %v3606 = vsub.f32 %v300, %v3605
      %v3607 = vand.u32 %v3606, 4294901760
      %3608 = vmatmul.mubr.f32.gmra.mrb[0].mxu0 %v3607
      %v3609 = vpop.f32.mrb[0].mxu0
      %v3610 = vadd.f32 %v3282, %v3609
      %v3611 = vpop.f32.mrb[0].mxu0
      %v3612 = vand.u32 %v369, 4294901760
      %v3613 = vsub.f32 %v369, %v3612
      %v3614 = vand.u32 %v3613, 4294901760
      %3615 = vmatprep.mubr.f32.mxu0 %v3614
      %v3616 = vand.u32 %v302, 4294901760
      %v3617 = vsub.f32 %v302, %v3616
      %v3618 = vand.u32 %v3617, 4294901760
      %3619 = vmatmul.mubr.f32.gmra.mrb[0].mxu0 %v3618
      %v3620 = vpop.f32.mrb[0].mxu0
      %v3621 = vadd.f32 %v3291, %v3620
      %v3622 = vpop.f32.mrb[0].mxu0
      %v3623 = vand.u32 %v372, 4294901760
      %v3624 = vsub.f32 %v372, %v3623
      %v3625 = vand.u32 %v3624, 4294901760
      %3626 = vmatprep.mubr.f32.mxu0 %v3625
      %v3627 = vand.u32 %v304, 4294901760
      %v3628 = vsub.f32 %v304, %v3627
      %v3629 = vand.u32 %v3628, 4294901760
      %3630 = vmatmul.mubr.f32.gmra.mrb[0].mxu0 %v3629
      %v3631 = vpop.f32.mrb[0].mxu0
      %v3632 = vadd.f32 %v3300, %v3631
      %v3633 = vpop.f32.mrb[0].mxu0
      %v3634 = vand.u32 %v375, 4294901760
      %v3635 = vsub.f32 %v375, %v3634
      %v3636 = vand.u32 %v3635, 4294901760
      %3637 = vmatprep.mubr.f32.mxu0 %v3636
      %v3638 = vand.u32 %v306, 4294901760
      %v3639 = vsub.f32 %v306, %v3638
      %v3640 = vand.u32 %v3639, 4294901760
      %3641 = vmatmul.mubr.f32.gmra.mrb[0].mxu0 %v3640
      %v3642 = vpop.f32.mrb[0].mxu0
      %v3643 = vadd.f32 %v3309, %v3642
      %v3644 = vpop.f32.mrb[0].mxu0
      %v3645 = vand.u32 %v378, 4294901760
      %v3646 = vsub.f32 %v378, %v3645
      %v3647 = vand.u32 %v3646, 4294901760
      %3648 = vmatprep.mubr.f32.mxu0 %v3647
      %v3649 = vand.u32 %v308, 4294901760
      %v3650 = vsub.f32 %v308, %v3649
      %v3651 = vand.u32 %v3650, 4294901760
      %3652 = vmatmul.mubr.f32.gmra.mrb[0].mxu0 %v3651
      %v3653 = vpop.f32.mrb[0].mxu0
      %v3654 = vadd.f32 %v3318, %v3653
      %v3655 = vpop.f32.mrb[0].mxu0
      %3656 = vdwg.mxu0
      %3657 = vmatprep.subr.mxu0 0.0
      %v3658 = vand.u32 %v246, 4294901760
      %v3659 = vsub.f32 %v246, %v3658
      %v3660 = vand.u32 %v3659, 4294901760
      %3661 = vmatpush1.msra.mxu0 %v3660
      %3662 = vmatprep.subr.mxu0 0.0
      %v3663 = vand.u32 %v247, 4294901760
      %v3664 = vsub.f32 %v247, %v3663
      %v3665 = vand.u32 %v3664, 4294901760
      %3666 = vmatpush1.msra.mxu0 %v3665
      %3667 = vmatprep.subr.mxu0 0.0
      %v3668 = vand.u32 %v248, 4294901760
      %v3669 = vsub.f32 %v248, %v3668
      %v3670 = vand.u32 %v3669, 4294901760
      %3671 = vmatpush1.msra.mxu0 %v3670
      %3672 = vmatprep.subr.mxu0 0.0
      %v3673 = vand.u32 %v249, 4294901760
      %v3674 = vsub.f32 %v249, %v3673
      %v3675 = vand.u32 %v3674, 4294901760
      %3676 = vmatpush1.msra.mxu0 %v3675
      %3677 = vmatprep.subr.mxu0 0.0
      %v3678 = vand.u32 %v250, 4294901760
      %v3679 = vsub.f32 %v250, %v3678
      %v3680 = vand.u32 %v3679, 4294901760
      %3681 = vmatpush1.msra.mxu0 %v3680
      %3682 = vmatprep.subr.mxu0 0.0
      %v3683 = vand.u32 %v251, 4294901760
      %v3684 = vsub.f32 %v251, %v3683
      %v3685 = vand.u32 %v3684, 4294901760
      %3686 = vmatpush1.msra.mxu0 %v3685
      %3687 = vmatprep.subr.mxu0 0.0
      %v3688 = vand.u32 %v252, 4294901760
      %v3689 = vsub.f32 %v252, %v3688
      %v3690 = vand.u32 %v3689, 4294901760
      %3691 = vmatpush1.msra.mxu0 %v3690
      %3692 = vmatprep.subr.mxu0 0.0
      %v3693 = vand.u32 %v253, 4294901760
      %v3694 = vsub.f32 %v253, %v3693
      %v3695 = vand.u32 %v3694, 4294901760
      %3696 = vmatpush1.msra.mxu0 %v3695
      %3697 = vmatprep.subr.mxu0 0.0
      %v3698 = vand.u32 %v254, 4294901760
      %v3699 = vsub.f32 %v254, %v3698
      %v3700 = vand.u32 %v3699, 4294901760
      %3701 = vmatpush1.msra.mxu0 %v3700
      %3702 = vmatprep.subr.mxu0 0.0
      %v3703 = vand.u32 %v255, 4294901760
      %v3704 = vsub.f32 %v255, %v3703
      %v3705 = vand.u32 %v3704, 4294901760
      %3706 = vmatpush1.msra.mxu0 %v3705
      %3707 = vmatprep.subr.mxu0 0.0
      %v3708 = vand.u32 %v256, 4294901760
      %v3709 = vsub.f32 %v256, %v3708
      %v3710 = vand.u32 %v3709, 4294901760
      %3711 = vmatpush1.msra.mxu0 %v3710
      %3712 = vmatprep.subr.mxu0 0.0
      %v3713 = vand.u32 %v257, 4294901760
      %v3714 = vsub.f32 %v257, %v3713
      %v3715 = vand.u32 %v3714, 4294901760
      %3716 = vmatpush1.msra.mxu0 %v3715
      %3717 = vmatprep.subr.mxu0 0.0
      %v3718 = vand.u32 %v258, 4294901760
      %v3719 = vsub.f32 %v258, %v3718
      %v3720 = vand.u32 %v3719, 4294901760
      %3721 = vmatpush1.msra.mxu0 %v3720
      %3722 = vmatprep.subr.mxu0 0.0
      %v3723 = vand.u32 %v259, 4294901760
      %v3724 = vsub.f32 %v259, %v3723
      %v3725 = vand.u32 %v3724, 4294901760
      %3726 = vmatpush1.msra.mxu0 %v3725
      %3727 = vmatprep.subr.mxu0 0.0
      %v3728 = vand.u32 %v260, 4294901760
      %v3729 = vsub.f32 %v260, %v3728
      %v3730 = vand.u32 %v3729, 4294901760
      %3731 = vmatpush1.msra.mxu0 %v3730
      %3732 = vmatprep.subr.mxu0 0.0
      %v3733 = vand.u32 %v261, 4294901760
      %v3734 = vsub.f32 %v261, %v3733
      %v3735 = vand.u32 %v3734, 4294901760
      %3736 = vmatpush1.msra.mxu0 %v3735
      %3737 = vmatprep.subr.mxu0 0.0
      %v3738 = vand.u32 %v262, 4294901760
      %v3739 = vsub.f32 %v262, %v3738
      %v3740 = vand.u32 %v3739, 4294901760
      %3741 = vmatpush1.msra.mxu0 %v3740
      %3742 = vmatprep.subr.mxu0 0.0
      %v3743 = vand.u32 %v2267, 4294901760
      %v3744 = vsub.f32 %v2267, %v3743
      %v3745 = vand.u32 %v3744, 4294901760
      %3746 = vmatpush1.msra.mxu0 %v3745
      %3747 = vmatprep.subr.mxu0 0.0
      %3748 = vmatpush1.msra.mxu0 0.0
      %3749 = vmatprep.subr.mxu0 0.0
      %3750 = vmatpush1.msra.mxu0 0.0
      %3751 = vmatprep.subr.mxu0 0.0
      %3752 = vmatpush1.msra.mxu0 0.0
      %3753 = vmatprep.subr.mxu0 0.0
      %3754 = vmatpush1.msra.mxu0 0.0
      %3755 = vmatprep.subr.mxu0 0.0
      %3756 = vmatpush1.msra.mxu0 0.0
      %3757 = vmatprep.subr.mxu0 0.0
      %3758 = vmatpush1.msra.mxu0 0.0
      %3759 = vmatprep.subr.mxu0 0.0
      %3760 = vmatpush1.msra.mxu0 0.0
      %3761 = vmatprep.subr.mxu0 0.0
      %3762 = vmatpush1.msra.mxu0 0.0
      %3763 = vmatprep.subr.mxu0 0.0
      %3764 = vmatpush1.msra.mxu0 0.0
      %3765 = vmatprep.subr.mxu0 0.0
      %3766 = vmatpush1.msra.mxu0 0.0
      %3767 = vmatprep.subr.mxu0 0.0
      %3768 = vmatpush1.msra.mxu0 0.0
      %3769 = vmatprep.subr.mxu0 0.0
      %3770 = vmatpush1.msra.mxu0 0.0
      %3771 = vmatprep.subr.mxu0 0.0
      %3772 = vmatpush1.msra.mxu0 0.0
      %3773 = vmatprep.subr.mxu0 0.0
      %3774 = vmatpush1.msra.mxu0 0.0
      %v3775 = vand.u32 %v312, 4294901760
      %3776 = vmatprep.mubr.f32.mxu0 %v3775
      %v3777 = vand.u32 %v264, 4294901760
      %3778 = vmatmul.mubr.f32.gmra.mrb[0].mxu0 %v3777
      %v3779 = vpop.f32.mrb[0].mxu0
      %v3780 = vadd.f32 %v3412, %v3779
      %v3781 = vpop.f32.mrb[0].mxu0
      %v3782 = vand.u32 %v315, 4294901760
      %3783 = vmatprep.mubr.f32.mxu0 %v3782
      %v3784 = vand.u32 %v266, 4294901760
      %3785 = vmatmul.mubr.f32.gmra.mrb[0].mxu0 %v3784
      %v3786 = vpop.f32.mrb[0].mxu0
      %v3787 = vadd.f32 %v3423, %v3786
      %v3788 = vpop.f32.mrb[0].mxu0
      %v3789 = vand.u32 %v318, 4294901760
      %3790 = vmatprep.mubr.f32.mxu0 %v3789
      %v3791 = vand.u32 %v268, 4294901760
      %3792 = vmatmul.mubr.f32.gmra.mrb[0].mxu0 %v3791
      %v3793 = vpop.f32.mrb[0].mxu0
      %v3794 = vadd.f32 %v3434, %v3793
      %v3795 = vpop.f32.mrb[0].mxu0
      %v3796 = vand.u32 %v321, 4294901760
      %3797 = vmatprep.mubr.f32.mxu0 %v3796
      %v3798 = vand.u32 %v270, 4294901760
      %3799 = vmatmul.mubr.f32.gmra.mrb[0].mxu0 %v3798
      %v3800 = vpop.f32.mrb[0].mxu0
      %v3801 = vadd.f32 %v3445, %v3800
      %v3802 = vpop.f32.mrb[0].mxu0
      %v3803 = vand.u32 %v324, 4294901760
      %3804 = vmatprep.mubr.f32.mxu0 %v3803
      %v3805 = vand.u32 %v272, 4294901760
      %3806 = vmatmul.mubr.f32.gmra.mrb[0].mxu0 %v3805
      %v3807 = vpop.f32.mrb[0].mxu0
      %v3808 = vadd.f32 %v3456, %v3807
      %v3809 = vpop.f32.mrb[0].mxu0
      %v3810 = vand.u32 %v327, 4294901760
      %3811 = vmatprep.mubr.f32.mxu0 %v3810
      %v3812 = vand.u32 %v274, 4294901760
      %3813 = vmatmul.mubr.f32.gmra.mrb[0].mxu0 %v3812
      %v3814 = vpop.f32.mrb[0].mxu0
      %v3815 = vadd.f32 %v3467, %v3814
      %v3816 = vpop.f32.mrb[0].mxu0
      %v3817 = vand.u32 %v330, 4294901760
      %3818 = vmatprep.mubr.f32.mxu0 %v3817
      %v3819 = vand.u32 %v276, 4294901760
      %3820 = vmatmul.mubr.f32.gmra.mrb[0].mxu0 %v3819
      %v3821 = vpop.f32.mrb[0].mxu0
      %v3822 = vadd.f32 %v3478, %v3821
      %v3823 = vpop.f32.mrb[0].mxu0
      %v3824 = vand.u32 %v333, 4294901760
      %3825 = vmatprep.mubr.f32.mxu0 %v3824
      %v3826 = vand.u32 %v278, 4294901760
      %3827 = vmatmul.mubr.f32.gmra.mrb[0].mxu0 %v3826
      %v3828 = vpop.f32.mrb[0].mxu0
      %v3829 = vadd.f32 %v3489, %v3828
      %v3830 = vpop.f32.mrb[0].mxu0
      %v3831 = vand.u32 %v336, 4294901760
      %3832 = vmatprep.mubr.f32.mxu0 %v3831
      %v3833 = vand.u32 %v280, 4294901760
      %3834 = vmatmul.mubr.f32.gmra.mrb[0].mxu0 %v3833
      %v3835 = vpop.f32.mrb[0].mxu0
      %v3836 = vadd.f32 %v3500, %v3835
      %v3837 = vpop.f32.mrb[0].mxu0
      %v3838 = vand.u32 %v339, 4294901760
      %3839 = vmatprep.mubr.f32.mxu0 %v3838
      %v3840 = vand.u32 %v282, 4294901760
      %3841 = vmatmul.mubr.f32.gmra.mrb[0].mxu0 %v3840
      %v3842 = vpop.f32.mrb[0].mxu0
      %v3843 = vadd.f32 %v3511, %v3842
      %v3844 = vpop.f32.mrb[0].mxu0
      %v3845 = vand.u32 %v342, 4294901760
      %3846 = vmatprep.mubr.f32.mxu0 %v3845
      %v3847 = vand.u32 %v284, 4294901760
      %3848 = vmatmul.mubr.f32.gmra.mrb[0].mxu0 %v3847
      %v3849 = vpop.f32.mrb[0].mxu0
      %v3850 = vadd.f32 %v3522, %v3849
      %v3851 = vpop.f32.mrb[0].mxu0
      %v3852 = vand.u32 %v345, 4294901760
      %3853 = vmatprep.mubr.f32.mxu0 %v3852
      %v3854 = vand.u32 %v286, 4294901760
      %3855 = vmatmul.mubr.f32.gmra.mrb[0].mxu0 %v3854
      %v3856 = vpop.f32.mrb[0].mxu0
      %v3857 = vadd.f32 %v3533, %v3856
      %v3858 = vpop.f32.mrb[0].mxu0
      %v3859 = vand.u32 %v348, 4294901760
      %3860 = vmatprep.mubr.f32.mxu0 %v3859
      %v3861 = vand.u32 %v288, 4294901760
      %3862 = vmatmul.mubr.f32.gmra.mrb[0].mxu0 %v3861
      %v3863 = vpop.f32.mrb[0].mxu0
      %v3864 = vadd.f32 %v3544, %v3863
      %v3865 = vpop.f32.mrb[0].mxu0
      %v3866 = vand.u32 %v351, 4294901760
      %3867 = vmatprep.mubr.f32.mxu0 %v3866
      %v3868 = vand.u32 %v290, 4294901760
      %3869 = vmatmul.mubr.f32.gmra.mrb[0].mxu0 %v3868
      %v3870 = vpop.f32.mrb[0].mxu0
      %v3871 = vadd.f32 %v3555, %v3870
      %v3872 = vpop.f32.mrb[0].mxu0
      %v3873 = vand.u32 %v354, 4294901760
      %3874 = vmatprep.mubr.f32.mxu0 %v3873
      %v3875 = vand.u32 %v292, 4294901760
      %3876 = vmatmul.mubr.f32.gmra.mrb[0].mxu0 %v3875
      %v3877 = vpop.f32.mrb[0].mxu0
      %v3878 = vadd.f32 %v3566, %v3877
      %v3879 = vpop.f32.mrb[0].mxu0
      %v3880 = vand.u32 %v357, 4294901760
      %3881 = vmatprep.mubr.f32.mxu0 %v3880
      %v3882 = vand.u32 %v294, 4294901760
      %3883 = vmatmul.mubr.f32.gmra.mrb[0].mxu0 %v3882
      %v3884 = vpop.f32.mrb[0].mxu0
      %v3885 = vadd.f32 %v3577, %v3884
      %v3886 = vpop.f32.mrb[0].mxu0
      %v3887 = vand.u32 %v360, 4294901760
      %3888 = vmatprep.mubr.f32.mxu0 %v3887
      %v3889 = vand.u32 %v296, 4294901760
      %3890 = vmatmul.mubr.f32.gmra.mrb[0].mxu0 %v3889
      %v3891 = vpop.f32.mrb[0].mxu0
      %v3892 = vadd.f32 %v3588, %v3891
      %v3893 = vpop.f32.mrb[0].mxu0
      %v3894 = vand.u32 %v363, 4294901760
      %3895 = vmatprep.mubr.f32.mxu0 %v3894
      %v3896 = vand.u32 %v298, 4294901760
      %3897 = vmatmul.mubr.f32.gmra.mrb[0].mxu0 %v3896
      %v3898 = vpop.f32.mrb[0].mxu0
      %v3899 = vadd.f32 %v3599, %v3898
      %v3900 = vpop.f32.mrb[0].mxu0
      %v3901 = vand.u32 %v366, 4294901760
      %3902 = vmatprep.mubr.f32.mxu0 %v3901
      %v3903 = vand.u32 %v300, 4294901760
      %3904 = vmatmul.mubr.f32.gmra.mrb[0].mxu0 %v3903
      %v3905 = vpop.f32.mrb[0].mxu0
      %v3906 = vadd.f32 %v3610, %v3905
      %v3907 = vpop.f32.mrb[0].mxu0
      %v3908 = vand.u32 %v369, 4294901760
      %3909 = vmatprep.mubr.f32.mxu0 %v3908
      %v3910 = vand.u32 %v302, 4294901760
      %3911 = vmatmul.mubr.f32.gmra.mrb[0].mxu0 %v3910
      %v3912 = vpop.f32.mrb[0].mxu0
      %v3913 = vadd.f32 %v3621, %v3912
      %v3914 = vpop.f32.mrb[0].mxu0
      %v3915 = vand.u32 %v372, 4294901760
      %3916 = vmatprep.mubr.f32.mxu0 %v3915
      %v3917 = vand.u32 %v304, 4294901760
      %3918 = vmatmul.mubr.f32.gmra.mrb[0].mxu0 %v3917
      %v3919 = vpop.f32.mrb[0].mxu0
      %v3920 = vadd.f32 %v3632, %v3919
      %v3921 = vpop.f32.mrb[0].mxu0
      %v3922 = vand.u32 %v375, 4294901760
      %3923 = vmatprep.mubr.f32.mxu0 %v3922
      %v3924 = vand.u32 %v306, 4294901760
      %3925 = vmatmul.mubr.f32.gmra.mrb[0].mxu0 %v3924
      %v3926 = vpop.f32.mrb[0].mxu0
      %v3927 = vadd.f32 %v3643, %v3926
      %v3928 = vpop.f32.mrb[0].mxu0
      %v3929 = vand.u32 %v378, 4294901760
      %3930 = vmatprep.mubr.f32.mxu0 %v3929
      %v3931 = vand.u32 %v308, 4294901760
      %3932 = vmatmul.mubr.f32.gmra.mrb[0].mxu0 %v3931
      %v3933 = vpop.f32.mrb[0].mxu0
      %v3934 = vadd.f32 %v3654, %v3933
      %v3935 = vpop.f32.mrb[0].mxu0
      %3936 = vdwg.mxu0
      %3937 = vmatprep.subr.mxu0 0.0
      %v3938 = vand.u32 %v246, 4294901760
      %3939 = vmatpush1.msra.mxu0 %v3938
      %3940 = vmatprep.subr.mxu0 0.0
      %v3941 = vand.u32 %v247, 4294901760
      %3942 = vmatpush1.msra.mxu0 %v3941
      %3943 = vmatprep.subr.mxu0 0.0
      %v3944 = vand.u32 %v248, 4294901760
      %3945 = vmatpush1.msra.mxu0 %v3944
      %3946 = vmatprep.subr.mxu0 0.0
      %v3947 = vand.u32 %v249, 4294901760
      %3948 = vmatpush1.msra.mxu0 %v3947
      %3949 = vmatprep.subr.mxu0 0.0
      %v3950 = vand.u32 %v250, 4294901760
      %3951 = vmatpush1.msra.mxu0 %v3950
      %3952 = vmatprep.subr.mxu0 0.0
      %v3953 = vand.u32 %v251, 4294901760
      %3954 = vmatpush1.msra.mxu0 %v3953
      %3955 = vmatprep.subr.mxu0 0.0
      %v3956 = vand.u32 %v252, 4294901760
      %3957 = vmatpush1.msra.mxu0 %v3956
      %3958 = vmatprep.subr.mxu0 0.0
      %v3959 = vand.u32 %v253, 4294901760
      %3960 = vmatpush1.msra.mxu0 %v3959
      %3961 = vmatprep.subr.mxu0 0.0
      %v3962 = vand.u32 %v254, 4294901760
      %3963 = vmatpush1.msra.mxu0 %v3962
      %3964 = vmatprep.subr.mxu0 0.0
      %v3965 = vand.u32 %v255, 4294901760
      %3966 = vmatpush1.msra.mxu0 %v3965
      %3967 = vmatprep.subr.mxu0 0.0
      %v3968 = vand.u32 %v256, 4294901760
      %3969 = vmatpush1.msra.mxu0 %v3968
      %3970 = vmatprep.subr.mxu0 0.0
      %v3971 = vand.u32 %v257, 4294901760
      %3972 = vmatpush1.msra.mxu0 %v3971
      %3973 = vmatprep.subr.mxu0 0.0
      %v3974 = vand.u32 %v258, 4294901760
      %3975 = vmatpush1.msra.mxu0 %v3974
      %3976 = vmatprep.subr.mxu0 0.0
      %v3977 = vand.u32 %v259, 4294901760
      %3978 = vmatpush1.msra.mxu0 %v3977
      %3979 = vmatprep.subr.mxu0 0.0
      %v3980 = vand.u32 %v260, 4294901760
      %3981 = vmatpush1.msra.mxu0 %v3980
      %3982 = vmatprep.subr.mxu0 0.0
      %v3983 = vand.u32 %v261, 4294901760
      %3984 = vmatpush1.msra.mxu0 %v3983
      %3985 = vmatprep.subr.mxu0 0.0
      %v3986 = vand.u32 %v262, 4294901760
      %3987 = vmatpush1.msra.mxu0 %v3986
      %3988 = vmatprep.subr.mxu0 0.0
      %v3989 = vand.u32 %v2267, 4294901760
      %3990 = vmatpush1.msra.mxu0 %v3989
      %3991 = vmatprep.subr.mxu0 0.0
      %3992 = vmatpush1.msra.mxu0 0.0
      %3993 = vmatprep.subr.mxu0 0.0
      %3994 = vmatpush1.msra.mxu0 0.0
      %3995 = vmatprep.subr.mxu0 0.0
      %3996 = vmatpush1.msra.mxu0 0.0
      %3997 = vmatprep.subr.mxu0 0.0
      %3998 = vmatpush1.msra.mxu0 0.0
      %3999 = vmatprep.subr.mxu0 0.0
      %4000 = vmatpush1.msra.mxu0 0.0
      %4001 = vmatprep.subr.mxu0 0.0
      %4002 = vmatpush1.msra.mxu0 0.0
      %4003 = vmatprep.subr.mxu0 0.0
      %4004 = vmatpush1.msra.mxu0 0.0
      %4005 = vmatprep.subr.mxu0 0.0
      %4006 = vmatpush1.msra.mxu0 0.0
      %4007 = vmatprep.subr.mxu0 0.0
      %4008 = vmatpush1.msra.mxu0 0.0
      %4009 = vmatprep.subr.mxu0 0.0
      %4010 = vmatpush1.msra.mxu0 0.0
      %4011 = vmatprep.subr.mxu0 0.0
      %4012 = vmatpush1.msra.mxu0 0.0
      %4013 = vmatprep.subr.mxu0 0.0
      %4014 = vmatpush1.msra.mxu0 0.0
      %4015 = vmatprep.subr.mxu0 0.0
      %4016 = vmatpush1.msra.mxu0 0.0
      %4017 = vmatprep.subr.mxu0 0.0
      %4018 = vmatpush1.msra.mxu0 0.0
      %v4019 = vand.u32 %v312, 4294901760
      %4020 = vmatprep.mubr.f32.mxu0 %v4019
      %v4021 = vand.u32 %v264, 4294901760
      %4022 = vmatmul.mubr.f32.gmra.mrb[0].mxu0 %v4021
      %v4023 = vpop.f32.mrb[0].mxu0
      %v4024 = vadd.f32 %v3780, %v4023
      %v4025 = vpop.f32.mrb[0].mxu0
      %v4026 = vand.u32 %v315, 4294901760
      %4027 = vmatprep.mubr.f32.mxu0 %v4026
      %v4028 = vand.u32 %v266, 4294901760
      %4029 = vmatmul.mubr.f32.gmra.mrb[0].mxu0 %v4028
      %v4030 = vpop.f32.mrb[0].mxu0
      %v4031 = vadd.f32 %v3787, %v4030
      %v4032 = vpop.f32.mrb[0].mxu0
      %v4033 = vand.u32 %v318, 4294901760
      %4034 = vmatprep.mubr.f32.mxu0 %v4033
      %v4035 = vand.u32 %v268, 4294901760
      %4036 = vmatmul.mubr.f32.gmra.mrb[0].mxu0 %v4035
      %v4037 = vpop.f32.mrb[0].mxu0
      %v4038 = vadd.f32 %v3794, %v4037
      %v4039 = vpop.f32.mrb[0].mxu0
      %v4040 = vand.u32 %v321, 4294901760
      %4041 = vmatprep.mubr.f32.mxu0 %v4040
      %v4042 = vand.u32 %v270, 4294901760
      %4043 = vmatmul.mubr.f32.gmra.mrb[0].mxu0 %v4042
      %v4044 = vpop.f32.mrb[0].mxu0
      %v4045 = vadd.f32 %v3801, %v4044
      %v4046 = vpop.f32.mrb[0].mxu0
      %v4047 = vand.u32 %v324, 4294901760
      %4048 = vmatprep.mubr.f32.mxu0 %v4047
      %v4049 = vand.u32 %v272, 4294901760
      %4050 = vmatmul.mubr.f32.gmra.mrb[0].mxu0 %v4049
      %v4051 = vpop.f32.mrb[0].mxu0
      %v4052 = vadd.f32 %v3808, %v4051
      %v4053 = vpop.f32.mrb[0].mxu0
      %v4054 = vand.u32 %v327, 4294901760
      %4055 = vmatprep.mubr.f32.mxu0 %v4054
      %v4056 = vand.u32 %v274, 4294901760
      %4057 = vmatmul.mubr.f32.gmra.mrb[0].mxu0 %v4056
      %v4058 = vpop.f32.mrb[0].mxu0
      %v4059 = vadd.f32 %v3815, %v4058
      %v4060 = vpop.f32.mrb[0].mxu0
      %v4061 = vand.u32 %v330, 4294901760
      %4062 = vmatprep.mubr.f32.mxu0 %v4061
      %v4063 = vand.u32 %v276, 4294901760
      %4064 = vmatmul.mubr.f32.gmra.mrb[0].mxu0 %v4063
      %v4065 = vpop.f32.mrb[0].mxu0
      %v4066 = vadd.f32 %v3822, %v4065
      %v4067 = vpop.f32.mrb[0].mxu0
      %v4068 = vand.u32 %v333, 4294901760
      %4069 = vmatprep.mubr.f32.mxu0 %v4068
      %v4070 = vand.u32 %v278, 4294901760
      %4071 = vmatmul.mubr.f32.gmra.mrb[0].mxu0 %v4070
      %v4072 = vpop.f32.mrb[0].mxu0
      %v4073 = vadd.f32 %v3829, %v4072
      %v4074 = vpop.f32.mrb[0].mxu0
      %v4075 = vand.u32 %v336, 4294901760
      %4076 = vmatprep.mubr.f32.mxu0 %v4075
      %v4077 = vand.u32 %v280, 4294901760
      %4078 = vmatmul.mubr.f32.gmra.mrb[0].mxu0 %v4077
      %v4079 = vpop.f32.mrb[0].mxu0
      %v4080 = vadd.f32 %v3836, %v4079
      %v4081 = vpop.f32.mrb[0].mxu0
      %v4082 = vand.u32 %v339, 4294901760
      %4083 = vmatprep.mubr.f32.mxu0 %v4082
      %v4084 = vand.u32 %v282, 4294901760
      %4085 = vmatmul.mubr.f32.gmra.mrb[0].mxu0 %v4084
      %v4086 = vpop.f32.mrb[0].mxu0
      %v4087 = vadd.f32 %v3843, %v4086
      %v4088 = vpop.f32.mrb[0].mxu0
      %v4089 = vand.u32 %v342, 4294901760
      %4090 = vmatprep.mubr.f32.mxu0 %v4089
      %v4091 = vand.u32 %v284, 4294901760
      %4092 = vmatmul.mubr.f32.gmra.mrb[0].mxu0 %v4091
      %v4093 = vpop.f32.mrb[0].mxu0
      %v4094 = vadd.f32 %v3850, %v4093
      %v4095 = vpop.f32.mrb[0].mxu0
      %v4096 = vand.u32 %v345, 4294901760
      %4097 = vmatprep.mubr.f32.mxu0 %v4096
      %v4098 = vand.u32 %v286, 4294901760
      %4099 = vmatmul.mubr.f32.gmra.mrb[0].mxu0 %v4098
      %v4100 = vpop.f32.mrb[0].mxu0
      %v4101 = vadd.f32 %v3857, %v4100
      %v4102 = vpop.f32.mrb[0].mxu0
      %v4103 = vand.u32 %v348, 4294901760
      %4104 = vmatprep.mubr.f32.mxu0 %v4103
      %v4105 = vand.u32 %v288, 4294901760
      %4106 = vmatmul.mubr.f32.gmra.mrb[0].mxu0 %v4105
      %v4107 = vpop.f32.mrb[0].mxu0
      %v4108 = vadd.f32 %v3864, %v4107
      %v4109 = vpop.f32.mrb[0].mxu0
      %v4110 = vand.u32 %v351, 4294901760
      %4111 = vmatprep.mubr.f32.mxu0 %v4110
      %v4112 = vand.u32 %v290, 4294901760
      %4113 = vmatmul.mubr.f32.gmra.mrb[0].mxu0 %v4112
      %v4114 = vpop.f32.mrb[0].mxu0
      %v4115 = vadd.f32 %v3871, %v4114
      %v4116 = vpop.f32.mrb[0].mxu0
      %v4117 = vand.u32 %v354, 4294901760
      %4118 = vmatprep.mubr.f32.mxu0 %v4117
      %v4119 = vand.u32 %v292, 4294901760
      %4120 = vmatmul.mubr.f32.gmra.mrb[0].mxu0 %v4119
      %v4121 = vpop.f32.mrb[0].mxu0
      %v4122 = vadd.f32 %v3878, %v4121
      %v4123 = vpop.f32.mrb[0].mxu0
      %v4124 = vand.u32 %v357, 4294901760
      %4125 = vmatprep.mubr.f32.mxu0 %v4124
      %v4126 = vand.u32 %v294, 4294901760
      %4127 = vmatmul.mubr.f32.gmra.mrb[0].mxu0 %v4126
      %v4128 = vpop.f32.mrb[0].mxu0
      %v4129 = vadd.f32 %v3885, %v4128
      %v4130 = vpop.f32.mrb[0].mxu0
      %v4131 = vand.u32 %v360, 4294901760
      %4132 = vmatprep.mubr.f32.mxu0 %v4131
      %v4133 = vand.u32 %v296, 4294901760
      %4134 = vmatmul.mubr.f32.gmra.mrb[0].mxu0 %v4133
      %v4135 = vpop.f32.mrb[0].mxu0
      %v4136 = vadd.f32 %v3892, %v4135
      %v4137 = vpop.f32.mrb[0].mxu0
      %v4138 = vand.u32 %v363, 4294901760
      %4139 = vmatprep.mubr.f32.mxu0 %v4138
      %v4140 = vand.u32 %v298, 4294901760
      %4141 = vmatmul.mubr.f32.gmra.mrb[0].mxu0 %v4140
      %v4142 = vpop.f32.mrb[0].mxu0
      %v4143 = vadd.f32 %v3899, %v4142
      %v4144 = vpop.f32.mrb[0].mxu0
      %v4145 = vand.u32 %v366, 4294901760
      %4146 = vmatprep.mubr.f32.mxu0 %v4145
      %v4147 = vand.u32 %v300, 4294901760
      %4148 = vmatmul.mubr.f32.gmra.mrb[0].mxu0 %v4147
      %v4149 = vpop.f32.mrb[0].mxu0
      %v4150 = vadd.f32 %v3906, %v4149
      %v4151 = vpop.f32.mrb[0].mxu0
      %v4152 = vand.u32 %v369, 4294901760
      %4153 = vmatprep.mubr.f32.mxu0 %v4152
      %v4154 = vand.u32 %v302, 4294901760
      %4155 = vmatmul.mubr.f32.gmra.mrb[0].mxu0 %v4154
      %v4156 = vpop.f32.mrb[0].mxu0
      %v4157 = vadd.f32 %v3913, %v4156
      %v4158 = vpop.f32.mrb[0].mxu0
      %v4159 = vand.u32 %v372, 4294901760
      %4160 = vmatprep.mubr.f32.mxu0 %v4159
      %v4161 = vand.u32 %v304, 4294901760
      %4162 = vmatmul.mubr.f32.gmra.mrb[0].mxu0 %v4161
      %v4163 = vpop.f32.mrb[0].mxu0
      %v4164 = vadd.f32 %v3920, %v4163
      %v4165 = vpop.f32.mrb[0].mxu0
      %v4166 = vand.u32 %v375, 4294901760
      %4167 = vmatprep.mubr.f32.mxu0 %v4166
      %v4168 = vand.u32 %v306, 4294901760
      %4169 = vmatmul.mubr.f32.gmra.mrb[0].mxu0 %v4168
      %v4170 = vpop.f32.mrb[0].mxu0
      %v4171 = vadd.f32 %v3927, %v4170
      %v4172 = vpop.f32.mrb[0].mxu0
      %v4173 = vand.u32 %v378, 4294901760
      %4174 = vmatprep.mubr.f32.mxu0 %v4173
      %v4175 = vand.u32 %v308, 4294901760
      %4176 = vmatmul.mubr.f32.gmra.mrb[0].mxu0 %v4175
      %v4177 = vpop.f32.mrb[0].mxu0
      %v4178 = vadd.f32 %v3934, %v4177
      %v4179 = vpop.f32.mrb[0].mxu0
      %4180 = vdwg.mxu0
      %v4181 = vxor.u32 %v2114, 2147483648
      %v4182 = vxor.u32 %v2121, 2147483648
      %v4183 = vxor.u32 %v2128, 2147483648
      %v4184 = vxor.u32 %v2135, 2147483648
      %v4185 = vxor.u32 %v2142, 2147483648
      %v4186 = vmul.f32 %v4181, 1.442695
      %v4187 = vpow.pop %v4186
      %v4188 = vmul.f32 %v4182, 1.442695
      %v4189 = vpow.pop %v4188
      %v4190 = vmul.f32 %v4183, 1.442695
      %v4191 = vpow.pop %v4190
      %v4192 = vmul.f32 %v4184, 1.442695
      %v4193 = vpow.pop %v4192
      %v4194 = vmul.f32 %v4185, 1.442695
      %v4195 = vpow.pop %v4194
      %v4196 = vadd.f32 %v4187, 1.0
      %v4197 = vadd.f32 %v4189, 1.0
      %v4198 = vadd.f32 %v4191, 1.0
      %v4199 = vadd.f32 %v4193, 1.0
      %v4200 = vadd.f32 %v4195, 1.0
      %v4201 = vrcp.pop %v4196
      %v4202 = vmul.f32 1.0, %v4201
      %v4203 = vrcp.pop %v4197
      %v4204 = vmul.f32 1.0, %v4203
      %v4205 = vrcp.pop %v4198
      %v4206 = vmul.f32 1.0, %v4205
      %v4207 = vrcp.pop %v4199
      %v4208 = vmul.f32 1.0, %v4207
      %v4209 = vrcp.pop %v4200
      %v4210 = vmul.f32 1.0, %v4209
      %v4211 = vsub.f32 %v4202, %v4024
      %v4212 = vsub.f32 %v4204, %v4031
      %v4213 = vsub.f32 %v4206, %v4038
      %v4214 = vsub.f32 %v4208, %v4045
      %v4215 = vsub.f32 %v4210, %v4052
      %v4216 = vmul.f32 %v4129, %v4211
      %v4217 = vmul.f32 %v4136, %v4212
      %v4218 = vmul.f32 %v4143, %v4213
      %v4219 = vmul.f32 %v4150, %v4214
      %v4220 = vmul.f32 %v4157, %v4215
      %v4221 = vmul.f32 %v4216, %v4211
      %v4222 = vmul.f32 %v4217, %v4212
      %v4223 = vmul.f32 %v4218, %v4213
      %v4224 = vmul.f32 %v4219, %v4214
      %v4225 = vmul.f32 %v4220, %v4215
      %vm4226 = vcmask 130048
      %v4227 = vsel %vm4226, %v4221, 0.0
      %v4228 = vsel %vm4226, %v4222, 0.0
      %v4229 = vadd.f32 %v4227, %v4228
      %v4230 = vsel %vm4226, %v4223, 0.0
      %v4231 = vadd.f32 %v4229, %v4230
      %v4232 = vsel %vm4226, %v4224, 0.0
      %v4233 = vadd.f32 %v4231, %v4232
      %v4234 = vsel %vm4226, %v4225, 0.0
      %v4235 = vadd.f32 %v4233, %v4234
      %4236 = vadd.xlane.f32.xlu0 %v4235
      %v4237 = vpop.xlane.xlu0 %4236
      %v4238 = vrot.slane %v4237, 4
      %v4239 = vadd.f32 %v4237, %v4238
      %v4240 = vrot.slane %v4239, 2
      %v4241 = vadd.f32 %v4239, %v4240
      %v4242 = vrot.slane %v4241, 1
      %v4243 = vadd.f32 %v4241, %v4242
      %s4244 = vtos %v4243
      %v4245 = vlaneseq
      %v4246 = vshrl.u32 %v4245, 7
      %v4247 = vadd.s32 %v4246, 8
      %v4248 = vadd.s32 %v4246, 16
      %v4249 = vadd.s32 %v4246, 24
      %v4250 = vadd.s32 %v4246, 32
      %vm4251 = vcmp.lt.s32.totalorder %v4246, 0
      %v4252 = vsub.s32 0, %v4246
      %v4253 = vsel %vm4251, %v4252, %v4246
      %v4254 = vshrl.u32 %v4253, 1
      %v4255 = vand.u32 %v4253, 1
      %v4256 = vsub.s32 0, %v4255
      %v4257 = vsel %vm4251, %v4256, %v4255
      %vm4258 = vcmp.lt.s32.totalorder %v4247, 0
      %v4259 = vsub.s32 0, %v4247
      %v4260 = vsel %vm4258, %v4259, %v4247
      %v4261 = vshrl.u32 %v4260, 1
      %v4262 = vand.u32 %v4260, 1
      %v4263 = vsub.s32 0, %v4262
      %v4264 = vsel %vm4258, %v4263, %v4262
      %vm4265 = vcmp.lt.s32.totalorder %v4248, 0
      %v4266 = vsub.s32 0, %v4248
      %v4267 = vsel %vm4265, %v4266, %v4248
      %v4268 = vshrl.u32 %v4267, 1
      %v4269 = vand.u32 %v4267, 1
      %v4270 = vsub.s32 0, %v4269
      %v4271 = vsel %vm4265, %v4270, %v4269
      %vm4272 = vcmp.lt.s32.totalorder %v4249, 0
      %v4273 = vsub.s32 0, %v4249
      %v4274 = vsel %vm4272, %v4273, %v4249
      %v4275 = vshrl.u32 %v4274, 1
      %v4276 = vand.u32 %v4274, 1
      %v4277 = vsub.s32 0, %v4276
      %v4278 = vsel %vm4272, %v4277, %v4276
      %vm4279 = vcmp.lt.s32.totalorder %v4250, 0
      %v4280 = vsub.s32 0, %v4250
      %v4281 = vsel %vm4279, %v4280, %v4250
      %v4282 = vshrl.u32 %v4281, 1
      %v4283 = vand.u32 %v4281, 1
      %v4284 = vsub.s32 0, %v4283
      %v4285 = vsel %vm4279, %v4284, %v4283
      %vm4286 = vcmp.ne.s32.totalorder %v4257, 0
      %vm4287 = vcmp.ne.s32.totalorder %v4264, 0
      %vm4288 = vcmp.ne.s32.totalorder %v4271, 0
      %vm4289 = vcmp.ne.s32.totalorder %v4278, 0
      %vm4290 = vcmp.ne.s32.totalorder %v4285, 0
      %vm4291 = vcmp.lt.s32.totalorder %v4257, 0
      %vm4292 = vcmp.lt.s32.totalorder %v4264, 0
      %vm4293 = vcmp.lt.s32.totalorder %v4271, 0
      %vm4294 = vcmp.lt.s32.totalorder %v4278, 0
      %vm4295 = vcmp.lt.s32.totalorder %v4285, 0
      %vm4296 = vmand %vm4291, %vm4286
      %vm4297 = vmand %vm4292, %vm4287
      %vm4298 = vmand %vm4293, %vm4288
      %vm4299 = vmand %vm4294, %vm4289
      %vm4300 = vmand %vm4295, %vm4290
      %v4301 = vadd.s32 %v4257, 2
      %v4302 = vadd.s32 %v4264, 2
      %v4303 = vadd.s32 %v4271, 2
      %v4304 = vadd.s32 %v4278, 2
      %v4305 = vadd.s32 %v4285, 2
      %v4306 = vsel %vm4296, %v4301, %v4257
      %v4307 = vsel %vm4297, %v4302, %v4264
      %v4308 = vsel %vm4298, %v4303, %v4271
      %v4309 = vsel %vm4299, %v4304, %v4278
      %v4310 = vsel %vm4300, %v4305, %v4285
      %vm4311 = vcmp.eq.s32.totalorder %v4306, 0
      %vm4312 = vcmp.eq.s32.totalorder %v4307, 0
      %vm4313 = vcmp.eq.s32.totalorder %v4308, 0
      %vm4314 = vcmp.eq.s32.totalorder %v4309, 0
      %vm4315 = vcmp.eq.s32.totalorder %v4310, 0
      %v4316 = vsel %vm4311, 1.5, 2.5
      %v4317 = vsel %vm4312, 1.5, 2.5
      %v4318 = vsel %vm4313, 1.5, 2.5
      %v4319 = vsel %vm4314, 1.5, 2.5
      %v4320 = vsel %vm4315, 1.5, 2.5
      %v4321 = vrcp.pop %v4316
      %v4322 = vmul.f32 %v4059, %v4321
      %v4323 = vrcp.pop %v4317
      %v4324 = vmul.f32 %v4066, %v4323
      %v4325 = vrcp.pop %v4318
      %v4326 = vmul.f32 %v4073, %v4325
      %v4327 = vrcp.pop %v4319
      %v4328 = vmul.f32 %v4080, %v4327
      %v4329 = vrcp.pop %v4320
      %v4330 = vmul.f32 %v4087, %v4329
      %v4331 = vadd.f32 %v4322, 1e-16
      %v4332 = vadd.f32 %v4324, 1e-16
      %v4333 = vadd.f32 %v4326, 1e-16
      %v4334 = vadd.f32 %v4328, 1e-16
      %v4335 = vadd.f32 %v4330, 1e-16
      %v4336 = vlog2.pop %v4331
      %v4337 = vmul.f32 %v4336, 0.6931472
      %v4338 = vlog2.pop %v4332
      %v4339 = vmul.f32 %v4338, 0.6931472
      %v4340 = vlog2.pop %v4333
      %v4341 = vmul.f32 %v4340, 0.6931472
      %v4342 = vlog2.pop %v4334
      %v4343 = vmul.f32 %v4342, 0.6931472
      %v4344 = vlog2.pop %v4335
      %v4345 = vmul.f32 %v4344, 0.6931472
      %v4346 = vsub.f32 %v2149, %v4337
      %v4347 = vsub.f32 %v2156, %v4339
      %v4348 = vsub.f32 %v2163, %v4341
      %v4349 = vsub.f32 %v2170, %v4343
      %v4350 = vsub.f32 %v2177, %v4345
      %v4351 = vmul.f32 %v4129, %v4346
      %v4352 = vmul.f32 %v4136, %v4347
      %v4353 = vmul.f32 %v4143, %v4348
      %v4354 = vmul.f32 %v4150, %v4349
      %v4355 = vmul.f32 %v4157, %v4350
      %v4356 = vmul.f32 %v4351, %v4346
      %v4357 = vmul.f32 %v4352, %v4347
      %v4358 = vmul.f32 %v4353, %v4348
      %v4359 = vmul.f32 %v4354, %v4349
      %v4360 = vmul.f32 %v4355, %v4350
      %v4361 = vsel %vm4226, %v4356, 0.0
      %v4362 = vsel %vm4226, %v4357, 0.0
      %v4363 = vadd.f32 %v4361, %v4362
      %v4364 = vsel %vm4226, %v4358, 0.0
      %v4365 = vadd.f32 %v4363, %v4364
      %v4366 = vsel %vm4226, %v4359, 0.0
      %v4367 = vadd.f32 %v4365, %v4366
      %v4368 = vsel %vm4226, %v4360, 0.0
      %v4369 = vadd.f32 %v4367, %v4368
      %4370 = vadd.xlane.f32.xlu0 %v4369
      %v4371 = vpop.xlane.xlu0 %4370
      %v4372 = vrot.slane %v4371, 4
      %v4373 = vadd.f32 %v4371, %v4372
      %v4374 = vrot.slane %v4373, 2
      %v4375 = vadd.f32 %v4373, %v4374
      %v4376 = vrot.slane %v4375, 1
      %v4377 = vadd.f32 %v4375, %v4376
      %s4378 = vtos %v4377
      %v4379 = vtanh.pop %v2184
      %v4380 = vtanh.pop %v2191
      %v4381 = vtanh.pop %v2198
      %v4382 = vtanh.pop %v2205
      %v4383 = vtanh.pop %v2212
      %v4384 = vsub.f32 %v4379, %v4094
      %v4385 = vsub.f32 %v4380, %v4101
      %v4386 = vsub.f32 %v4381, %v4108
      %v4387 = vsub.f32 %v4382, %v4115
      %v4388 = vsub.f32 %v4383, %v4122
      %v4389 = vmul.f32 %v4129, %v4384
      %v4390 = vmul.f32 %v4136, %v4385
      %v4391 = vmul.f32 %v4143, %v4386
      %v4392 = vmul.f32 %v4150, %v4387
      %v4393 = vmul.f32 %v4157, %v4388
      %v4394 = vmul.f32 %v4389, %v4384
      %v4395 = vmul.f32 %v4390, %v4385
      %v4396 = vmul.f32 %v4391, %v4386
      %v4397 = vmul.f32 %v4392, %v4387
      %v4398 = vmul.f32 %v4393, %v4388
      %v4399 = vsel %vm4226, %v4394, 0.0
      %v4400 = vsel %vm4226, %v4395, 0.0
      %v4401 = vadd.f32 %v4399, %v4400
      %v4402 = vsel %vm4226, %v4396, 0.0
      %v4403 = vadd.f32 %v4401, %v4402
      %v4404 = vsel %vm4226, %v4397, 0.0
      %v4405 = vadd.f32 %v4403, %v4404
      %v4406 = vsel %vm4226, %v4398, 0.0
      %v4407 = vadd.f32 %v4405, %v4406
      %4408 = vadd.xlane.f32.xlu0 %v4407
      %v4409 = vpop.xlane.xlu0 %4408
      %v4410 = vrot.slane %v4409, 4
      %v4411 = vadd.f32 %v4409, %v4410
      %v4412 = vrot.slane %v4411, 2
      %v4413 = vadd.f32 %v4411, %v4412
      %v4414 = vrot.slane %v4413, 1
      %v4415 = vadd.f32 %v4413, %v4414
      %s4416 = vtos %v4415
      %v4417 = vxor.u32 %v2249, 2147483648
      %v4418 = vxor.u32 %v2256, 2147483648
      %v4419 = vxor.u32 %v2263, 2147483648
      %v4420 = vmul.f32 %v4417, 1.442695
      %v4421 = vpow.pop %v4420
      %v4422 = vmul.f32 %v4418, 1.442695
      %v4423 = vpow.pop %v4422
      %v4424 = vmul.f32 %v4419, 1.442695
      %v4425 = vpow.pop %v4424
      %v4426 = vadd.f32 %v4421, 1.0
      %v4427 = vadd.f32 %v4423, 1.0
      %v4428 = vadd.f32 %v4425, 1.0
      %v4429 = vrcp.pop %v4426
      %v4430 = vmul.f32 1.0, %v4429
      %v4431 = vrcp.pop %v4427
      %v4432 = vmul.f32 1.0, %v4431
      %v4433 = vrcp.pop %v4428
      %v4434 = vmul.f32 1.0, %v4433
      %v4435 = vlog2.pop %v4430
      %v4436 = vmul.f32 %v4435, 0.6931472
      %v4437 = vlog2.pop %v4432
      %v4438 = vmul.f32 %v4437, 0.6931472
      %v4439 = vlog2.pop %v4434
      %v4440 = vmul.f32 %v4439, 0.6931472
      %v4441 = vmax.f32 %v4436, -100.0
      %v4442 = vmax.f32 %v4438, -100.0
      %v4443 = vmax.f32 %v4440, -100.0
      %v4444 = vsub.f32 1.0, %v4430
      %v4445 = vsub.f32 1.0, %v4432
      %v4446 = vsub.f32 1.0, %v4434
      %v4447 = vlog2.pop %v4444
      %v4448 = vmul.f32 %v4447, 0.6931472
      %v4449 = vlog2.pop %v4445
      %v4450 = vmul.f32 %v4449, 0.6931472
      %v4451 = vlog2.pop %v4446
      %v4452 = vmul.f32 %v4451, 0.6931472
      %v4453 = vmax.f32 %v4448, -100.0
      %v4454 = vmax.f32 %v4450, -100.0
      %v4455 = vmax.f32 %v4452, -100.0
      %v4456 = vmul.f32 %v4164, %v4441
      %v4457 = vmul.f32 %v4171, %v4442
      %v4458 = vmul.f32 %v4178, %v4443
      %v4459 = vsub.f32 1.0, %v4164
      %v4460 = vsub.f32 1.0, %v4171
      %v4461 = vsub.f32 1.0, %v4178
      %v4462 = vmul.f32 %v4459, %v4453
      %v4463 = vmul.f32 %v4460, %v4454
      %v4464 = vmul.f32 %v4461, %v4455
      %v4465 = vadd.f32 %v4456, %v4462
      %v4466 = vadd.f32 %v4457, %v4463
      %v4467 = vadd.f32 %v4458, %v4464
      %v4468 = vsub.f32 0.0, %v4465
      %v4469 = vsub.f32 0.0, %v4466
      %v4470 = vsub.f32 0.0, %v4467
      %v4471 = vmul.f32 %v4164, %v4468
      %v4472 = vmul.f32 %v4171, %v4469
      %v4473 = vmul.f32 %v4178, %v4470
      %v4474 = vsel %vm4226, %v4471, 0.0
      %v4475 = vsel %vm4226, %v4472, 0.0
      %v4476 = vadd.f32 %v4474, %v4475
      %vm4477 = vcmask 125952
      %v4478 = vsel %vm4477, %v4473, 0.0
      %v4479 = vadd.f32 %v4476, %v4478
      %4480 = vadd.xlane.f32.xlu0 %v4479
      %v4481 = vpop.xlane.xlu0 %4480
      %v4482 = vrot.slane %v4481, 4
      %v4483 = vadd.f32 %v4481, %v4482
      %v4484 = vrot.slane %v4483, 2
      %v4485 = vadd.f32 %v4483, %v4484
      %v4486 = vrot.slane %v4485, 1
      %v4487 = vadd.f32 %v4485, %v4486
      %s4488 = vtos %v4487
      %v4489 = vmul.f32 %v4459, %v4468
      %v4490 = vmul.f32 %v4460, %v4469
      %v4491 = vmul.f32 %v4461, %v4470
      %v4492 = vsel %vm4226, %v4489, 0.0
      %v4493 = vsel %vm4226, %v4490, 0.0
      %v4494 = vadd.f32 %v4492, %v4493
      %v4495 = vsel %vm4477, %v4491, 0.0
      %v4496 = vadd.f32 %v4494, %v4495
      %4497 = vadd.xlane.f32.xlu0 %v4496
      %v4498 = vpop.xlane.xlu0 %4497
      %v4499 = vrot.slane %v4498, 4
      %v4500 = vadd.f32 %v4498, %v4499
      %v4501 = vrot.slane %v4500, 2
      %v4502 = vadd.f32 %v4500, %v4501
      %v4503 = vrot.slane %v4502, 1
      %v4504 = vadd.f32 %v4502, %v4503
      %s4505 = vtos %v4504
      %v4506 = vlaneseq
      %v4507 = vand.u32 %v4506, 127
      %vm4508 = vcmp.eq.s32.totalorder %v4507, 0
      %v4509 = vstv %s4244
      %v4510 = vsel %vm4508, %v4509, 0.0
      %vm4511 = vcmp.eq.s32.totalorder %v4507, 1
      %v4512 = vstv %s4378
      %v4513 = vsel %vm4511, %v4512, 0.0
      %v4514 = vadd.f32 %v4510, %v4513
      %vm4515 = vcmp.eq.s32.totalorder %v4507, 2
      %v4516 = vstv %s4416
      %v4517 = vsel %vm4515, %v4516, 0.0
      %v4518 = vadd.f32 %v4514, %v4517
      %vm4519 = vcmp.eq.s32.totalorder %v4507, 3
      %v4520 = vstv %s4488
      %v4521 = vsel %vm4519, %v4520, 0.0
      %v4522 = vadd.f32 %v4518, %v4521
      %vm4523 = vcmp.eq.s32.totalorder %v4507, 4
      %v4524 = vstv %s4505
      %v4525 = vsel %vm4523, %v4524, 0.0
      %v4526 = vadd.f32 %v4522, %v4525
      %v4527 = vld [vmem:[#allocation2] sm:$0xff]
      %vm4528 = vcmp.eq.s32.totalorder %v4246, 0
      %v4529 = vsel %vm4528, %v4526, 0.0
      %v4530 = vadd.f32 %v4527, %v4529
      %4531 = vst [vmem:[#allocation2] sm:$0xff] %v4530
      %v4532 = vld [vmem:[#allocation2] sm:$0xff]
      %4533 = vst [vmem:[%s222] sm:$0xff] %v4532
      %p4534 = scmp.lt.s32.totalorder %s18, 1
      %s4535 = scalar_select %p4534, %s18, 1
      %s4536 = smul.addr %s4535, 8
      %s4537 = scalar_lea.vmem %s3, %s4536
      // Predicated region
      $region37: #{fn.1} parent=31 // pred_check
        %p4538 = pneg %p121
      $region38: #{fn.1} parent=31 // pred_check_branch
        %4540 = sbr.rel (%p4538) target = $region40
      $region39: #{fn.1} parent=31 // pred_region
        _
      $region40: #{fn.1} parent=31 // pred_fallthru
        _
    $region32: #{fn.1} parent=5 // pred_fallthru
      _
    %p4541 = scmp.le.s32.totalorder 2, %s9
    // Predicated region
    $region41: #{fn.1} parent=5 // pred_check
      %p4542 = pneg %p4541
    $region42: #{fn.1} parent=5 // pred_check_branch
      %4544 = sbr.rel (%p4542) target = $region44
    $region43: #{fn.1} parent=5 // pred_region
      %s4545 = ssub.s32 %s9, 2
      // Predicated region
      $region45: #{fn.1} parent=43 // pred_check
        %p4546 = pneg %p127
      $region46: #{fn.1} parent=43 // pred_check_branch
        %4548 = sbr.rel (%p4546) target = $region48
      $region47: #{fn.1} parent=43 // pred_region
        %p4549 = scmp.lt.s32.totalorder %s20, 1
        %s4550 = scalar_select %p4549, %s20, 1
        %s4551 = smul.addr %s4550, 8
        %s4552 = scalar_lea.vmem %s3, %s4551
      $region48: #{fn.1} parent=43 // pred_fallthru
        _
    $region44: #{fn.1} parent=5 // pred_fallthru
      _
  $region6: #{fn.1} parent=0 // loop_footer
    %s13 = sadd.s32 1, %s9
  $region7: #{fn.1} parent=0 // loop_footer_branch
    %8 = sbr.rel target = $region3
  $region8: #{fn.1} parent=0 // loop_exit
    _

</llo_original>
